<compile_context>
chip_gen: v7x
topology: tpu7x:2x2x1
jax: 0.10.0
libtpu: 0.0.40
codegen_flags: <defaults>
</compile_context>

<pallas_src>
import jax
import jax.numpy as jnp
import numpy as np
from jax.experimental import pallas as pl
from jax.experimental.pallas import tpu as pltpu

C = 256        # hidden channels fixed by ResidualEncoder.get_blocks
K = 3          # Conv1d kernel size
BN_EPS = 1e-5


# ----------------------------- Pallas kernel ---------------------------------
def encoder_kernel(x_ref, w_ref, v_ref, o_ref):
    """Fused 2-ResBlock forward on one (b_sub, C, L) NCL tile.

    x_ref/o_ref : (b, C, L)   f32  activations in native PyTorch NCL layout
    w_ref       : (4, 3C, C)  bf16 folded conv+BN weights (taps stacked along rows)
    v_ref       : (4, 1, C)   f32  folded additive terms (conv_bias*scale + bn_shift)
    """
    x_ncl = x_ref[...]                                   # (b, C, L) f32
    b, Cc, L = x_ncl.shape

    # NCL -> NLC on the VMEM tile (XLU); replaces the host-side HBM transposes.
    x = jnp.transpose(x_ncl, (0, 2, 1))                  # (b, L, C) f32
    zero_row = jnp.zeros((b, 1, Cc), jnp.float32)

    def conv_bn(h, i):
        # 'same' conv (k=3, pad=1) + eval-mode BN as ONE (b*L, 3C)@(3C, C) MXU matmul.
        # Shifts are per batch element (3-D block) -> no cross-element masking needed;
        # the sequence-boundary zeros come for free from the concat with zero_row.
        prev = jnp.concatenate([zero_row, h[:, :L - 1, :]], axis=1)   # h[:, l-1, :]
        nxt = jnp.concatenate([h[:, 1:, :], zero_row], axis=1)        # h[:, l+1, :]
        hcat = jnp.concatenate([prev, h, nxt], axis=2).astype(jnp.bfloat16)  # (b,L,3C)
        out = jnp.dot(hcat.reshape(b * L, K * Cc), w_ref[i],
                      preferred_element_type=jnp.float32)             # (b*L, C) f32
        return (out + v_ref[i]).reshape(b, L, Cc)                     # f32 elementwise

    # ResBlock 1 (in_channels == out_channels -> identity shortcut, no downsample)
    h = jnp.maximum(conv_bn(x, 0), 0.0)
    y1 = jnp.maximum(conv_bn(h, 1) + x, 0.0)
    # ResBlock 2
    h = jnp.maximum(conv_bn(y1, 2), 0.0)
    y2 = jnp.maximum(conv_bn(h, 3) + y1, 0.0)

    # NLC -> NCL for the store (output stays in the module's native layout).
    o_ref[...] = jnp.transpose(y2, (0, 2, 1))


def _pick_batch_group(n, seq_len, max_rows=1024):
    """Largest divisor d of n with d*seq_len <= max_rows such that the grid keeps
    >= 2 steps (v7x has 2 TensorCores; a 1-step grid idles one of them).
    Batching multiple elements per tile also requires seq_len % 16 == 0 so the
    in-kernel (b, L, *) <-> (b*L, *) reshapes stay layout-free for bf16/f32."""
    best = 1
    if seq_len % 16 == 0:
        for d in range(2, n + 1):
            if n % d:
                continue
            if d * seq_len > max_rows:
                continue
            if n // d >= 2:
                best = d
    return best


def residual_encoder_pallas(x_ncl, w_all, v_all, *, max_rows=1024):
    """x_ncl: (N, C, L) float32 (PyTorch Conv1d layout). Returns (N, C, L) float32."""
    N, Cc, L = x_ncl.shape
    b_sub = _pick_batch_group(N, L, max_rows)
    grid = (N // b_sub,)

    # 3-D NCL blocks: last block dim equals the full L, second-to-last C=256 (8-aligned).
    x_spec = pl.BlockSpec((b_sub, Cc, L), lambda g: (g, 0, 0))
    out_spec = pl.BlockSpec((b_sub, Cc, L), lambda g: (g, 0, 0))
    # Grid-invariant packed weights / biases (one spec each instead of eight).
    w_spec = pl.BlockSpec(w_all.shape, lambda g: (0, 0, 0))
    v_spec = pl.BlockSpec(v_all.shape, lambda g: (0, 0, 0))

    flops = 8 * N * L * (K * Cc) * Cc                    # 4 convs x 2*M*K*N MACs
    bytes_accessed = 2 * N * Cc * L * 4 + w_all.size * 2 + v_all.size * 4

    return pl.pallas_call(
        encoder_kernel,
        out_shape=jax.ShapeDtypeStruct((N, Cc, L), jnp.float32),
        grid_spec=pltpu.PrefetchScalarGridSpec(
            num_scalar_prefetch=0,
            grid=grid,
            in_specs=[x_spec, w_spec, v_spec],
            out_specs=out_spec),
        compiler_params=pltpu.CompilerParams(
            dimension_semantics=("parallel",),
            vmem_limit_bytes=32 * 1024 * 1024),
        cost_estimate=pl.CostEstimate(
            flops=flops, transcendentals=0, bytes_accessed=bytes_accessed),
    )(x_ncl, w_all, v_all)


# -------------------------- parameter construction ---------------------------
def make_resblock_params(key):
    """Synthetic PyTorch-layout parameters + folded kernel parameters for one block."""
    ks = jax.random.split(key, 6)

    def conv_w(k):  # PyTorch Conv1d weight layout (C_out, C_in, K)
        fan_in = C * K
        return jax.random.normal(k, (C, C, K), jnp.float32) / jnp.sqrt(fan_in)

    def conv_b(k):
        return 0.05 * jax.random.normal(k, (C,), jnp.float32)

    def bn(k):
        kg, kb, km, kv = jax.random.split(k, 4)
        gamma = 1.0 + 0.1 * jax.random.normal(kg, (C,), jnp.float32)
        beta = 0.1 * jax.random.normal(kb, (C,), jnp.float32)
        mean = 0.1 * jax.random.normal(km, (C,), jnp.float32)
        var = jnp.abs(jax.random.normal(kv, (C,), jnp.float32)) + 0.5
        return gamma, beta, mean, var

    w1_pt, b1, bn1 = conv_w(ks[0]), conv_b(ks[1]), bn(ks[2])
    w2_pt, b2, bn2 = conv_w(ks[3]), conv_b(ks[4]), bn(ks[5])
    pt_params = (w1_pt, b1, bn1, w2_pt, b2, bn2)

    def fold(w_pt, b, gamma, beta, mean, var):
        # (conv(x) + b) * scale + shift  ==  conv_{W*scale}(x) + (b*scale + shift)
        scale = gamma / jnp.sqrt(var + BN_EPS)
        shift = beta - mean * scale
        w = jnp.transpose(w_pt, (2, 1, 0)) * scale[None, None, :]   # (K, C_in, C_out)
        w = w.reshape(K * C, C).astype(jnp.bfloat16)                # bf16 MXU operand
        v = (b * scale + shift).reshape(1, C).astype(jnp.float32)
        return w, v

    w1, v1 = fold(w1_pt, b1, *bn1)
    w2, v2 = fold(w2_pt, b2, *bn2)
    return pt_params, (w1, v1, w2, v2)


def pack_kernel_params(kp_block0, kp_block1):
    """Stack the folded per-conv weights/biases of both ResBlocks into single arrays."""
    (w1a, v1a, w2a, v2a) = kp_block0
    (w1b, v1b, w2b, v2b) = kp_block1
    w_all = jnp.stack([w1a, w2a, w1b, w2b], axis=0)      # (4, 3C, C) bf16
    v_all = jnp.stack([v1a, v2a, v1b, v2b], axis=0)      # (4, 1, C) f32
    return w_all, v_all


# --------------------------- pure-JAX reference -------------------------------
def conv1d_ref(x_ncl, w_oik, b):
    out = jax.lax.conv_general_dilated(
        x_ncl, w_oik, window_strides=(1,), padding=((1, 1),),
        dimension_numbers=("NCH", "OIH", "NCH"))
    return out + b[None, :, None]


def bn_ref(x_ncl, gamma, beta, mean, var):
    inv = gamma / jnp.sqrt(var + BN_EPS)
    return (x_ncl - mean[None, :, None]) * inv[None, :, None] + beta[None, :, None]


def resblock_ref(x_ncl, pt_params):
    w1, b1, bn1, w2, b2, bn2 = pt_params
    identity = x_ncl
    h = conv1d_ref(x_ncl, w1, b1)
    h = bn_ref(h, *bn1)
    h = jnp.maximum(h, 0.0)
    h = conv1d_ref(h, w2, b2)
    h = bn_ref(h, *bn2)
    return jnp.maximum(h + identity, 0.0)


def residual_encoder_ref(x_ncl, pt_params_blocks):
    h = x_ncl
    for pp in pt_params_blocks:
        h = resblock_ref(h, pp)
    return h


# ---------------------------------- main --------------------------------------
if __name__ == "__main__":
    key = jax.random.PRNGKey(0)
    k_x, k_b0, k_b1 = jax.random.split(key, 3)

    # Channels are fixed at 256 by the module; L=128 keeps the lane dim aligned.
    N, L = 2, 128
    x = jax.random.normal(k_x, (N, C, L), jnp.float32)   # PyTorch NCL layout

    pt0, kp0 = make_resblock_params(k_b0)
    pt1, kp1 = make_resblock_params(k_b1)
    w_all, v_all = pack_kernel_params(kp0, kp1)

    run = jax.jit(residual_encoder_pallas)
    out = jax.block_until_ready(run(x, w_all, v_all))

    ref = residual_encoder_ref(x, (pt0, pt1))
    # bf16 matmul operands (with f32 accumulation) => looser tolerance than pure f32.
    np.testing.assert_allclose(np.asarray(out), np.asarray(ref), rtol=2e-2, atol=5e-2)

    assert out.shape == (N, C, L) and out.dtype == jnp.float32
    print("KERNEL_OK")
</pallas_src>

<mosaic_0001>
module attributes {stable_mosaic.version = 11 : i64} {
  func.func @encoder_kernel(%arg0: i32, %arg1: memref<1x256x128xf32, #tpu.memory_space<vmem>>, %arg2: memref<4x768x256xbf16, #tpu.memory_space<vmem>>, %arg3: memref<4x1x256xf32, #tpu.memory_space<vmem>>, %arg4: memref<1x256x128xf32, #tpu.memory_space<vmem>>) attributes {dimension_semantics = [#tpu.dimension_semantics<parallel>], iteration_bounds = array<i64: 2>, scalar_prefetch = 0 : i64, scratch_operands = 0 : i64, tpu.core_type = #tpu.core_type<tc>, window_params = [{transform_indices = @transform_0, window_bounds = array<i64: 1, 256, 128>}, {pipeline_mode = #tpu.pipeline_mode<synchronous>, transform_indices = @transform_1, window_bounds = array<i64: 4, 768, 256>}, {pipeline_mode = #tpu.pipeline_mode<synchronous>, transform_indices = @transform_2, window_bounds = array<i64: 4, 1, 256>}, {transform_indices = @transform_3, window_bounds = array<i64: 1, 256, 128>}]} {
    %c0 = arith.constant 0 : index
    %c0_0 = arith.constant 0 : index
    %c0_1 = arith.constant 0 : index
    %0 = vector.load %arg1[%c0, %c0_0, %c0_1] : memref<1x256x128xf32, #tpu.memory_space<vmem>>, vector<1x256x128xf32>
    %1 = tpu.transpose %0, [0, 2, 1] : vector<1x256x128xf32> -> vector<1x128x256xf32>
    %cst = arith.constant 0.000000e+00 : f32
    %2 = vector.broadcast %cst : f32 to vector<1x1x256xf32>
    %3 = vector.extract_strided_slice %1 {offsets = [0, 0, 0], sizes = [1, 127, 256], strides = [1, 1, 1]} : vector<1x128x256xf32> to vector<1x127x256xf32>
    %4 = tpu.concatenate %2, %3 in 1 : vector<1x1x256xf32>, vector<1x127x256xf32> -> vector<1x128x256xf32>
    %5 = vector.extract_strided_slice %1 {offsets = [0, 1, 0], sizes = [1, 127, 256], strides = [1, 1, 1]} : vector<1x128x256xf32> to vector<1x127x256xf32>
    %6 = tpu.concatenate %5, %2 in 1 : vector<1x127x256xf32>, vector<1x1x256xf32> -> vector<1x128x256xf32>
    %7 = tpu.concatenate %4, %1, %6 in 2 : vector<1x128x256xf32>, vector<1x128x256xf32>, vector<1x128x256xf32> -> vector<1x128x768xf32>
    %8 = arith.truncf %7 : vector<1x128x768xf32> to vector<1x128x768xbf16>
    %9 = vector.shape_cast %8 : vector<1x128x768xbf16> to vector<128x768xbf16>
    %c0_2 = arith.constant 0 : index
    %c0_3 = arith.constant 0 : index
    %c0_4 = arith.constant 0 : index
    %10 = vector.load %arg2[%c0_2, %c0_3, %c0_4] : memref<4x768x256xbf16, #tpu.memory_space<vmem>>, vector<1x768x256xbf16>
    %11 = vector.shape_cast %10 : vector<1x768x256xbf16> to vector<768x256xbf16>
    %cst_5 = arith.constant dense<0.000000e+00> : vector<128x256xf32>
    %12 = tpu.matmul %9, %11, %cst_5 {dimension_numbers = #tpu.dot_dimension_numbers<[1], [0], [0], [1], [0, 0, 1, 1], [], []>} : vector<128x768xbf16>, vector<768x256xbf16>, vector<128x256xf32> -> vector<128x256xf32>
    %c0_6 = arith.constant 0 : index
    %c0_7 = arith.constant 0 : index
    %c0_8 = arith.constant 0 : index
    %13 = vector.load %arg3[%c0_6, %c0_7, %c0_8] : memref<4x1x256xf32, #tpu.memory_space<vmem>>, vector<1x1x256xf32>
    %14 = vector.shape_cast %13 : vector<1x1x256xf32> to vector<1x256xf32>
    %15 = vector.broadcast %14 : vector<1x256xf32> to vector<128x256xf32>
    %16 = arith.addf %12, %15 : vector<128x256xf32>
    %17 = vector.shape_cast %16 : vector<128x256xf32> to vector<1x128x256xf32>
    %cst_9 = arith.constant 0.000000e+00 : f32
    %18 = vector.broadcast %cst_9 : f32 to vector<1x128x256xf32>
    %19 = arith.maximumf %17, %18 : vector<1x128x256xf32>
    %20 = vector.extract_strided_slice %19 {offsets = [0, 0, 0], sizes = [1, 127, 256], strides = [1, 1, 1]} : vector<1x128x256xf32> to vector<1x127x256xf32>
    %21 = tpu.concatenate %2, %20 in 1 : vector<1x1x256xf32>, vector<1x127x256xf32> -> vector<1x128x256xf32>
    %22 = vector.extract_strided_slice %19 {offsets = [0, 1, 0], sizes = [1, 127, 256], strides = [1, 1, 1]} : vector<1x128x256xf32> to vector<1x127x256xf32>
    %23 = tpu.concatenate %22, %2 in 1 : vector<1x127x256xf32>, vector<1x1x256xf32> -> vector<1x128x256xf32>
    %24 = tpu.concatenate %21, %19, %23 in 2 : vector<1x128x256xf32>, vector<1x128x256xf32>, vector<1x128x256xf32> -> vector<1x128x768xf32>
    %25 = arith.truncf %24 : vector<1x128x768xf32> to vector<1x128x768xbf16>
    %26 = vector.shape_cast %25 : vector<1x128x768xbf16> to vector<128x768xbf16>
    %c1 = arith.constant 1 : index
    %c0_10 = arith.constant 0 : index
    %c0_11 = arith.constant 0 : index
    %27 = vector.load %arg2[%c1, %c0_10, %c0_11] : memref<4x768x256xbf16, #tpu.memory_space<vmem>>, vector<1x768x256xbf16>
    %28 = vector.shape_cast %27 : vector<1x768x256xbf16> to vector<768x256xbf16>
    %cst_12 = arith.constant dense<0.000000e+00> : vector<128x256xf32>
    %29 = tpu.matmul %26, %28, %cst_12 {dimension_numbers = #tpu.dot_dimension_numbers<[1], [0], [0], [1], [0, 0, 1, 1], [], []>} : vector<128x768xbf16>, vector<768x256xbf16>, vector<128x256xf32> -> vector<128x256xf32>
    %c1_13 = arith.constant 1 : index
    %c0_14 = arith.constant 0 : index
    %c0_15 = arith.constant 0 : index
    %30 = vector.load %arg3[%c1_13, %c0_14, %c0_15] : memref<4x1x256xf32, #tpu.memory_space<vmem>>, vector<1x1x256xf32>
    %31 = vector.shape_cast %30 : vector<1x1x256xf32> to vector<1x256xf32>
    %32 = vector.broadcast %31 : vector<1x256xf32> to vector<128x256xf32>
    %33 = arith.addf %29, %32 : vector<128x256xf32>
    %34 = vector.shape_cast %33 : vector<128x256xf32> to vector<1x128x256xf32>
    %35 = arith.addf %34, %1 : vector<1x128x256xf32>
    %cst_16 = arith.constant 0.000000e+00 : f32
    %36 = vector.broadcast %cst_16 : f32 to vector<1x128x256xf32>
    %37 = arith.maximumf %35, %36 : vector<1x128x256xf32>
    %38 = vector.extract_strided_slice %37 {offsets = [0, 0, 0], sizes = [1, 127, 256], strides = [1, 1, 1]} : vector<1x128x256xf32> to vector<1x127x256xf32>
    %39 = tpu.concatenate %2, %38 in 1 : vector<1x1x256xf32>, vector<1x127x256xf32> -> vector<1x128x256xf32>
    %40 = vector.extract_strided_slice %37 {offsets = [0, 1, 0], sizes = [1, 127, 256], strides = [1, 1, 1]} : vector<1x128x256xf32> to vector<1x127x256xf32>
    %41 = tpu.concatenate %40, %2 in 1 : vector<1x127x256xf32>, vector<1x1x256xf32> -> vector<1x128x256xf32>
    %42 = tpu.concatenate %39, %37, %41 in 2 : vector<1x128x256xf32>, vector<1x128x256xf32>, vector<1x128x256xf32> -> vector<1x128x768xf32>
    %43 = arith.truncf %42 : vector<1x128x768xf32> to vector<1x128x768xbf16>
    %44 = vector.shape_cast %43 : vector<1x128x768xbf16> to vector<128x768xbf16>
    %c2 = arith.constant 2 : index
    %c0_17 = arith.constant 0 : index
    %c0_18 = arith.constant 0 : index
    %45 = vector.load %arg2[%c2, %c0_17, %c0_18] : memref<4x768x256xbf16, #tpu.memory_space<vmem>>, vector<1x768x256xbf16>
    %46 = vector.shape_cast %45 : vector<1x768x256xbf16> to vector<768x256xbf16>
    %cst_19 = arith.constant dense<0.000000e+00> : vector<128x256xf32>
    %47 = tpu.matmul %44, %46, %cst_19 {dimension_numbers = #tpu.dot_dimension_numbers<[1], [0], [0], [1], [0, 0, 1, 1], [], []>} : vector<128x768xbf16>, vector<768x256xbf16>, vector<128x256xf32> -> vector<128x256xf32>
    %c2_20 = arith.constant 2 : index
    %c0_21 = arith.constant 0 : index
    %c0_22 = arith.constant 0 : index
    %48 = vector.load %arg3[%c2_20, %c0_21, %c0_22] : memref<4x1x256xf32, #tpu.memory_space<vmem>>, vector<1x1x256xf32>
    %49 = vector.shape_cast %48 : vector<1x1x256xf32> to vector<1x256xf32>
    %50 = vector.broadcast %49 : vector<1x256xf32> to vector<128x256xf32>
    %51 = arith.addf %47, %50 : vector<128x256xf32>
    %52 = vector.shape_cast %51 : vector<128x256xf32> to vector<1x128x256xf32>
    %cst_23 = arith.constant 0.000000e+00 : f32
    %53 = vector.broadcast %cst_23 : f32 to vector<1x128x256xf32>
    %54 = arith.maximumf %52, %53 : vector<1x128x256xf32>
    %55 = vector.extract_strided_slice %54 {offsets = [0, 0, 0], sizes = [1, 127, 256], strides = [1, 1, 1]} : vector<1x128x256xf32> to vector<1x127x256xf32>
    %56 = tpu.concatenate %2, %55 in 1 : vector<1x1x256xf32>, vector<1x127x256xf32> -> vector<1x128x256xf32>
    %57 = vector.extract_strided_slice %54 {offsets = [0, 1, 0], sizes = [1, 127, 256], strides = [1, 1, 1]} : vector<1x128x256xf32> to vector<1x127x256xf32>
    %58 = tpu.concatenate %57, %2 in 1 : vector<1x127x256xf32>, vector<1x1x256xf32> -> vector<1x128x256xf32>
    %59 = tpu.concatenate %56, %54, %58 in 2 : vector<1x128x256xf32>, vector<1x128x256xf32>, vector<1x128x256xf32> -> vector<1x128x768xf32>
    %60 = arith.truncf %59 : vector<1x128x768xf32> to vector<1x128x768xbf16>
    %61 = vector.shape_cast %60 : vector<1x128x768xbf16> to vector<128x768xbf16>
    %c3 = arith.constant 3 : index
    %c0_24 = arith.constant 0 : index
    %c0_25 = arith.constant 0 : index
    %62 = vector.load %arg2[%c3, %c0_24, %c0_25] : memref<4x768x256xbf16, #tpu.memory_space<vmem>>, vector<1x768x256xbf16>
    %63 = vector.shape_cast %62 : vector<1x768x256xbf16> to vector<768x256xbf16>
    %cst_26 = arith.constant dense<0.000000e+00> : vector<128x256xf32>
    %64 = tpu.matmul %61, %63, %cst_26 {dimension_numbers = #tpu.dot_dimension_numbers<[1], [0], [0], [1], [0, 0, 1, 1], [], []>} : vector<128x768xbf16>, vector<768x256xbf16>, vector<128x256xf32> -> vector<128x256xf32>
    %c3_27 = arith.constant 3 : index
    %c0_28 = arith.constant 0 : index
    %c0_29 = arith.constant 0 : index
    %65 = vector.load %arg3[%c3_27, %c0_28, %c0_29] : memref<4x1x256xf32, #tpu.memory_space<vmem>>, vector<1x1x256xf32>
    %66 = vector.shape_cast %65 : vector<1x1x256xf32> to vector<1x256xf32>
    %67 = vector.broadcast %66 : vector<1x256xf32> to vector<128x256xf32>
    %68 = arith.addf %64, %67 : vector<128x256xf32>
    %69 = vector.shape_cast %68 : vector<128x256xf32> to vector<1x128x256xf32>
    %70 = arith.addf %69, %37 : vector<1x128x256xf32>
    %cst_30 = arith.constant 0.000000e+00 : f32
    %71 = vector.broadcast %cst_30 : f32 to vector<1x128x256xf32>
    %72 = arith.maximumf %70, %71 : vector<1x128x256xf32>
    %73 = tpu.transpose %72, [0, 2, 1] : vector<1x128x256xf32> -> vector<1x256x128xf32>
    %c0_31 = arith.constant 0 : index
    %c0_32 = arith.constant 0 : index
    %c0_33 = arith.constant 0 : index
    %74 = vector.load %arg4[%c0_31, %c0_32, %c0_33] : memref<1x256x128xf32, #tpu.memory_space<vmem>>, vector<1x256x128xf32>
    tpu.vector_store %arg4[%c0_31, %c0_32, %c0_33], %73 {strides = array<i32>} : memref<1x256x128xf32, #tpu.memory_space<vmem>>, vector<1x256x128xf32>,
    return
  }
  func.func @transform_0(%arg0: i32) -> (i32, i32, i32) {
    %c0_i32 = arith.constant 0 : i32
    %c0_i32_0 = arith.constant 0 : i32
    %c0_i32_1 = arith.constant 0 : i32
    return %arg0, %c0_i32, %c0_i32_0 : i32, i32, i32
  }
  func.func @transform_1(%arg0: i32) -> (i32, i32, i32) {
    %c0_i32 = arith.constant 0 : i32
    %c0_i32_0 = arith.constant 0 : i32
    %c0_i32_1 = arith.constant 0 : i32
    %c0_i32_2 = arith.constant 0 : i32
    return %c0_i32, %c0_i32_0, %c0_i32_1 : i32, i32, i32
  }
  func.func @transform_2(%arg0: i32) -> (i32, i32, i32) {
    %c0_i32 = arith.constant 0 : i32
    %c0_i32_0 = arith.constant 0 : i32
    %c0_i32_1 = arith.constant 0 : i32
    %c0_i32_2 = arith.constant 0 : i32
    return %c0_i32, %c0_i32_0, %c0_i32_1 : i32, i32, i32
  }
  func.func @transform_3(%arg0: i32) -> (i32, i32, i32) {
    %c0_i32 = arith.constant 0 : i32
    %c0_i32_0 = arith.constant 0 : i32
    %c0_i32_1 = arith.constant 0 : i32
    return %arg0, %c0_i32, %c0_i32_0 : i32, i32, i32
  }
}

</mosaic_0001>

<llo_original>
// kernel: residual_encoder_pallas.1
$region0: #{residual_encoder_pallas.1}
  #allocation0 [shape = 'u32[]', space=smem, size = 0x4, offset = 0x4, fixed_abs, tag = 'smem constant byte address 0x4 - core index']
  #allocation1 [shape = 'u32[144,128]{1,0:T(1,128)}', space=vmem, size = 0x12000, scoped, tag = 'internal scratch']
  %s0 = inlined_call_operand.hbm [shape: f32[2,256,128], index: 0, kind: input, shape index: {}]
  %s1 = inlined_call_operand.hbm [shape: bf16[4,768,256], index: 1, kind: input, shape index: {}]
  %s2 = inlined_call_operand.hbm [shape: f32[4,1,256], index: 2, kind: input, shape index: {}]
  %s3 = inlined_call_operand.hbm [shape: f32[2,256,128], index: 3, kind: output, shape index: {}]
  %s4 = sld [smem:[#allocation0]]
  $region57: #{residual_encoder_pallas.1} parent=0
    _
  %s6 = ssub.s32 1, %s4
  %s7 = scalar_select 0, %s6, %s4
  $region1: #{residual_encoder_pallas.1} parent=0
    #allocation2 [shape = 'u8[262144]{0}', space=vmem, size = 0x40000, scoped, tag = 'input window, operand 0']
    #allocation3 [shape = 's32[2]{0}', space=sflag, size = 0x8, scoped, tag = 'scoped memory for residual_encoder_pallas.1']
    #allocation4 [shape = 's32[2]{0}', space=sflag, size = 0x8, scoped, tag = 'scoped memory for residual_encoder_pallas.1']
    #allocation5 [shape = 'u8[1572864]{0}', space=vmem, size = 0x180000, scoped, tag = 'input window, operand 1, single buffered']
    #allocation6 [shape = 's32[1]{0}', space=sflag, size = 0x4, scoped, tag = 'scoped memory for residual_encoder_pallas.1']
    #allocation7 [shape = 'u8[4096]{0}', space=vmem, size = 0x1000, scoped, tag = 'input window, operand 2, single buffered']
    #allocation8 [shape = 'u8[262144]{0}', space=vmem, size = 0x40000, scoped, tag = 'output window, operand 0']
    %8 = vsyncpa [#allocation3], 0
    %s9 = scalar_lea.sflag [#allocation3], 1
    %10 = vsyncpa %s9, 0
    %11 = vsyncpa [#allocation6], 0
    %12 = vsyncpa [#allocation4], 0
    %s13 = scalar_lea.sflag [#allocation4], 1
    %14 = vsyncpa %s13, 0
    loop: start=0, step=1, limit=4
    $region2: #{residual_encoder_pallas.1} parent=1 // loop_pre_header
      _
    $region3: #{residual_encoder_pallas.1} parent=1 // loop_header
      %s16 = sphi 0, %s20
      %p17 = scmp.ge.s32.totalorder %s16, 4
      %s26 = sphi 0, %s28
      %s29 = sphi 0, %s26
      %s30 = sphi 0, %s29
      %s46 = sphi 0, %s30
      %s50 = sphi 0, %s50
      %s52 = sphi 0, %s50
      %s53 = sphi 0, %s52
      %s67 = sphi 0, %s53
      %s71 = sphi 0, %s71
      %s73 = sphi 0, %s71
      %s74 = sphi 0, %s73
      %s88 = sphi 0, %s74
      %s94 = sphi 0, %s96
      %s97 = sphi 0, %s94
      %s98 = sphi 0, %s97
      %s114 = sphi 0, %s98
    $region4: #{residual_encoder_pallas.1} parent=1 // loop_header_branch
      %19 = sbr.rel (%p17) target = $region8
    $region5: #{residual_encoder_pallas.1} parent=1 // loop_body
      %s21 = ssub.s32 %s16, 1
      %s22 = ssub.s32 %s16, 2
      %s23 = sadd.s32 %s16, 1
      %s24 = ssub.s32 %s16, %s23
      %p25 = scmp.eq.s32.totalorder %s24, 0
      %s27 = sadd.s32 %s26, 1
      %s28 = scalar_select %p25, %s26, %s27
      %p31 = pneg %p25
      %p32 = scmp.eq.s32.totalorder %s16, 1
      %p33 = por %p31, %p32
      %p34 = scmp.ne.s32.totalorder %s26, %s29
      %p35 = scmp.eq.s32.totalorder %s16, 0
      %p36 = por %p34, %p35
      %p37 = scmp.ne.s32.totalorder %s26, %s29
      %p38 = scmp.eq.s32.totalorder %s21, 1
      %p39 = por %p37, %p38
      %p40 = scmp.ne.s32.totalorder %s29, %s30
      %p41 = scmp.eq.s32.totalorder %s21, 0
      %p42 = por %p40, %p41
      %p43 = scmp.ne.s32.totalorder %s29, %s30
      %p44 = scmp.eq.s32.totalorder %s22, 1
      %p45 = por %p43, %p44
      %p47 = scmp.ne.s32.totalorder %s30, %s46
      %p48 = scmp.eq.s32.totalorder %s22, 0
      %p49 = por %p47, %p48
      %s51 = sadd.s32 %s50, 1
      %p54 = scmp.eq.s32.totalorder %s16, 1
      %p55 = scmp.ne.s32.totalorder %s50, %s52
      %p56 = scmp.eq.s32.totalorder %s16, 0
      %p57 = por %p55, %p56
      %p58 = scmp.ne.s32.totalorder %s50, %s52
      %p59 = scmp.eq.s32.totalorder %s21, 1
      %p60 = por %p58, %p59
      %p61 = scmp.ne.s32.totalorder %s52, %s53
      %p62 = scmp.eq.s32.totalorder %s21, 0
      %p63 = por %p61, %p62
      %p64 = scmp.ne.s32.totalorder %s52, %s53
      %p65 = scmp.eq.s32.totalorder %s22, 1
      %p66 = por %p64, %p65
      %p68 = scmp.ne.s32.totalorder %s53, %s67
      %p69 = scmp.eq.s32.totalorder %s22, 0
      %p70 = por %p68, %p69
      %s72 = sadd.s32 %s71, 1
      %p75 = scmp.eq.s32.totalorder %s16, 1
      %p76 = scmp.ne.s32.totalorder %s71, %s73
      %p77 = scmp.eq.s32.totalorder %s16, 0
      %p78 = por %p76, %p77
      %p79 = scmp.ne.s32.totalorder %s71, %s73
      %p80 = scmp.eq.s32.totalorder %s21, 1
      %p81 = por %p79, %p80
      %p82 = scmp.ne.s32.totalorder %s73, %s74
      %p83 = scmp.eq.s32.totalorder %s21, 0
      %p84 = por %p82, %p83
      %p85 = scmp.ne.s32.totalorder %s73, %s74
      %p86 = scmp.eq.s32.totalorder %s22, 1
      %p87 = por %p85, %p86
      %p89 = scmp.ne.s32.totalorder %s74, %s88
      %p90 = scmp.eq.s32.totalorder %s22, 0
      %p91 = por %p89, %p90
      %s92 = ssub.s32 %s16, %s23
      %p93 = scmp.eq.s32.totalorder %s92, 0
      %s95 = sadd.s32 %s94, 1
      %s96 = scalar_select %p93, %s94, %s95
      %p99 = pneg %p93
      %p100 = scmp.eq.s32.totalorder %s16, 1
      %p101 = por %p99, %p100
      %p102 = scmp.ne.s32.totalorder %s94, %s97
      %p103 = scmp.eq.s32.totalorder %s16, 0
      %p104 = por %p102, %p103
      %p105 = scmp.ne.s32.totalorder %s94, %s97
      %p106 = scmp.eq.s32.totalorder %s21, 1
      %p107 = por %p105, %p106
      %p108 = scmp.ne.s32.totalorder %s97, %s98
      %p109 = scmp.eq.s32.totalorder %s21, 0
      %p110 = por %p108, %p109
      %p111 = scmp.ne.s32.totalorder %s97, %s98
      %p112 = scmp.eq.s32.totalorder %s22, 1
      %p113 = por %p111, %p112
      %p115 = scmp.ne.s32.totalorder %s98, %s114
      %p116 = scmp.eq.s32.totalorder %s22, 0
      %p117 = por %p115, %p116
      %p118 = scmp.le.s32.totalorder 1, %s16
      %p119 = scmp.lt.s32.totalorder %s16, 3
      %p120 = pnand %p118, %p119
      %p121 = pneg %p120
      // Predicated region
      $region9: #{residual_encoder_pallas.1} parent=5 // pred_check
        _
      $region10: #{residual_encoder_pallas.1} parent=5 // pred_check_branch
        %123 = sbr.rel (%p120) target = $region12
      $region11: #{residual_encoder_pallas.1} parent=5 // pred_region
        %s124 = ssub.s32 %s16, 1
        // Predicated region
        $region13: #{residual_encoder_pallas.1} parent=11 // pred_check
          %p125 = pneg %p63
        $region14: #{residual_encoder_pallas.1} parent=11 // pred_check_branch
          %127 = sbr.rel (%p125) target = $region16
        $region15: #{residual_encoder_pallas.1} parent=11 // pred_region
          %s129 = ssub.s32 49152, 49152
          %130 = vsyncadd [#allocation6], %s129
          %s131 = sshll.u32 [#allocation5], 4
          %s132 = int_to_ptr.vmem [resolvable:$true] %s131
          %137 = dma.hbm_to_vmem [thread:$0]  %s1, 49152, %s132, [#allocation6], 128, 128, 8
        $region16: #{residual_encoder_pallas.1} parent=11 // pred_fallthru
          _
        // Predicated region
        $region17: #{residual_encoder_pallas.1} parent=11 // pred_check
          %p138 = pneg %p84
        $region18: #{residual_encoder_pallas.1} parent=11 // pred_check_branch
          %140 = sbr.rel (%p138) target = $region20
        $region19: #{residual_encoder_pallas.1} parent=11 // pred_region
          %s142 = ssub.s32 128, 128
          %143 = vsyncadd [#allocation6], %s142
          %s144 = sshll.u32 [#allocation7], 4
          %s145 = int_to_ptr.vmem [resolvable:$true] %s144
          %150 = dma.hbm_to_vmem [thread:$0]  %s2, 128, %s145, [#allocation6], 32, 32, 2
        $region20: #{residual_encoder_pallas.1} parent=11 // pred_fallthru
          _
      $region12: #{residual_encoder_pallas.1} parent=5 // pred_fallthru
        _
      %p151 = scmp.lt.s32.totalorder %s16, 2
      // Predicated region
      $region21: #{residual_encoder_pallas.1} parent=5 // pred_check
        %p152 = pneg %p151
      $region22: #{residual_encoder_pallas.1} parent=5 // pred_check_branch
        %154 = sbr.rel (%p152) target = $region24
      $region23: #{residual_encoder_pallas.1} parent=5 // pred_region
        // Predicated region
        $region25: #{residual_encoder_pallas.1} parent=23 // pred_check
          %p155 = pneg %p36
        $region26: #{residual_encoder_pallas.1} parent=23 // pred_check_branch
          %157 = sbr.rel (%p155) target = $region28
        $region27: #{residual_encoder_pallas.1} parent=23 // pred_region
          %s158 = sand.u32 %s26, 1
          %s159 = scalar_lea.sflag [#allocation3], %s158
          %s160 = sand.u32 %s26, 1
          %s161 = smul.addr %s160, 256
          %s162 = scalar_lea.vmem [#allocation2], %s161
          %s164 = ssub.s32 4096, 4096
          %165 = vsyncadd %s159, %s164
          %s166 = smul.addr %s16, 32
          %s167 = smul.addr %s166, 128
          %s168 = scalar_lea.hbm %s0, %s167
          %s169 = sshll.u32 %s162, 4
          %s170 = int_to_ptr.vmem [resolvable:$true] %s169
          %175 = dma.hbm_to_vmem [thread:$0]  %s168, 4096, %s170, %s159, 128, 128, 8
        $region28: #{residual_encoder_pallas.1} parent=23 // pred_fallthru
          _
      $region24: #{residual_encoder_pallas.1} parent=5 // pred_fallthru
        _
      %p176 = scmp.le.s32.totalorder 1, %s16
      %p177 = scmp.lt.s32.totalorder %s16, 3
      %p178 = pnand %p176, %p177
      %p179 = pneg %p178
      // Predicated region
      $region29: #{residual_encoder_pallas.1} parent=5 // pred_check
        _
      $region30: #{residual_encoder_pallas.1} parent=5 // pred_check_branch
        %181 = sbr.rel (%p178) target = $region32
      $region31: #{residual_encoder_pallas.1} parent=5 // pred_region
        %s182 = ssub.s32 %s16, 1
        %s183 = sand.u32 %s29, 1
        %s184 = scalar_lea.sflag [#allocation3], %s183
        %s185 = sand.u32 %s29, 1
        %s186 = smul.addr %s185, 256
        %s187 = scalar_lea.vmem [#allocation2], %s186
        // Predicated region
        $region33: #{residual_encoder_pallas.1} parent=31 // pred_check
          %p188 = pneg %p42
        $region34: #{residual_encoder_pallas.1} parent=31 // pred_check_branch
          %190 = sbr.rel (%p188) target = $region36
        $region35: #{residual_encoder_pallas.1} parent=31 // pred_region
          %191 = dma.done %s184, 4096
        $region36: #{residual_encoder_pallas.1} parent=31 // pred_fallthru
          _
        // Predicated region
        $region37: #{residual_encoder_pallas.1} parent=31 // pred_check
          %p192 = pneg %p63
        $region38: #{residual_encoder_pallas.1} parent=31 // pred_check_branch
          %194 = sbr.rel (%p192) target = $region40
        $region39: #{residual_encoder_pallas.1} parent=31 // pred_region
          %195 = dma.done [#allocation6], 49152
        $region40: #{residual_encoder_pallas.1} parent=31 // pred_fallthru
          _
        // Predicated region
        $region41: #{residual_encoder_pallas.1} parent=31 // pred_check
          %p196 = pneg %p84
        $region42: #{residual_encoder_pallas.1} parent=31 // pred_check_branch
          %198 = sbr.rel (%p196) target = $region44
        $region43: #{residual_encoder_pallas.1} parent=31 // pred_region
          %199 = dma.done [#allocation6], 128
        $region44: #{residual_encoder_pallas.1} parent=31 // pred_fallthru
          _
        %s200 = sand.u32 %s29, 1
        %s201 = scalar_lea.sflag [#allocation3], %s200
        %s202 = sand.u32 %s29, 1
        %s203 = smul.addr %s202, 256
        %s204 = scalar_lea.vmem [#allocation2], %s203
        %p205 = pneg %p42
        %p206 = pneg %p39
        %p207 = pneg %p63
        %p208 = pneg %p60
        %p209 = pneg %p84
        %p210 = pneg %p81
        %p211 = pneg %p110
        %p212 = pneg %p107
        %s213 = sand.u32 %s97, 1
        %s214 = scalar_lea.sflag [#allocation4], %s213
        %s215 = sand.u32 %s97, 1
        %s216 = smul.addr %s215, 256
        %s217 = scalar_lea.vmem [#allocation8], %s216
        %v218 = vld [vmem:[%s187] sm:$0xff]
        %v219 = vld [vmem:[%s187 + $0x8] sm:$0xff]
        %v220 = vld [vmem:[%s187 + $0x10] sm:$0xff]
        %v221 = vld [vmem:[%s187 + $0x18] sm:$0xff]
        %v222 = vld [vmem:[%s187 + $0x20] sm:$0xff]
        %v223 = vld [vmem:[%s187 + $0x28] sm:$0xff]
        %v224 = vld [vmem:[%s187 + $0x30] sm:$0xff]
        %v225 = vld [vmem:[%s187 + $0x38] sm:$0xff]
        %v226 = vld [vmem:[%s187 + $0x40] sm:$0xff]
        %v227 = vld [vmem:[%s187 + $0x48] sm:$0xff]
        %v228 = vld [vmem:[%s187 + $0x50] sm:$0xff]
        %v229 = vld [vmem:[%s187 + $0x58] sm:$0xff]
        %v230 = vld [vmem:[%s187 + $0x60] sm:$0xff]
        %v231 = vld [vmem:[%s187 + $0x68] sm:$0xff]
        %v232 = vld [vmem:[%s187 + $0x70] sm:$0xff]
        %v233 = vld [vmem:[%s187 + $0x78] sm:$0xff]
        %v234 = vld [vmem:[%s187 + $0x80] sm:$0xff]
        %v235 = vld [vmem:[%s187 + $0x88] sm:$0xff]
        %v236 = vld [vmem:[%s187 + $0x90] sm:$0xff]
        %v237 = vld [vmem:[%s187 + $0x98] sm:$0xff]
        %v238 = vld [vmem:[%s187 + $0xa0] sm:$0xff]
        %v239 = vld [vmem:[%s187 + $0xa8] sm:$0xff]
        %v240 = vld [vmem:[%s187 + $0xb0] sm:$0xff]
        %v241 = vld [vmem:[%s187 + $0xb8] sm:$0xff]
        %v242 = vld [vmem:[%s187 + $0xc0] sm:$0xff]
        %v243 = vld [vmem:[%s187 + $0xc8] sm:$0xff]
        %v244 = vld [vmem:[%s187 + $0xd0] sm:$0xff]
        %v245 = vld [vmem:[%s187 + $0xd8] sm:$0xff]
        %v246 = vld [vmem:[%s187 + $0xe0] sm:$0xff]
        %v247 = vld [vmem:[%s187 + $0xe8] sm:$0xff]
        %v248 = vld [vmem:[%s187 + $0xf0] sm:$0xff]
        %v249 = vld [vmem:[%s187 + $0xf8] sm:$0xff]
        %250 = vxpose.xlu0.b32.start [1/16] %v218, 128
        %251 = vxpose.xlu0.b32.cont [2/16] %v219, 128
        %252 = vxpose.xlu0.b32.cont [3/16] %v220, 128
        %253 = vxpose.xlu0.b32.cont [4/16] %v221, 128
        %254 = vxpose.xlu0.b32.cont [5/16] %v222, 128
        %255 = vxpose.xlu0.b32.cont [6/16] %v223, 128
        %256 = vxpose.xlu0.b32.cont [7/16] %v224, 128
        %257 = vxpose.xlu0.b32.cont [8/16] %v225, 128
        %258 = vxpose.xlu0.b32.cont [9/16] %v226, 128
        %259 = vxpose.xlu0.b32.cont [10/16] %v227, 128
        %260 = vxpose.xlu0.b32.cont [11/16] %v228, 128
        %261 = vxpose.xlu0.b32.cont [12/16] %v229, 128
        %262 = vxpose.xlu0.b32.cont [13/16] %v230, 128
        %263 = vxpose.xlu0.b32.cont [14/16] %v231, 128
        %264 = vxpose.xlu0.b32.cont [15/16] %v232, 128
        %265 = vxpose.xlu0.b32.end [16/16] %v233, 128
        %v266 = vpop.trf.xlu0
        %v267 = vpop.trf.xlu0
        %v268 = vpop.trf.xlu0
        %v269 = vpop.trf.xlu0
        %v270 = vpop.trf.xlu0
        %v271 = vpop.trf.xlu0
        %v272 = vpop.trf.xlu0
        %v273 = vpop.trf.xlu0
        %v274 = vpop.trf.xlu0
        %v275 = vpop.trf.xlu0
        %v276 = vpop.trf.xlu0
        %v277 = vpop.trf.xlu0
        %v278 = vpop.trf.xlu0
        %v279 = vpop.trf.xlu0
        %v280 = vpop.trf.xlu0
        %v281 = vpop.trf.xlu0
        %282 = vxpose.xlu0.b32.start [1/16] %v234, 128
        %283 = vxpose.xlu0.b32.cont [2/16] %v235, 128
        %284 = vxpose.xlu0.b32.cont [3/16] %v236, 128
        %285 = vxpose.xlu0.b32.cont [4/16] %v237, 128
        %286 = vxpose.xlu0.b32.cont [5/16] %v238, 128
        %287 = vxpose.xlu0.b32.cont [6/16] %v239, 128
        %288 = vxpose.xlu0.b32.cont [7/16] %v240, 128
        %289 = vxpose.xlu0.b32.cont [8/16] %v241, 128
        %290 = vxpose.xlu0.b32.cont [9/16] %v242, 128
        %291 = vxpose.xlu0.b32.cont [10/16] %v243, 128
        %292 = vxpose.xlu0.b32.cont [11/16] %v244, 128
        %293 = vxpose.xlu0.b32.cont [12/16] %v245, 128
        %294 = vxpose.xlu0.b32.cont [13/16] %v246, 128
        %295 = vxpose.xlu0.b32.cont [14/16] %v247, 128
        %296 = vxpose.xlu0.b32.cont [15/16] %v248, 128
        %297 = vxpose.xlu0.b32.end [16/16] %v249, 128
        %v298 = vpop.trf.xlu0
        %v299 = vpop.trf.xlu0
        %v300 = vpop.trf.xlu0
        %v301 = vpop.trf.xlu0
        %v302 = vpop.trf.xlu0
        %v303 = vpop.trf.xlu0
        %v304 = vpop.trf.xlu0
        %v305 = vpop.trf.xlu0
        %v306 = vpop.trf.xlu0
        %v307 = vpop.trf.xlu0
        %v308 = vpop.trf.xlu0
        %v309 = vpop.trf.xlu0
        %v310 = vpop.trf.xlu0
        %v311 = vpop.trf.xlu0
        %v312 = vpop.trf.xlu0
        %v313 = vpop.trf.xlu0
        %vm346 = vcmask 1040384
        %v347 = vrot.slane %v266, 7
        %v348 = vrot.slane %v298, 7
        %v349 = vrot.slane %v267, 7
        %v350 = vsel %vm346, %v347, %v349
        %v351 = vrot.slane %v299, 7
        %v352 = vsel %vm346, %v348, %v351
        %v353 = vrot.slane %v268, 7
        %v354 = vsel %vm346, %v349, %v353
        %v355 = vrot.slane %v300, 7
        %v356 = vsel %vm346, %v351, %v355
        %v357 = vrot.slane %v269, 7
        %v358 = vsel %vm346, %v353, %v357
        %v359 = vrot.slane %v301, 7
        %v360 = vsel %vm346, %v355, %v359
        %v361 = vrot.slane %v270, 7
        %v362 = vsel %vm346, %v357, %v361
        %v363 = vrot.slane %v302, 7
        %v364 = vsel %vm346, %v359, %v363
        %v365 = vrot.slane %v271, 7
        %v366 = vsel %vm346, %v361, %v365
        %v367 = vrot.slane %v303, 7
        %v368 = vsel %vm346, %v363, %v367
        %v369 = vrot.slane %v272, 7
        %v370 = vsel %vm346, %v365, %v369
        %v371 = vrot.slane %v304, 7
        %v372 = vsel %vm346, %v367, %v371
        %v373 = vrot.slane %v273, 7
        %v374 = vsel %vm346, %v369, %v373
        %v375 = vrot.slane %v305, 7
        %v376 = vsel %vm346, %v371, %v375
        %v377 = vrot.slane %v274, 7
        %v378 = vsel %vm346, %v373, %v377
        %v379 = vrot.slane %v306, 7
        %v380 = vsel %vm346, %v375, %v379
        %v381 = vrot.slane %v275, 7
        %v382 = vsel %vm346, %v377, %v381
        %v383 = vrot.slane %v307, 7
        %v384 = vsel %vm346, %v379, %v383
        %v385 = vrot.slane %v276, 7
        %v386 = vsel %vm346, %v381, %v385
        %v387 = vrot.slane %v308, 7
        %v388 = vsel %vm346, %v383, %v387
        %v389 = vrot.slane %v277, 7
        %v390 = vsel %vm346, %v385, %v389
        %v391 = vrot.slane %v309, 7
        %v392 = vsel %vm346, %v387, %v391
        %v393 = vrot.slane %v278, 7
        %v394 = vsel %vm346, %v389, %v393
        %v395 = vrot.slane %v310, 7
        %v396 = vsel %vm346, %v391, %v395
        %v397 = vrot.slane %v279, 7
        %v398 = vsel %vm346, %v393, %v397
        %v399 = vrot.slane %v311, 7
        %v400 = vsel %vm346, %v395, %v399
        %v401 = vrot.slane %v280, 7
        %v402 = vsel %vm346, %v397, %v401
        %v403 = vrot.slane %v312, 7
        %v404 = vsel %vm346, %v399, %v403
        %v405 = vrot.slane %v281, 7
        %v406 = vsel %vm346, %v401, %v405
        %v407 = vrot.slane %v313, 7
        %v408 = vsel %vm346, %v403, %v407
        %v441 = vsel %vm346, 0.0, %v347
        %v442 = vsel %vm346, 0.0, %v348
        %vm443 = vcmask 1046528
        %v444 = vrot.slane %v266, 1
        %v445 = vrot.slane %v267, 1
        %v446 = vsel %vm443, %v444, %v445
        %v447 = vrot.slane %v298, 1
        %v448 = vrot.slane %v299, 1
        %v449 = vsel %vm443, %v447, %v448
        %v450 = vrot.slane %v268, 1
        %v451 = vsel %vm443, %v445, %v450
        %v452 = vrot.slane %v300, 1
        %v453 = vsel %vm443, %v448, %v452
        %v454 = vrot.slane %v269, 1
        %v455 = vsel %vm443, %v450, %v454
        %v456 = vrot.slane %v301, 1
        %v457 = vsel %vm443, %v452, %v456
        %v458 = vrot.slane %v270, 1
        %v459 = vsel %vm443, %v454, %v458
        %v460 = vrot.slane %v302, 1
        %v461 = vsel %vm443, %v456, %v460
        %v462 = vrot.slane %v271, 1
        %v463 = vsel %vm443, %v458, %v462
        %v464 = vrot.slane %v303, 1
        %v465 = vsel %vm443, %v460, %v464
        %v466 = vrot.slane %v272, 1
        %v467 = vsel %vm443, %v462, %v466
        %v468 = vrot.slane %v304, 1
        %v469 = vsel %vm443, %v464, %v468
        %v470 = vrot.slane %v273, 1
        %v471 = vsel %vm443, %v466, %v470
        %v472 = vrot.slane %v305, 1
        %v473 = vsel %vm443, %v468, %v472
        %v474 = vrot.slane %v274, 1
        %v475 = vsel %vm443, %v470, %v474
        %v476 = vrot.slane %v306, 1
        %v477 = vsel %vm443, %v472, %v476
        %v478 = vrot.slane %v275, 1
        %v479 = vsel %vm443, %v474, %v478
        %v480 = vrot.slane %v307, 1
        %v481 = vsel %vm443, %v476, %v480
        %v482 = vrot.slane %v276, 1
        %v483 = vsel %vm443, %v478, %v482
        %v484 = vrot.slane %v308, 1
        %v485 = vsel %vm443, %v480, %v484
        %v486 = vrot.slane %v277, 1
        %v487 = vsel %vm443, %v482, %v486
        %v488 = vrot.slane %v309, 1
        %v489 = vsel %vm443, %v484, %v488
        %v490 = vrot.slane %v278, 1
        %v491 = vsel %vm443, %v486, %v490
        %v492 = vrot.slane %v310, 1
        %v493 = vsel %vm443, %v488, %v492
        %v494 = vrot.slane %v279, 1
        %v495 = vsel %vm443, %v490, %v494
        %v496 = vrot.slane %v311, 1
        %v497 = vsel %vm443, %v492, %v496
        %v498 = vrot.slane %v280, 1
        %v499 = vsel %vm443, %v494, %v498
        %v500 = vrot.slane %v312, 1
        %v501 = vsel %vm443, %v496, %v500
        %v502 = vrot.slane %v281, 1
        %v503 = vsel %vm443, %v498, %v502
        %v504 = vrot.slane %v313, 1
        %v505 = vsel %vm443, %v500, %v504
        %v538 = vsel %vm443, %v502, 0.0
        %v539 = vsel %vm443, %v504, 0.0
        %v540 = vpack.c.bf16 %v350, %v441
        %v541 = vpack.c.bf16 %v352, %v442
        %v542 = vpack.c.bf16 %v267, %v266
        %v543 = vpack.c.bf16 %v299, %v298
        %v544 = vpack.c.bf16 %v451, %v446
        %v545 = vpack.c.bf16 %v453, %v449
        %v546 = vpack.c.bf16 %v358, %v354
        %v547 = vpack.c.bf16 %v360, %v356
        %v548 = vpack.c.bf16 %v269, %v268
        %v549 = vpack.c.bf16 %v301, %v300
        %v550 = vpack.c.bf16 %v459, %v455
        %v551 = vpack.c.bf16 %v461, %v457
        %v552 = vpack.c.bf16 %v366, %v362
        %v553 = vpack.c.bf16 %v368, %v364
        %v554 = vpack.c.bf16 %v271, %v270
        %v555 = vpack.c.bf16 %v303, %v302
        %v556 = vpack.c.bf16 %v467, %v463
        %v557 = vpack.c.bf16 %v469, %v465
        %v558 = vpack.c.bf16 %v374, %v370
        %v559 = vpack.c.bf16 %v376, %v372
        %v560 = vpack.c.bf16 %v273, %v272
        %v561 = vpack.c.bf16 %v305, %v304
        %v562 = vpack.c.bf16 %v475, %v471
        %v563 = vpack.c.bf16 %v477, %v473
        %v564 = vpack.c.bf16 %v382, %v378
        %v565 = vpack.c.bf16 %v384, %v380
        %v566 = vpack.c.bf16 %v275, %v274
        %v567 = vpack.c.bf16 %v307, %v306
        %v568 = vpack.c.bf16 %v483, %v479
        %v569 = vpack.c.bf16 %v485, %v481
        %v570 = vpack.c.bf16 %v390, %v386
        %v571 = vpack.c.bf16 %v392, %v388
        %v572 = vpack.c.bf16 %v277, %v276
        %v573 = vpack.c.bf16 %v309, %v308
        %v574 = vpack.c.bf16 %v491, %v487
        %v575 = vpack.c.bf16 %v493, %v489
        %v576 = vpack.c.bf16 %v398, %v394
        %v577 = vpack.c.bf16 %v400, %v396
        %v578 = vpack.c.bf16 %v279, %v278
        %v579 = vpack.c.bf16 %v311, %v310
        %v580 = vpack.c.bf16 %v499, %v495
        %v581 = vpack.c.bf16 %v501, %v497
        %v582 = vpack.c.bf16 %v406, %v402
        %v583 = vpack.c.bf16 %v408, %v404
        %v584 = vpack.c.bf16 %v281, %v280
        %v585 = vpack.c.bf16 %v313, %v312
        %v586 = vpack.c.bf16 %v538, %v503
        %v587 = vpack.c.bf16 %v539, %v505
        %v588 = vld [vmem:[#allocation5] sm:$0xff]
        %v589 = vld [vmem:[#allocation5 + $0x8] sm:$0xff]
        %v590 = vld [vmem:[#allocation5 + $0x10] sm:$0xff]
        %v591 = vld [vmem:[#allocation5 + $0x18] sm:$0xff]
        %v592 = vld [vmem:[#allocation5 + $0x20] sm:$0xff]
        %v593 = vld [vmem:[#allocation5 + $0x28] sm:$0xff]
        %v594 = vld [vmem:[#allocation5 + $0x30] sm:$0xff]
        %v595 = vld [vmem:[#allocation5 + $0x38] sm:$0xff]
        %v596 = vld [vmem:[#allocation5 + $0x40] sm:$0xff]
        %v597 = vld [vmem:[#allocation5 + $0x48] sm:$0xff]
        %v598 = vld [vmem:[#allocation5 + $0x50] sm:$0xff]
        %v599 = vld [vmem:[#allocation5 + $0x58] sm:$0xff]
        %v600 = vld [vmem:[#allocation5 + $0x60] sm:$0xff]
        %v601 = vld [vmem:[#allocation5 + $0x68] sm:$0xff]
        %v602 = vld [vmem:[#allocation5 + $0x70] sm:$0xff]
        %v603 = vld [vmem:[#allocation5 + $0x78] sm:$0xff]
        %v604 = vld [vmem:[#allocation5 + $0x80] sm:$0xff]
        %v605 = vld [vmem:[#allocation5 + $0x88] sm:$0xff]
        %v606 = vld [vmem:[#allocation5 + $0x90] sm:$0xff]
        %v607 = vld [vmem:[#allocation5 + $0x98] sm:$0xff]
        %v608 = vld [vmem:[#allocation5 + $0xa0] sm:$0xff]
        %v609 = vld [vmem:[#allocation5 + $0xa8] sm:$0xff]
        %v610 = vld [vmem:[#allocation5 + $0xb0] sm:$0xff]
        %v611 = vld [vmem:[#allocation5 + $0xb8] sm:$0xff]
        %v612 = vld [vmem:[#allocation5 + $0xc0] sm:$0xff]
        %v613 = vld [vmem:[#allocation5 + $0xc8] sm:$0xff]
        %v614 = vld [vmem:[#allocation5 + $0xd0] sm:$0xff]
        %v615 = vld [vmem:[#allocation5 + $0xd8] sm:$0xff]
        %v616 = vld [vmem:[#allocation5 + $0xe0] sm:$0xff]
        %v617 = vld [vmem:[#allocation5 + $0xe8] sm:$0xff]
        %v618 = vld [vmem:[#allocation5 + $0xf0] sm:$0xff]
        %v619 = vld [vmem:[#allocation5 + $0xf8] sm:$0xff]
        %v620 = vld [vmem:[#allocation5 + $0x100] sm:$0xff]
        %v621 = vld [vmem:[#allocation5 + $0x108] sm:$0xff]
        %v622 = vld [vmem:[#allocation5 + $0x110] sm:$0xff]
        %v623 = vld [vmem:[#allocation5 + $0x118] sm:$0xff]
        %v624 = vld [vmem:[#allocation5 + $0x120] sm:$0xff]
        %v625 = vld [vmem:[#allocation5 + $0x128] sm:$0xff]
        %v626 = vld [vmem:[#allocation5 + $0x130] sm:$0xff]
        %v627 = vld [vmem:[#allocation5 + $0x138] sm:$0xff]
        %v628 = vld [vmem:[#allocation5 + $0x140] sm:$0xff]
        %v629 = vld [vmem:[#allocation5 + $0x148] sm:$0xff]
        %v630 = vld [vmem:[#allocation5 + $0x150] sm:$0xff]
        %v631 = vld [vmem:[#allocation5 + $0x158] sm:$0xff]
        %v632 = vld [vmem:[#allocation5 + $0x160] sm:$0xff]
        %v633 = vld [vmem:[#allocation5 + $0x168] sm:$0xff]
        %v634 = vld [vmem:[#allocation5 + $0x170] sm:$0xff]
        %v635 = vld [vmem:[#allocation5 + $0x178] sm:$0xff]
        %v636 = vld [vmem:[#allocation5 + $0x180] sm:$0xff]
        %v637 = vld [vmem:[#allocation5 + $0x188] sm:$0xff]
        %v638 = vld [vmem:[#allocation5 + $0x190] sm:$0xff]
        %v639 = vld [vmem:[#allocation5 + $0x198] sm:$0xff]
        %v640 = vld [vmem:[#allocation5 + $0x1a0] sm:$0xff]
        %v641 = vld [vmem:[#allocation5 + $0x1a8] sm:$0xff]
        %v642 = vld [vmem:[#allocation5 + $0x1b0] sm:$0xff]
        %v643 = vld [vmem:[#allocation5 + $0x1b8] sm:$0xff]
        %v644 = vld [vmem:[#allocation5 + $0x1c0] sm:$0xff]
        %v645 = vld [vmem:[#allocation5 + $0x1c8] sm:$0xff]
        %v646 = vld [vmem:[#allocation5 + $0x1d0] sm:$0xff]
        %v647 = vld [vmem:[#allocation5 + $0x1d8] sm:$0xff]
        %v648 = vld [vmem:[#allocation5 + $0x1e0] sm:$0xff]
        %v649 = vld [vmem:[#allocation5 + $0x1e8] sm:$0xff]
        %v650 = vld [vmem:[#allocation5 + $0x1f0] sm:$0xff]
        %v651 = vld [vmem:[#allocation5 + $0x1f8] sm:$0xff]
        %v652 = vld [vmem:[#allocation5 + $0x200] sm:$0xff]
        %v653 = vld [vmem:[#allocation5 + $0x208] sm:$0xff]
        %v654 = vld [vmem:[#allocation5 + $0x210] sm:$0xff]
        %v655 = vld [vmem:[#allocation5 + $0x218] sm:$0xff]
        %v656 = vld [vmem:[#allocation5 + $0x220] sm:$0xff]
        %v657 = vld [vmem:[#allocation5 + $0x228] sm:$0xff]
        %v658 = vld [vmem:[#allocation5 + $0x230] sm:$0xff]
        %v659 = vld [vmem:[#allocation5 + $0x238] sm:$0xff]
        %v660 = vld [vmem:[#allocation5 + $0x240] sm:$0xff]
        %v661 = vld [vmem:[#allocation5 + $0x248] sm:$0xff]
        %v662 = vld [vmem:[#allocation5 + $0x250] sm:$0xff]
        %v663 = vld [vmem:[#allocation5 + $0x258] sm:$0xff]
        %v664 = vld [vmem:[#allocation5 + $0x260] sm:$0xff]
        %v665 = vld [vmem:[#allocation5 + $0x268] sm:$0xff]
        %v666 = vld [vmem:[#allocation5 + $0x270] sm:$0xff]
        %v667 = vld [vmem:[#allocation5 + $0x278] sm:$0xff]
        %v668 = vld [vmem:[#allocation5 + $0x280] sm:$0xff]
        %v669 = vld [vmem:[#allocation5 + $0x288] sm:$0xff]
        %v670 = vld [vmem:[#allocation5 + $0x290] sm:$0xff]
        %v671 = vld [vmem:[#allocation5 + $0x298] sm:$0xff]
        %v672 = vld [vmem:[#allocation5 + $0x2a0] sm:$0xff]
        %v673 = vld [vmem:[#allocation5 + $0x2a8] sm:$0xff]
        %v674 = vld [vmem:[#allocation5 + $0x2b0] sm:$0xff]
        %v675 = vld [vmem:[#allocation5 + $0x2b8] sm:$0xff]
        %v676 = vld [vmem:[#allocation5 + $0x2c0] sm:$0xff]
        %v677 = vld [vmem:[#allocation5 + $0x2c8] sm:$0xff]
        %v678 = vld [vmem:[#allocation5 + $0x2d0] sm:$0xff]
        %v679 = vld [vmem:[#allocation5 + $0x2d8] sm:$0xff]
        %v680 = vld [vmem:[#allocation5 + $0x2e0] sm:$0xff]
        %v681 = vld [vmem:[#allocation5 + $0x2e8] sm:$0xff]
        %v682 = vld [vmem:[#allocation5 + $0x2f0] sm:$0xff]
        %v683 = vld [vmem:[#allocation5 + $0x2f8] sm:$0xff]
        %v684 = vld [vmem:[#allocation7] sm:$0x3]
        %v686 = vlaneseq
        %v687 = vshrl.u32 %v686, 7
        %v688 = vsub.s32 0, %v687
        %v689 = vrot.slane %v684, %v688
        %v690 = vlaneseq
        %v691 = vshrl.u32 %v690, 7
        %v692 = vsub.s32 1, %v691
        %v693 = vrot.slane %v684, %v692
        %v792 = vunpack.c.l.b16 %v588
        %v793 = vunpack.c.h.b16 %v588
        %v794 = vunpack.c.l.b16 %v589
        %v795 = vunpack.c.h.b16 %v589
        %v796 = vunpack.c.l.b16 %v590
        %v797 = vunpack.c.h.b16 %v590
        %v798 = vunpack.c.l.b16 %v591
        %v799 = vunpack.c.h.b16 %v591
        %v800 = vunpack.c.l.b16 %v592
        %v801 = vunpack.c.h.b16 %v592
        %v802 = vunpack.c.l.b16 %v593
        %v803 = vunpack.c.h.b16 %v593
        %v804 = vunpack.c.l.b16 %v594
        %v805 = vunpack.c.h.b16 %v594
        %v806 = vunpack.c.l.b16 %v595
        %v807 = vunpack.c.h.b16 %v595
        %v808 = vunpack.c.l.b16 %v596
        %v809 = vunpack.c.h.b16 %v596
        %v810 = vunpack.c.l.b16 %v597
        %v811 = vunpack.c.h.b16 %v597
        %v812 = vunpack.c.l.b16 %v598
        %v813 = vunpack.c.h.b16 %v598
        %v814 = vunpack.c.l.b16 %v599
        %v815 = vunpack.c.h.b16 %v599
        %v816 = vunpack.c.l.b16 %v600
        %v817 = vunpack.c.h.b16 %v600
        %v818 = vunpack.c.l.b16 %v601
        %v819 = vunpack.c.h.b16 %v601
        %v820 = vunpack.c.l.b16 %v602
        %v821 = vunpack.c.h.b16 %v602
        %v822 = vunpack.c.l.b16 %v603
        %v823 = vunpack.c.h.b16 %v603
        %v824 = vunpack.c.l.b16 %v604
        %v825 = vunpack.c.h.b16 %v604
        %v826 = vunpack.c.l.b16 %v605
        %v827 = vunpack.c.h.b16 %v605
        %v828 = vunpack.c.l.b16 %v606
        %v829 = vunpack.c.h.b16 %v606
        %v830 = vunpack.c.l.b16 %v607
        %v831 = vunpack.c.h.b16 %v607
        %v832 = vunpack.c.l.b16 %v608
        %v833 = vunpack.c.h.b16 %v608
        %v834 = vunpack.c.l.b16 %v609
        %v835 = vunpack.c.h.b16 %v609
        %v836 = vunpack.c.l.b16 %v610
        %v837 = vunpack.c.h.b16 %v610
        %v838 = vunpack.c.l.b16 %v611
        %v839 = vunpack.c.h.b16 %v611
        %v840 = vunpack.c.l.b16 %v612
        %v841 = vunpack.c.h.b16 %v612
        %v842 = vunpack.c.l.b16 %v613
        %v843 = vunpack.c.h.b16 %v613
        %v844 = vunpack.c.l.b16 %v614
        %v845 = vunpack.c.h.b16 %v614
        %v846 = vunpack.c.l.b16 %v615
        %v847 = vunpack.c.h.b16 %v615
        %v848 = vunpack.c.l.b16 %v616
        %v849 = vunpack.c.h.b16 %v616
        %v850 = vunpack.c.l.b16 %v617
        %v851 = vunpack.c.h.b16 %v617
        %v852 = vunpack.c.l.b16 %v618
        %v853 = vunpack.c.h.b16 %v618
        %v854 = vunpack.c.l.b16 %v619
        %v855 = vunpack.c.h.b16 %v619
        %v856 = vunpack.c.l.b16 %v620
        %v857 = vunpack.c.h.b16 %v620
        %v858 = vunpack.c.l.b16 %v621
        %v859 = vunpack.c.h.b16 %v621
        %v860 = vunpack.c.l.b16 %v622
        %v861 = vunpack.c.h.b16 %v622
        %v862 = vunpack.c.l.b16 %v623
        %v863 = vunpack.c.h.b16 %v623
        %v864 = vunpack.c.l.b16 %v624
        %v865 = vunpack.c.h.b16 %v624
        %v866 = vunpack.c.l.b16 %v625
        %v867 = vunpack.c.h.b16 %v625
        %v868 = vunpack.c.l.b16 %v626
        %v869 = vunpack.c.h.b16 %v626
        %v870 = vunpack.c.l.b16 %v627
        %v871 = vunpack.c.h.b16 %v627
        %v872 = vunpack.c.l.b16 %v628
        %v873 = vunpack.c.h.b16 %v628
        %v874 = vunpack.c.l.b16 %v629
        %v875 = vunpack.c.h.b16 %v629
        %v876 = vunpack.c.l.b16 %v630
        %v877 = vunpack.c.h.b16 %v630
        %v878 = vunpack.c.l.b16 %v631
        %v879 = vunpack.c.h.b16 %v631
        %v880 = vunpack.c.l.b16 %v632
        %v881 = vunpack.c.h.b16 %v632
        %v882 = vunpack.c.l.b16 %v633
        %v883 = vunpack.c.h.b16 %v633
        %v884 = vunpack.c.l.b16 %v634
        %v885 = vunpack.c.h.b16 %v634
        %v886 = vunpack.c.l.b16 %v635
        %v887 = vunpack.c.h.b16 %v635
        %v888 = vunpack.c.l.b16 %v636
        %v889 = vunpack.c.h.b16 %v636
        %v890 = vunpack.c.l.b16 %v637
        %v891 = vunpack.c.h.b16 %v637
        %v892 = vunpack.c.l.b16 %v638
        %v893 = vunpack.c.h.b16 %v638
        %v894 = vunpack.c.l.b16 %v639
        %v895 = vunpack.c.h.b16 %v639
        %v896 = vunpack.c.l.b16 %v640
        %v897 = vunpack.c.h.b16 %v640
        %v898 = vunpack.c.l.b16 %v641
        %v899 = vunpack.c.h.b16 %v641
        %v900 = vunpack.c.l.b16 %v642
        %v901 = vunpack.c.h.b16 %v642
        %v902 = vunpack.c.l.b16 %v643
        %v903 = vunpack.c.h.b16 %v643
        %v904 = vunpack.c.l.b16 %v644
        %v905 = vunpack.c.h.b16 %v644
        %v906 = vunpack.c.l.b16 %v645
        %v907 = vunpack.c.h.b16 %v645
        %v908 = vunpack.c.l.b16 %v646
        %v909 = vunpack.c.h.b16 %v646
        %v910 = vunpack.c.l.b16 %v647
        %v911 = vunpack.c.h.b16 %v647
        %v912 = vunpack.c.l.b16 %v648
        %v913 = vunpack.c.h.b16 %v648
        %v914 = vunpack.c.l.b16 %v649
        %v915 = vunpack.c.h.b16 %v649
        %v916 = vunpack.c.l.b16 %v650
        %v917 = vunpack.c.h.b16 %v650
        %v918 = vunpack.c.l.b16 %v651
        %v919 = vunpack.c.h.b16 %v651
        %v920 = vunpack.c.l.b16 %v652
        %v921 = vunpack.c.h.b16 %v652
        %v922 = vunpack.c.l.b16 %v653
        %v923 = vunpack.c.h.b16 %v653
        %v924 = vunpack.c.l.b16 %v654
        %v925 = vunpack.c.h.b16 %v654
        %v926 = vunpack.c.l.b16 %v655
        %v927 = vunpack.c.h.b16 %v655
        %v928 = vunpack.c.l.b16 %v656
        %v929 = vunpack.c.h.b16 %v656
        %v930 = vunpack.c.l.b16 %v657
        %v931 = vunpack.c.h.b16 %v657
        %v932 = vunpack.c.l.b16 %v658
        %v933 = vunpack.c.h.b16 %v658
        %v934 = vunpack.c.l.b16 %v659
        %v935 = vunpack.c.h.b16 %v659
        %v936 = vunpack.c.l.b16 %v660
        %v937 = vunpack.c.h.b16 %v660
        %v938 = vunpack.c.l.b16 %v661
        %v939 = vunpack.c.h.b16 %v661
        %v940 = vunpack.c.l.b16 %v662
        %v941 = vunpack.c.h.b16 %v662
        %v942 = vunpack.c.l.b16 %v663
        %v943 = vunpack.c.h.b16 %v663
        %v944 = vunpack.c.l.b16 %v664
        %v945 = vunpack.c.h.b16 %v664
        %v946 = vunpack.c.l.b16 %v665
        %v947 = vunpack.c.h.b16 %v665
        %v948 = vunpack.c.l.b16 %v666
        %v949 = vunpack.c.h.b16 %v666
        %v950 = vunpack.c.l.b16 %v667
        %v951 = vunpack.c.h.b16 %v667
        %v952 = vunpack.c.l.b16 %v668
        %v953 = vunpack.c.h.b16 %v668
        %v954 = vunpack.c.l.b16 %v669
        %v955 = vunpack.c.h.b16 %v669
        %v956 = vunpack.c.l.b16 %v670
        %v957 = vunpack.c.h.b16 %v670
        %v958 = vunpack.c.l.b16 %v671
        %v959 = vunpack.c.h.b16 %v671
        %v960 = vunpack.c.l.b16 %v672
        %v961 = vunpack.c.h.b16 %v672
        %v962 = vunpack.c.l.b16 %v673
        %v963 = vunpack.c.h.b16 %v673
        %v964 = vunpack.c.l.b16 %v674
        %v965 = vunpack.c.h.b16 %v674
        %v966 = vunpack.c.l.b16 %v675
        %v967 = vunpack.c.h.b16 %v675
        %v968 = vunpack.c.l.b16 %v676
        %v969 = vunpack.c.h.b16 %v676
        %v970 = vunpack.c.l.b16 %v677
        %v971 = vunpack.c.h.b16 %v677
        %v972 = vunpack.c.l.b16 %v678
        %v973 = vunpack.c.h.b16 %v678
        %v974 = vunpack.c.l.b16 %v679
        %v975 = vunpack.c.h.b16 %v679
        %v976 = vunpack.c.l.b16 %v680
        %v977 = vunpack.c.h.b16 %v680
        %v978 = vunpack.c.l.b16 %v681
        %v979 = vunpack.c.h.b16 %v681
        %v980 = vunpack.c.l.b16 %v682
        %v981 = vunpack.c.h.b16 %v682
        %v982 = vunpack.c.l.b16 %v683
        %v983 = vunpack.c.h.b16 %v683
        %v984 = vpack.c.b16 %v794, %v792
        %v985 = vpack.c.b16 %v795, %v793
        %v986 = vpack.c.b16 %v798, %v796
        %v987 = vpack.c.b16 %v799, %v797
        %v988 = vpack.c.b16 %v802, %v800
        %v989 = vpack.c.b16 %v803, %v801
        %v990 = vpack.c.b16 %v806, %v804
        %v991 = vpack.c.b16 %v807, %v805
        %v992 = vpack.c.b16 %v810, %v808
        %v993 = vpack.c.b16 %v811, %v809
        %v994 = vpack.c.b16 %v814, %v812
        %v995 = vpack.c.b16 %v815, %v813
        %v996 = vpack.c.b16 %v818, %v816
        %v997 = vpack.c.b16 %v819, %v817
        %v998 = vpack.c.b16 %v822, %v820
        %v999 = vpack.c.b16 %v823, %v821
        %v1000 = vpack.c.b16 %v826, %v824
        %v1001 = vpack.c.b16 %v827, %v825
        %v1002 = vpack.c.b16 %v830, %v828
        %v1003 = vpack.c.b16 %v831, %v829
        %v1004 = vpack.c.b16 %v834, %v832
        %v1005 = vpack.c.b16 %v835, %v833
        %v1006 = vpack.c.b16 %v838, %v836
        %v1007 = vpack.c.b16 %v839, %v837
        %v1008 = vpack.c.b16 %v842, %v840
        %v1009 = vpack.c.b16 %v843, %v841
        %v1010 = vpack.c.b16 %v846, %v844
        %v1011 = vpack.c.b16 %v847, %v845
        %v1012 = vpack.c.b16 %v850, %v848
        %v1013 = vpack.c.b16 %v851, %v849
        %v1014 = vpack.c.b16 %v854, %v852
        %v1015 = vpack.c.b16 %v855, %v853
        %v1016 = vpack.c.b16 %v858, %v856
        %v1017 = vpack.c.b16 %v859, %v857
        %v1018 = vpack.c.b16 %v862, %v860
        %v1019 = vpack.c.b16 %v863, %v861
        %v1020 = vpack.c.b16 %v866, %v864
        %v1021 = vpack.c.b16 %v867, %v865
        %v1022 = vpack.c.b16 %v870, %v868
        %v1023 = vpack.c.b16 %v871, %v869
        %v1024 = vpack.c.b16 %v874, %v872
        %v1025 = vpack.c.b16 %v875, %v873
        %v1026 = vpack.c.b16 %v878, %v876
        %v1027 = vpack.c.b16 %v879, %v877
        %v1028 = vpack.c.b16 %v882, %v880
        %v1029 = vpack.c.b16 %v883, %v881
        %v1030 = vpack.c.b16 %v886, %v884
        %v1031 = vpack.c.b16 %v887, %v885
        %v1032 = vpack.c.b16 %v890, %v888
        %v1033 = vpack.c.b16 %v891, %v889
        %v1034 = vpack.c.b16 %v894, %v892
        %v1035 = vpack.c.b16 %v895, %v893
        %v1036 = vpack.c.b16 %v898, %v896
        %v1037 = vpack.c.b16 %v899, %v897
        %v1038 = vpack.c.b16 %v902, %v900
        %v1039 = vpack.c.b16 %v903, %v901
        %v1040 = vpack.c.b16 %v906, %v904
        %v1041 = vpack.c.b16 %v907, %v905
        %v1042 = vpack.c.b16 %v910, %v908
        %v1043 = vpack.c.b16 %v911, %v909
        %v1044 = vpack.c.b16 %v914, %v912
        %v1045 = vpack.c.b16 %v915, %v913
        %v1046 = vpack.c.b16 %v918, %v916
        %v1047 = vpack.c.b16 %v919, %v917
        %v1048 = vpack.c.b16 %v922, %v920
        %v1049 = vpack.c.b16 %v923, %v921
        %v1050 = vpack.c.b16 %v926, %v924
        %v1051 = vpack.c.b16 %v927, %v925
        %v1052 = vpack.c.b16 %v930, %v928
        %v1053 = vpack.c.b16 %v931, %v929
        %v1054 = vpack.c.b16 %v934, %v932
        %v1055 = vpack.c.b16 %v935, %v933
        %v1056 = vpack.c.b16 %v938, %v936
        %v1057 = vpack.c.b16 %v939, %v937
        %v1058 = vpack.c.b16 %v942, %v940
        %v1059 = vpack.c.b16 %v943, %v941
        %v1060 = vpack.c.b16 %v946, %v944
        %v1061 = vpack.c.b16 %v947, %v945
        %v1062 = vpack.c.b16 %v950, %v948
        %v1063 = vpack.c.b16 %v951, %v949
        %v1064 = vpack.c.b16 %v954, %v952
        %v1065 = vpack.c.b16 %v955, %v953
        %v1066 = vpack.c.b16 %v958, %v956
        %v1067 = vpack.c.b16 %v959, %v957
        %v1068 = vpack.c.b16 %v962, %v960
        %v1069 = vpack.c.b16 %v963, %v961
        %v1070 = vpack.c.b16 %v966, %v964
        %v1071 = vpack.c.b16 %v967, %v965
        %v1072 = vpack.c.b16 %v970, %v968
        %v1073 = vpack.c.b16 %v971, %v969
        %v1074 = vpack.c.b16 %v974, %v972
        %v1075 = vpack.c.b16 %v975, %v973
        %v1076 = vpack.c.b16 %v978, %v976
        %v1077 = vpack.c.b16 %v979, %v977
        %v1078 = vpack.c.b16 %v982, %v980
        %v1079 = vpack.c.b16 %v983, %v981
        %1176 = vmatprep.subr.bf16.mxu0 %v985
        %1177 = vmatpush1.bf16.msra.mxu0 %v984
        %1178 = vmatprep.subr.bf16.mxu0 %v987
        %1179 = vmatpush1.bf16.msra.mxu0 %v986
        %1180 = vmatprep.subr.bf16.mxu0 %v989
        %1181 = vmatpush1.bf16.msra.mxu0 %v988
        %1182 = vmatprep.subr.bf16.mxu0 %v991
        %1183 = vmatpush1.bf16.msra.mxu0 %v990
        %1184 = vmatprep.subr.bf16.mxu0 %v993
        %1185 = vmatpush1.bf16.msra.mxu0 %v992
        %1186 = vmatprep.subr.bf16.mxu0 %v995
        %1187 = vmatpush1.bf16.msra.mxu0 %v994
        %1188 = vmatprep.subr.bf16.mxu0 %v997
        %1189 = vmatpush1.bf16.msra.mxu0 %v996
        %1190 = vmatprep.subr.bf16.mxu0 %v999
        %1191 = vmatpush1.bf16.msra.mxu0 %v998
        %1192 = vmatprep.subr.bf16.mxu0 %v1001
        %1193 = vmatpush1.bf16.msra.mxu0 %v1000
        %1194 = vmatprep.subr.bf16.mxu0 %v1003
        %1195 = vmatpush1.bf16.msra.mxu0 %v1002
        %1196 = vmatprep.subr.bf16.mxu0 %v1005
        %1197 = vmatpush1.bf16.msra.mxu0 %v1004
        %1198 = vmatprep.subr.bf16.mxu0 %v1007
        %1199 = vmatpush1.bf16.msra.mxu0 %v1006
        %1200 = vmatprep.subr.bf16.mxu0 %v1009
        %1201 = vmatpush1.bf16.msra.mxu0 %v1008
        %1202 = vmatprep.subr.bf16.mxu0 %v1011
        %1203 = vmatpush1.bf16.msra.mxu0 %v1010
        %1204 = vmatprep.subr.bf16.mxu0 %v1013
        %1205 = vmatpush1.bf16.msra.mxu0 %v1012
        %1206 = vmatprep.subr.bf16.mxu0 %v1015
        %1207 = vmatpush1.bf16.msra.mxu0 %v1014
        %1208 = vmatprep.mubr.bf16.mxu0 %v541
        %1209 = vmatmul.mubr.bf16.gmra.mrb[0].mxu0 %v540
        %v1210 = vpop.f32.mrb[0].mxu0
        %v1211 = vadd.f32 %v689, %v1210
        %v1212 = vpop.f32.mrb[0].mxu0
        %v1213 = vadd.f32 %v693, %v1212
        %v1214 = vpop.f32.mrb[0].mxu0
        %v1215 = vadd.f32 %v689, %v1214
        %v1216 = vpop.f32.mrb[0].mxu0
        %v1217 = vadd.f32 %v693, %v1216
        %1218 = vmatprep.mubr.bf16.mxu0 %v547
        %1219 = vmatmul.mubr.bf16.gmra.mrb[0].mxu0 %v546
        %v1220 = vpop.f32.mrb[0].mxu0
        %v1221 = vadd.f32 %v689, %v1220
        %v1222 = vpop.f32.mrb[0].mxu0
        %v1223 = vadd.f32 %v693, %v1222
        %v1224 = vpop.f32.mrb[0].mxu0
        %v1225 = vadd.f32 %v689, %v1224
        %v1226 = vpop.f32.mrb[0].mxu0
        %v1227 = vadd.f32 %v693, %v1226
        %1228 = vmatprep.mubr.bf16.mxu0 %v553
        %1229 = vmatmul.mubr.bf16.gmra.mrb[0].mxu0 %v552
        %v1230 = vpop.f32.mrb[0].mxu0
        %v1231 = vadd.f32 %v689, %v1230
        %v1232 = vpop.f32.mrb[0].mxu0
        %v1233 = vadd.f32 %v693, %v1232
        %v1234 = vpop.f32.mrb[0].mxu0
        %v1235 = vadd.f32 %v689, %v1234
        %v1236 = vpop.f32.mrb[0].mxu0
        %v1237 = vadd.f32 %v693, %v1236
        %1238 = vmatprep.mubr.bf16.mxu0 %v559
        %1239 = vmatmul.mubr.bf16.gmra.mrb[0].mxu0 %v558
        %v1240 = vpop.f32.mrb[0].mxu0
        %v1241 = vadd.f32 %v689, %v1240
        %v1242 = vpop.f32.mrb[0].mxu0
        %v1243 = vadd.f32 %v693, %v1242
        %v1244 = vpop.f32.mrb[0].mxu0
        %v1245 = vadd.f32 %v689, %v1244
        %v1246 = vpop.f32.mrb[0].mxu0
        %v1247 = vadd.f32 %v693, %v1246
        %1248 = vmatprep.mubr.bf16.mxu0 %v565
        %1249 = vmatmul.mubr.bf16.gmra.mrb[0].mxu0 %v564
        %v1250 = vpop.f32.mrb[0].mxu0
        %v1251 = vadd.f32 %v689, %v1250
        %v1252 = vpop.f32.mrb[0].mxu0
        %v1253 = vadd.f32 %v693, %v1252
        %v1254 = vpop.f32.mrb[0].mxu0
        %v1255 = vadd.f32 %v689, %v1254
        %v1256 = vpop.f32.mrb[0].mxu0
        %v1257 = vadd.f32 %v693, %v1256
        %1258 = vmatprep.mubr.bf16.mxu0 %v571
        %1259 = vmatmul.mubr.bf16.gmra.mrb[0].mxu0 %v570
        %v1260 = vpop.f32.mrb[0].mxu0
        %v1261 = vadd.f32 %v689, %v1260
        %v1262 = vpop.f32.mrb[0].mxu0
        %v1263 = vadd.f32 %v693, %v1262
        %v1264 = vpop.f32.mrb[0].mxu0
        %v1265 = vadd.f32 %v689, %v1264
        %v1266 = vpop.f32.mrb[0].mxu0
        %v1267 = vadd.f32 %v693, %v1266
        %1268 = vmatprep.mubr.bf16.mxu0 %v577
        %1269 = vmatmul.mubr.bf16.gmra.mrb[0].mxu0 %v576
        %v1270 = vpop.f32.mrb[0].mxu0
        %v1271 = vadd.f32 %v689, %v1270
        %v1272 = vpop.f32.mrb[0].mxu0
        %v1273 = vadd.f32 %v693, %v1272
        %v1274 = vpop.f32.mrb[0].mxu0
        %v1275 = vadd.f32 %v689, %v1274
        %v1276 = vpop.f32.mrb[0].mxu0
        %v1277 = vadd.f32 %v693, %v1276
        %1278 = vmatprep.mubr.bf16.mxu0 %v583
        %1279 = vmatmul.mubr.bf16.gmra.mrb[0].mxu0 %v582
        %v1280 = vpop.f32.mrb[0].mxu0
        %v1281 = vadd.f32 %v689, %v1280
        %v1282 = vpop.f32.mrb[0].mxu0
        %v1283 = vadd.f32 %v693, %v1282
        %v1284 = vpop.f32.mrb[0].mxu0
        %v1285 = vadd.f32 %v689, %v1284
        %v1286 = vpop.f32.mrb[0].mxu0
        %v1287 = vadd.f32 %v693, %v1286
        %1288 = vdwg.mxu0
        %1289 = vmatprep.subr.bf16.mxu0 %v1017
        %1290 = vmatpush1.bf16.msra.mxu0 %v1016
        %1291 = vmatprep.subr.bf16.mxu0 %v1019
        %1292 = vmatpush1.bf16.msra.mxu0 %v1018
        %1293 = vmatprep.subr.bf16.mxu0 %v1021
        %1294 = vmatpush1.bf16.msra.mxu0 %v1020
        %1295 = vmatprep.subr.bf16.mxu0 %v1023
        %1296 = vmatpush1.bf16.msra.mxu0 %v1022
        %1297 = vmatprep.subr.bf16.mxu0 %v1025
        %1298 = vmatpush1.bf16.msra.mxu0 %v1024
        %1299 = vmatprep.subr.bf16.mxu0 %v1027
        %1300 = vmatpush1.bf16.msra.mxu0 %v1026
        %1301 = vmatprep.subr.bf16.mxu0 %v1029
        %1302 = vmatpush1.bf16.msra.mxu0 %v1028
        %1303 = vmatprep.subr.bf16.mxu0 %v1031
        %1304 = vmatpush1.bf16.msra.mxu0 %v1030
        %1305 = vmatprep.subr.bf16.mxu0 %v1033
        %1306 = vmatpush1.bf16.msra.mxu0 %v1032
        %1307 = vmatprep.subr.bf16.mxu0 %v1035
        %1308 = vmatpush1.bf16.msra.mxu0 %v1034
        %1309 = vmatprep.subr.bf16.mxu0 %v1037
        %1310 = vmatpush1.bf16.msra.mxu0 %v1036
        %1311 = vmatprep.subr.bf16.mxu0 %v1039
        %1312 = vmatpush1.bf16.msra.mxu0 %v1038
        %1313 = vmatprep.subr.bf16.mxu0 %v1041
        %1314 = vmatpush1.bf16.msra.mxu0 %v1040
        %1315 = vmatprep.subr.bf16.mxu0 %v1043
        %1316 = vmatpush1.bf16.msra.mxu0 %v1042
        %1317 = vmatprep.subr.bf16.mxu0 %v1045
        %1318 = vmatpush1.bf16.msra.mxu0 %v1044
        %1319 = vmatprep.subr.bf16.mxu0 %v1047
        %1320 = vmatpush1.bf16.msra.mxu0 %v1046
        %1321 = vmatprep.mubr.bf16.mxu0 %v543
        %1322 = vmatmul.mubr.bf16.gmra.mrb[0].mxu0 %v542
        %v1323 = vpop.f32.mrb[0].mxu0
        %v1324 = vadd.f32 %v1211, %v1323
        %v1325 = vpop.f32.mrb[0].mxu0
        %v1326 = vadd.f32 %v1213, %v1325
        %v1327 = vpop.f32.mrb[0].mxu0
        %v1328 = vadd.f32 %v1215, %v1327
        %v1329 = vpop.f32.mrb[0].mxu0
        %v1330 = vadd.f32 %v1217, %v1329
        %1331 = vmatprep.mubr.bf16.mxu0 %v549
        %1332 = vmatmul.mubr.bf16.gmra.mrb[0].mxu0 %v548
        %v1333 = vpop.f32.mrb[0].mxu0
        %v1334 = vadd.f32 %v1221, %v1333
        %v1335 = vpop.f32.mrb[0].mxu0
        %v1336 = vadd.f32 %v1223, %v1335
        %v1337 = vpop.f32.mrb[0].mxu0
        %v1338 = vadd.f32 %v1225, %v1337
        %v1339 = vpop.f32.mrb[0].mxu0
        %v1340 = vadd.f32 %v1227, %v1339
        %1341 = vmatprep.mubr.bf16.mxu0 %v555
        %1342 = vmatmul.mubr.bf16.gmra.mrb[0].mxu0 %v554
        %v1343 = vpop.f32.mrb[0].mxu0
        %v1344 = vadd.f32 %v1231, %v1343
        %v1345 = vpop.f32.mrb[0].mxu0
        %v1346 = vadd.f32 %v1233, %v1345
        %v1347 = vpop.f32.mrb[0].mxu0
        %v1348 = vadd.f32 %v1235, %v1347
        %v1349 = vpop.f32.mrb[0].mxu0
        %v1350 = vadd.f32 %v1237, %v1349
        %1351 = vmatprep.mubr.bf16.mxu0 %v561
        %1352 = vmatmul.mubr.bf16.gmra.mrb[0].mxu0 %v560
        %v1353 = vpop.f32.mrb[0].mxu0
        %v1354 = vadd.f32 %v1241, %v1353
        %v1355 = vpop.f32.mrb[0].mxu0
        %v1356 = vadd.f32 %v1243, %v1355
        %v1357 = vpop.f32.mrb[0].mxu0
        %v1358 = vadd.f32 %v1245, %v1357
        %v1359 = vpop.f32.mrb[0].mxu0
        %v1360 = vadd.f32 %v1247, %v1359
        %1361 = vmatprep.mubr.bf16.mxu0 %v567
        %1362 = vmatmul.mubr.bf16.gmra.mrb[0].mxu0 %v566
        %v1363 = vpop.f32.mrb[0].mxu0
        %v1364 = vadd.f32 %v1251, %v1363
        %v1365 = vpop.f32.mrb[0].mxu0
        %v1366 = vadd.f32 %v1253, %v1365
        %v1367 = vpop.f32.mrb[0].mxu0
        %v1368 = vadd.f32 %v1255, %v1367
        %v1369 = vpop.f32.mrb[0].mxu0
        %v1370 = vadd.f32 %v1257, %v1369
        %1371 = vmatprep.mubr.bf16.mxu0 %v573
        %1372 = vmatmul.mubr.bf16.gmra.mrb[0].mxu0 %v572
        %v1373 = vpop.f32.mrb[0].mxu0
        %v1374 = vadd.f32 %v1261, %v1373
        %v1375 = vpop.f32.mrb[0].mxu0
        %v1376 = vadd.f32 %v1263, %v1375
        %v1377 = vpop.f32.mrb[0].mxu0
        %v1378 = vadd.f32 %v1265, %v1377
        %v1379 = vpop.f32.mrb[0].mxu0
        %v1380 = vadd.f32 %v1267, %v1379
        %1381 = vmatprep.mubr.bf16.mxu0 %v579
        %1382 = vmatmul.mubr.bf16.gmra.mrb[0].mxu0 %v578
        %v1383 = vpop.f32.mrb[0].mxu0
        %v1384 = vadd.f32 %v1271, %v1383
        %v1385 = vpop.f32.mrb[0].mxu0
        %v1386 = vadd.f32 %v1273, %v1385
        %v1387 = vpop.f32.mrb[0].mxu0
        %v1388 = vadd.f32 %v1275, %v1387
        %v1389 = vpop.f32.mrb[0].mxu0
        %v1390 = vadd.f32 %v1277, %v1389
        %1391 = vmatprep.mubr.bf16.mxu0 %v585
        %1392 = vmatmul.mubr.bf16.gmra.mrb[0].mxu0 %v584
        %v1393 = vpop.f32.mrb[0].mxu0
        %v1394 = vadd.f32 %v1281, %v1393
        %v1395 = vpop.f32.mrb[0].mxu0
        %v1396 = vadd.f32 %v1283, %v1395
        %v1397 = vpop.f32.mrb[0].mxu0
        %v1398 = vadd.f32 %v1285, %v1397
        %v1399 = vpop.f32.mrb[0].mxu0
        %v1400 = vadd.f32 %v1287, %v1399
        %1401 = vdwg.mxu0
        %1402 = vmatprep.subr.bf16.mxu0 %v1049
        %1403 = vmatpush1.bf16.msra.mxu0 %v1048
        %1404 = vmatprep.subr.bf16.mxu0 %v1051
        %1405 = vmatpush1.bf16.msra.mxu0 %v1050
        %1406 = vmatprep.subr.bf16.mxu0 %v1053
        %1407 = vmatpush1.bf16.msra.mxu0 %v1052
        %1408 = vmatprep.subr.bf16.mxu0 %v1055
        %1409 = vmatpush1.bf16.msra.mxu0 %v1054
        %1410 = vmatprep.subr.bf16.mxu0 %v1057
        %1411 = vmatpush1.bf16.msra.mxu0 %v1056
        %1412 = vmatprep.subr.bf16.mxu0 %v1059
        %1413 = vmatpush1.bf16.msra.mxu0 %v1058
        %1414 = vmatprep.subr.bf16.mxu0 %v1061
        %1415 = vmatpush1.bf16.msra.mxu0 %v1060
        %1416 = vmatprep.subr.bf16.mxu0 %v1063
        %1417 = vmatpush1.bf16.msra.mxu0 %v1062
        %1418 = vmatprep.subr.bf16.mxu0 %v1065
        %1419 = vmatpush1.bf16.msra.mxu0 %v1064
        %1420 = vmatprep.subr.bf16.mxu0 %v1067
        %1421 = vmatpush1.bf16.msra.mxu0 %v1066
        %1422 = vmatprep.subr.bf16.mxu0 %v1069
        %1423 = vmatpush1.bf16.msra.mxu0 %v1068
        %1424 = vmatprep.subr.bf16.mxu0 %v1071
        %1425 = vmatpush1.bf16.msra.mxu0 %v1070
        %1426 = vmatprep.subr.bf16.mxu0 %v1073
        %1427 = vmatpush1.bf16.msra.mxu0 %v1072
        %1428 = vmatprep.subr.bf16.mxu0 %v1075
        %1429 = vmatpush1.bf16.msra.mxu0 %v1074
        %1430 = vmatprep.subr.bf16.mxu0 %v1077
        %1431 = vmatpush1.bf16.msra.mxu0 %v1076
        %1432 = vmatprep.subr.bf16.mxu0 %v1079
        %1433 = vmatpush1.bf16.msra.mxu0 %v1078
        %1434 = vmatprep.mubr.bf16.mxu0 %v545
        %1435 = vmatmul.mubr.bf16.gmra.mrb[0].mxu0 %v544
        %v1436 = vpop.f32.mrb[0].mxu0
        %v1437 = vadd.f32 %v1324, %v1436
        %v1438 = vpop.f32.mrb[0].mxu0
        %v1439 = vadd.f32 %v1326, %v1438
        %v1440 = vpop.f32.mrb[0].mxu0
        %v1441 = vadd.f32 %v1328, %v1440
        %v1442 = vpop.f32.mrb[0].mxu0
        %v1443 = vadd.f32 %v1330, %v1442
        %1444 = vmatprep.mubr.bf16.mxu0 %v551
        %1445 = vmatmul.mubr.bf16.gmra.mrb[0].mxu0 %v550
        %v1446 = vpop.f32.mrb[0].mxu0
        %v1447 = vadd.f32 %v1334, %v1446
        %v1448 = vpop.f32.mrb[0].mxu0
        %v1449 = vadd.f32 %v1336, %v1448
        %v1450 = vpop.f32.mrb[0].mxu0
        %v1451 = vadd.f32 %v1338, %v1450
        %v1452 = vpop.f32.mrb[0].mxu0
        %v1453 = vadd.f32 %v1340, %v1452
        %1454 = vmatprep.mubr.bf16.mxu0 %v557
        %1455 = vmatmul.mubr.bf16.gmra.mrb[0].mxu0 %v556
        %v1456 = vpop.f32.mrb[0].mxu0
        %v1457 = vadd.f32 %v1344, %v1456
        %v1458 = vpop.f32.mrb[0].mxu0
        %v1459 = vadd.f32 %v1346, %v1458
        %v1460 = vpop.f32.mrb[0].mxu0
        %v1461 = vadd.f32 %v1348, %v1460
        %v1462 = vpop.f32.mrb[0].mxu0
        %v1463 = vadd.f32 %v1350, %v1462
        %1464 = vmatprep.mubr.bf16.mxu0 %v563
        %1465 = vmatmul.mubr.bf16.gmra.mrb[0].mxu0 %v562
        %v1466 = vpop.f32.mrb[0].mxu0
        %v1467 = vadd.f32 %v1354, %v1466
        %v1468 = vpop.f32.mrb[0].mxu0
        %v1469 = vadd.f32 %v1356, %v1468
        %v1470 = vpop.f32.mrb[0].mxu0
        %v1471 = vadd.f32 %v1358, %v1470
        %v1472 = vpop.f32.mrb[0].mxu0
        %v1473 = vadd.f32 %v1360, %v1472
        %1474 = vmatprep.mubr.bf16.mxu0 %v569
        %1475 = vmatmul.mubr.bf16.gmra.mrb[0].mxu0 %v568
        %v1476 = vpop.f32.mrb[0].mxu0
        %v1477 = vadd.f32 %v1364, %v1476
        %v1478 = vpop.f32.mrb[0].mxu0
        %v1479 = vadd.f32 %v1366, %v1478
        %v1480 = vpop.f32.mrb[0].mxu0
        %v1481 = vadd.f32 %v1368, %v1480
        %v1482 = vpop.f32.mrb[0].mxu0
        %v1483 = vadd.f32 %v1370, %v1482
        %1484 = vmatprep.mubr.bf16.mxu0 %v575
        %1485 = vmatmul.mubr.bf16.gmra.mrb[0].mxu0 %v574
        %v1486 = vpop.f32.mrb[0].mxu0
        %v1487 = vadd.f32 %v1374, %v1486
        %v1488 = vpop.f32.mrb[0].mxu0
        %v1489 = vadd.f32 %v1376, %v1488
        %v1490 = vpop.f32.mrb[0].mxu0
        %v1491 = vadd.f32 %v1378, %v1490
        %v1492 = vpop.f32.mrb[0].mxu0
        %v1493 = vadd.f32 %v1380, %v1492
        %1494 = vmatprep.mubr.bf16.mxu0 %v581
        %1495 = vmatmul.mubr.bf16.gmra.mrb[0].mxu0 %v580
        %v1496 = vpop.f32.mrb[0].mxu0
        %v1497 = vadd.f32 %v1384, %v1496
        %v1498 = vpop.f32.mrb[0].mxu0
        %v1499 = vadd.f32 %v1386, %v1498
        %v1500 = vpop.f32.mrb[0].mxu0
        %v1501 = vadd.f32 %v1388, %v1500
        %v1502 = vpop.f32.mrb[0].mxu0
        %v1503 = vadd.f32 %v1390, %v1502
        %1504 = vmatprep.mubr.bf16.mxu0 %v587
        %1505 = vmatmul.mubr.bf16.gmra.mrb[0].mxu0 %v586
        %v1506 = vpop.f32.mrb[0].mxu0
        %v1507 = vadd.f32 %v1394, %v1506
        %v1508 = vpop.f32.mrb[0].mxu0
        %v1509 = vadd.f32 %v1396, %v1508
        %v1510 = vpop.f32.mrb[0].mxu0
        %v1511 = vadd.f32 %v1398, %v1510
        %v1512 = vpop.f32.mrb[0].mxu0
        %v1513 = vadd.f32 %v1400, %v1512
        %1514 = vdwg.mxu0
        %v1515 = vmax.f32 %v1437, 0.0
        %v1516 = vmax.f32 %v1439, 0.0
        %v1517 = vmax.f32 %v1441, 0.0
        %v1518 = vmax.f32 %v1443, 0.0
        %v1519 = vmax.f32 %v1447, 0.0
        %v1520 = vmax.f32 %v1449, 0.0
        %v1521 = vmax.f32 %v1451, 0.0
        %v1522 = vmax.f32 %v1453, 0.0
        %v1523 = vmax.f32 %v1457, 0.0
        %v1524 = vmax.f32 %v1459, 0.0
        %v1525 = vmax.f32 %v1461, 0.0
        %v1526 = vmax.f32 %v1463, 0.0
        %v1527 = vmax.f32 %v1467, 0.0
        %v1528 = vmax.f32 %v1469, 0.0
        %v1529 = vmax.f32 %v1471, 0.0
        %v1530 = vmax.f32 %v1473, 0.0
        %v1531 = vmax.f32 %v1477, 0.0
        %v1532 = vmax.f32 %v1479, 0.0
        %v1533 = vmax.f32 %v1481, 0.0
        %v1534 = vmax.f32 %v1483, 0.0
        %v1535 = vmax.f32 %v1487, 0.0
        %v1536 = vmax.f32 %v1489, 0.0
        %v1537 = vmax.f32 %v1491, 0.0
        %v1538 = vmax.f32 %v1493, 0.0
        %v1539 = vmax.f32 %v1497, 0.0
        %v1540 = vmax.f32 %v1499, 0.0
        %v1541 = vmax.f32 %v1501, 0.0
        %v1542 = vmax.f32 %v1503, 0.0
        %v1543 = vmax.f32 %v1507, 0.0
        %v1544 = vmax.f32 %v1509, 0.0
        %v1545 = vmax.f32 %v1511, 0.0
        %v1546 = vmax.f32 %v1513, 0.0
        %v1579 = vrot.slane %v1515, 7
        %v1580 = vrot.slane %v1516, 7
        %v1581 = vrot.slane %v1517, 7
        %v1582 = vsel %vm346, %v1579, %v1581
        %v1583 = vrot.slane %v1518, 7
        %v1584 = vsel %vm346, %v1580, %v1583
        %v1585 = vrot.slane %v1519, 7
        %v1586 = vsel %vm346, %v1581, %v1585
        %v1587 = vrot.slane %v1520, 7
        %v1588 = vsel %vm346, %v1583, %v1587
        %v1589 = vrot.slane %v1521, 7
        %v1590 = vsel %vm346, %v1585, %v1589
        %v1591 = vrot.slane %v1522, 7
        %v1592 = vsel %vm346, %v1587, %v1591
        %v1593 = vrot.slane %v1523, 7
        %v1594 = vsel %vm346, %v1589, %v1593
        %v1595 = vrot.slane %v1524, 7
        %v1596 = vsel %vm346, %v1591, %v1595
        %v1597 = vrot.slane %v1525, 7
        %v1598 = vsel %vm346, %v1593, %v1597
        %v1599 = vrot.slane %v1526, 7
        %v1600 = vsel %vm346, %v1595, %v1599
        %v1601 = vrot.slane %v1527, 7
        %v1602 = vsel %vm346, %v1597, %v1601
        %v1603 = vrot.slane %v1528, 7
        %v1604 = vsel %vm346, %v1599, %v1603
        %v1605 = vrot.slane %v1529, 7
        %v1606 = vsel %vm346, %v1601, %v1605
        %v1607 = vrot.slane %v1530, 7
        %v1608 = vsel %vm346, %v1603, %v1607
        %v1609 = vrot.slane %v1531, 7
        %v1610 = vsel %vm346, %v1605, %v1609
        %v1611 = vrot.slane %v1532, 7
        %v1612 = vsel %vm346, %v1607, %v1611
        %v1613 = vrot.slane %v1533, 7
        %v1614 = vsel %vm346, %v1609, %v1613
        %v1615 = vrot.slane %v1534, 7
        %v1616 = vsel %vm346, %v1611, %v1615
        %v1617 = vrot.slane %v1535, 7
        %v1618 = vsel %vm346, %v1613, %v1617
        %v1619 = vrot.slane %v1536, 7
        %v1620 = vsel %vm346, %v1615, %v1619
        %v1621 = vrot.slane %v1537, 7
        %v1622 = vsel %vm346, %v1617, %v1621
        %v1623 = vrot.slane %v1538, 7
        %v1624 = vsel %vm346, %v1619, %v1623
        %v1625 = vrot.slane %v1539, 7
        %v1626 = vsel %vm346, %v1621, %v1625
        %v1627 = vrot.slane %v1540, 7
        %v1628 = vsel %vm346, %v1623, %v1627
        %v1629 = vrot.slane %v1541, 7
        %v1630 = vsel %vm346, %v1625, %v1629
        %v1631 = vrot.slane %v1542, 7
        %v1632 = vsel %vm346, %v1627, %v1631
        %v1633 = vrot.slane %v1543, 7
        %v1634 = vsel %vm346, %v1629, %v1633
        %v1635 = vrot.slane %v1544, 7
        %v1636 = vsel %vm346, %v1631, %v1635
        %v1637 = vrot.slane %v1545, 7
        %v1638 = vsel %vm346, %v1633, %v1637
        %v1639 = vrot.slane %v1546, 7
        %v1640 = vsel %vm346, %v1635, %v1639
        %v1673 = vsel %vm346, 0.0, %v1579
        %v1674 = vsel %vm346, 0.0, %v1580
        %v1675 = vrot.slane %v1515, 1
        %v1676 = vrot.slane %v1517, 1
        %v1677 = vsel %vm443, %v1675, %v1676
        %v1678 = vrot.slane %v1516, 1
        %v1679 = vrot.slane %v1518, 1
        %v1680 = vsel %vm443, %v1678, %v1679
        %v1681 = vrot.slane %v1519, 1
        %v1682 = vsel %vm443, %v1676, %v1681
        %v1683 = vrot.slane %v1520, 1
        %v1684 = vsel %vm443, %v1679, %v1683
        %v1685 = vrot.slane %v1521, 1
        %v1686 = vsel %vm443, %v1681, %v1685
        %v1687 = vrot.slane %v1522, 1
        %v1688 = vsel %vm443, %v1683, %v1687
        %v1689 = vrot.slane %v1523, 1
        %v1690 = vsel %vm443, %v1685, %v1689
        %v1691 = vrot.slane %v1524, 1
        %v1692 = vsel %vm443, %v1687, %v1691
        %v1693 = vrot.slane %v1525, 1
        %v1694 = vsel %vm443, %v1689, %v1693
        %v1695 = vrot.slane %v1526, 1
        %v1696 = vsel %vm443, %v1691, %v1695
        %v1697 = vrot.slane %v1527, 1
        %v1698 = vsel %vm443, %v1693, %v1697
        %v1699 = vrot.slane %v1528, 1
        %v1700 = vsel %vm443, %v1695, %v1699
        %v1701 = vrot.slane %v1529, 1
        %v1702 = vsel %vm443, %v1697, %v1701
        %v1703 = vrot.slane %v1530, 1
        %v1704 = vsel %vm443, %v1699, %v1703
        %v1705 = vrot.slane %v1531, 1
        %v1706 = vsel %vm443, %v1701, %v1705
        %v1707 = vrot.slane %v1532, 1
        %v1708 = vsel %vm443, %v1703, %v1707
        %v1709 = vrot.slane %v1533, 1
        %v1710 = vsel %vm443, %v1705, %v1709
        %v1711 = vrot.slane %v1534, 1
        %v1712 = vsel %vm443, %v1707, %v1711
        %v1713 = vrot.slane %v1535, 1
        %v1714 = vsel %vm443, %v1709, %v1713
        %v1715 = vrot.slane %v1536, 1
        %v1716 = vsel %vm443, %v1711, %v1715
        %v1717 = vrot.slane %v1537, 1
        %v1718 = vsel %vm443, %v1713, %v1717
        %v1719 = vrot.slane %v1538, 1
        %v1720 = vsel %vm443, %v1715, %v1719
        %v1721 = vrot.slane %v1539, 1
        %v1722 = vsel %vm443, %v1717, %v1721
        %v1723 = vrot.slane %v1540, 1
        %v1724 = vsel %vm443, %v1719, %v1723
        %v1725 = vrot.slane %v1541, 1
        %v1726 = vsel %vm443, %v1721, %v1725
        %v1727 = vrot.slane %v1542, 1
        %v1728 = vsel %vm443, %v1723, %v1727
        %v1729 = vrot.slane %v1543, 1
        %v1730 = vsel %vm443, %v1725, %v1729
        %v1731 = vrot.slane %v1544, 1
        %v1732 = vsel %vm443, %v1727, %v1731
        %v1733 = vrot.slane %v1545, 1
        %v1734 = vsel %vm443, %v1729, %v1733
        %v1735 = vrot.slane %v1546, 1
        %v1736 = vsel %vm443, %v1731, %v1735
        %v1769 = vsel %vm443, %v1733, 0.0
        %v1770 = vsel %vm443, %v1735, 0.0
        %v1771 = vpack.c.bf16 %v1582, %v1673
        %v1772 = vpack.c.bf16 %v1584, %v1674
        %v1773 = vpack.c.bf16 %v1517, %v1515
        %v1774 = vpack.c.bf16 %v1518, %v1516
        %v1775 = vpack.c.bf16 %v1682, %v1677
        %v1776 = vpack.c.bf16 %v1684, %v1680
        %v1777 = vpack.c.bf16 %v1590, %v1586
        %v1778 = vpack.c.bf16 %v1592, %v1588
        %v1779 = vpack.c.bf16 %v1521, %v1519
        %v1780 = vpack.c.bf16 %v1522, %v1520
        %v1781 = vpack.c.bf16 %v1690, %v1686
        %v1782 = vpack.c.bf16 %v1692, %v1688
        %v1783 = vpack.c.bf16 %v1598, %v1594
        %v1784 = vpack.c.bf16 %v1600, %v1596
        %v1785 = vpack.c.bf16 %v1525, %v1523
        %v1786 = vpack.c.bf16 %v1526, %v1524
        %v1787 = vpack.c.bf16 %v1698, %v1694
        %v1788 = vpack.c.bf16 %v1700, %v1696
        %v1789 = vpack.c.bf16 %v1606, %v1602
        %v1790 = vpack.c.bf16 %v1608, %v1604
        %v1791 = vpack.c.bf16 %v1529, %v1527
        %v1792 = vpack.c.bf16 %v1530, %v1528
        %v1793 = vpack.c.bf16 %v1706, %v1702
        %v1794 = vpack.c.bf16 %v1708, %v1704
        %v1795 = vpack.c.bf16 %v1614, %v1610
        %v1796 = vpack.c.bf16 %v1616, %v1612
        %v1797 = vpack.c.bf16 %v1533, %v1531
        %v1798 = vpack.c.bf16 %v1534, %v1532
        %v1799 = vpack.c.bf16 %v1714, %v1710
        %v1800 = vpack.c.bf16 %v1716, %v1712
        %v1801 = vpack.c.bf16 %v1622, %v1618
        %v1802 = vpack.c.bf16 %v1624, %v1620
        %v1803 = vpack.c.bf16 %v1537, %v1535
        %v1804 = vpack.c.bf16 %v1538, %v1536
        %v1805 = vpack.c.bf16 %v1722, %v1718
        %v1806 = vpack.c.bf16 %v1724, %v1720
        %v1807 = vpack.c.bf16 %v1630, %v1626
        %v1808 = vpack.c.bf16 %v1632, %v1628
        %v1809 = vpack.c.bf16 %v1541, %v1539
        %v1810 = vpack.c.bf16 %v1542, %v1540
        %v1811 = vpack.c.bf16 %v1730, %v1726
        %v1812 = vpack.c.bf16 %v1732, %v1728
        %v1813 = vpack.c.bf16 %v1638, %v1634
        %v1814 = vpack.c.bf16 %v1640, %v1636
        %v1815 = vpack.c.bf16 %v1545, %v1543
        %v1816 = vpack.c.bf16 %v1546, %v1544
        %v1817 = vpack.c.bf16 %v1769, %v1734
        %v1818 = vpack.c.bf16 %v1770, %v1736
        %s1819 = scalar_lea.vmem [#allocation5], 768
        %v1820 = vld [vmem:[%s1819] sm:$0xff]
        %v1821 = vld [vmem:[%s1819 + $0x8] sm:$0xff]
        %v1822 = vld [vmem:[%s1819 + $0x10] sm:$0xff]
        %v1823 = vld [vmem:[%s1819 + $0x18] sm:$0xff]
        %v1824 = vld [vmem:[%s1819 + $0x20] sm:$0xff]
        %v1825 = vld [vmem:[%s1819 + $0x28] sm:$0xff]
        %v1826 = vld [vmem:[%s1819 + $0x30] sm:$0xff]
        %v1827 = vld [vmem:[%s1819 + $0x38] sm:$0xff]
        %v1828 = vld [vmem:[%s1819 + $0x40] sm:$0xff]
        %v1829 = vld [vmem:[%s1819 + $0x48] sm:$0xff]
        %v1830 = vld [vmem:[%s1819 + $0x50] sm:$0xff]
        %v1831 = vld [vmem:[%s1819 + $0x58] sm:$0xff]
        %v1832 = vld [vmem:[%s1819 + $0x60] sm:$0xff]
        %v1833 = vld [vmem:[%s1819 + $0x68] sm:$0xff]
        %v1834 = vld [vmem:[%s1819 + $0x70] sm:$0xff]
        %v1835 = vld [vmem:[%s1819 + $0x78] sm:$0xff]
        %v1836 = vld [vmem:[%s1819 + $0x80] sm:$0xff]
        %v1837 = vld [vmem:[%s1819 + $0x88] sm:$0xff]
        %v1838 = vld [vmem:[%s1819 + $0x90] sm:$0xff]
        %v1839 = vld [vmem:[%s1819 + $0x98] sm:$0xff]
        %v1840 = vld [vmem:[%s1819 + $0xa0] sm:$0xff]
        %v1841 = vld [vmem:[%s1819 + $0xa8] sm:$0xff]
        %v1842 = vld [vmem:[%s1819 + $0xb0] sm:$0xff]
        %v1843 = vld [vmem:[%s1819 + $0xb8] sm:$0xff]
        %v1844 = vld [vmem:[%s1819 + $0xc0] sm:$0xff]
        %v1845 = vld [vmem:[%s1819 + $0xc8] sm:$0xff]
        %v1846 = vld [vmem:[%s1819 + $0xd0] sm:$0xff]
        %v1847 = vld [vmem:[%s1819 + $0xd8] sm:$0xff]
        %v1848 = vld [vmem:[%s1819 + $0xe0] sm:$0xff]
        %v1849 = vld [vmem:[%s1819 + $0xe8] sm:$0xff]
        %v1850 = vld [vmem:[%s1819 + $0xf0] sm:$0xff]
        %v1851 = vld [vmem:[%s1819 + $0xf8] sm:$0xff]
        %v1852 = vld [vmem:[%s1819 + $0x100] sm:$0xff]
        %v1853 = vld [vmem:[%s1819 + $0x108] sm:$0xff]
        %v1854 = vld [vmem:[%s1819 + $0x110] sm:$0xff]
        %v1855 = vld [vmem:[%s1819 + $0x118] sm:$0xff]
        %v1856 = vld [vmem:[%s1819 + $0x120] sm:$0xff]
        %v1857 = vld [vmem:[%s1819 + $0x128] sm:$0xff]
        %v1858 = vld [vmem:[%s1819 + $0x130] sm:$0xff]
        %v1859 = vld [vmem:[%s1819 + $0x138] sm:$0xff]
        %v1860 = vld [vmem:[%s1819 + $0x140] sm:$0xff]
        %v1861 = vld [vmem:[%s1819 + $0x148] sm:$0xff]
        %v1862 = vld [vmem:[%s1819 + $0x150] sm:$0xff]
        %v1863 = vld [vmem:[%s1819 + $0x158] sm:$0xff]
        %v1864 = vld [vmem:[%s1819 + $0x160] sm:$0xff]
        %v1865 = vld [vmem:[%s1819 + $0x168] sm:$0xff]
        %v1866 = vld [vmem:[%s1819 + $0x170] sm:$0xff]
        %v1867 = vld [vmem:[%s1819 + $0x178] sm:$0xff]
        %v1868 = vld [vmem:[%s1819 + $0x180] sm:$0xff]
        %v1869 = vld [vmem:[%s1819 + $0x188] sm:$0xff]
        %v1870 = vld [vmem:[%s1819 + $0x190] sm:$0xff]
        %v1871 = vld [vmem:[%s1819 + $0x198] sm:$0xff]
        %v1872 = vld [vmem:[%s1819 + $0x1a0] sm:$0xff]
        %v1873 = vld [vmem:[%s1819 + $0x1a8] sm:$0xff]
        %v1874 = vld [vmem:[%s1819 + $0x1b0] sm:$0xff]
        %v1875 = vld [vmem:[%s1819 + $0x1b8] sm:$0xff]
        %v1876 = vld [vmem:[%s1819 + $0x1c0] sm:$0xff]
        %v1877 = vld [vmem:[%s1819 + $0x1c8] sm:$0xff]
        %v1878 = vld [vmem:[%s1819 + $0x1d0] sm:$0xff]
        %v1879 = vld [vmem:[%s1819 + $0x1d8] sm:$0xff]
        %v1880 = vld [vmem:[%s1819 + $0x1e0] sm:$0xff]
        %v1881 = vld [vmem:[%s1819 + $0x1e8] sm:$0xff]
        %v1882 = vld [vmem:[%s1819 + $0x1f0] sm:$0xff]
        %v1883 = vld [vmem:[%s1819 + $0x1f8] sm:$0xff]
        %v1884 = vld [vmem:[%s1819 + $0x200] sm:$0xff]
        %v1885 = vld [vmem:[%s1819 + $0x208] sm:$0xff]
        %v1886 = vld [vmem:[%s1819 + $0x210] sm:$0xff]
        %v1887 = vld [vmem:[%s1819 + $0x218] sm:$0xff]
        %v1888 = vld [vmem:[%s1819 + $0x220] sm:$0xff]
        %v1889 = vld [vmem:[%s1819 + $0x228] sm:$0xff]
        %v1890 = vld [vmem:[%s1819 + $0x230] sm:$0xff]
        %v1891 = vld [vmem:[%s1819 + $0x238] sm:$0xff]
        %v1892 = vld [vmem:[%s1819 + $0x240] sm:$0xff]
        %v1893 = vld [vmem:[%s1819 + $0x248] sm:$0xff]
        %v1894 = vld [vmem:[%s1819 + $0x250] sm:$0xff]
        %v1895 = vld [vmem:[%s1819 + $0x258] sm:$0xff]
        %v1896 = vld [vmem:[%s1819 + $0x260] sm:$0xff]
        %v1897 = vld [vmem:[%s1819 + $0x268] sm:$0xff]
        %v1898 = vld [vmem:[%s1819 + $0x270] sm:$0xff]
        %v1899 = vld [vmem:[%s1819 + $0x278] sm:$0xff]
        %v1900 = vld [vmem:[%s1819 + $0x280] sm:$0xff]
        %v1901 = vld [vmem:[%s1819 + $0x288] sm:$0xff]
        %v1902 = vld [vmem:[%s1819 + $0x290] sm:$0xff]
        %v1903 = vld [vmem:[%s1819 + $0x298] sm:$0xff]
        %v1904 = vld [vmem:[%s1819 + $0x2a0] sm:$0xff]
        %v1905 = vld [vmem:[%s1819 + $0x2a8] sm:$0xff]
        %v1906 = vld [vmem:[%s1819 + $0x2b0] sm:$0xff]
        %v1907 = vld [vmem:[%s1819 + $0x2b8] sm:$0xff]
        %v1908 = vld [vmem:[%s1819 + $0x2c0] sm:$0xff]
        %v1909 = vld [vmem:[%s1819 + $0x2c8] sm:$0xff]
        %v1910 = vld [vmem:[%s1819 + $0x2d0] sm:$0xff]
        %v1911 = vld [vmem:[%s1819 + $0x2d8] sm:$0xff]
        %v1912 = vld [vmem:[%s1819 + $0x2e0] sm:$0xff]
        %v1913 = vld [vmem:[%s1819 + $0x2e8] sm:$0xff]
        %v1914 = vld [vmem:[%s1819 + $0x2f0] sm:$0xff]
        %v1915 = vld [vmem:[%s1819 + $0x2f8] sm:$0xff]
        %s1916 = scalar_lea.vmem [#allocation7], 2
        %v1917 = vld [vmem:[%s1916] sm:$0x3]
        %v1919 = vlaneseq
        %v1920 = vshrl.u32 %v1919, 7
        %v1921 = vsub.s32 0, %v1920
        %v1922 = vrot.slane %v1917, %v1921
        %v1923 = vlaneseq
        %v1924 = vshrl.u32 %v1923, 7
        %v1925 = vsub.s32 1, %v1924
        %v1926 = vrot.slane %v1917, %v1925
        %v2025 = vunpack.c.l.b16 %v1820
        %v2026 = vunpack.c.h.b16 %v1820
        %v2027 = vunpack.c.l.b16 %v1821
        %v2028 = vunpack.c.h.b16 %v1821
        %v2029 = vunpack.c.l.b16 %v1822
        %v2030 = vunpack.c.h.b16 %v1822
        %v2031 = vunpack.c.l.b16 %v1823
        %v2032 = vunpack.c.h.b16 %v1823
        %v2033 = vunpack.c.l.b16 %v1824
        %v2034 = vunpack.c.h.b16 %v1824
        %v2035 = vunpack.c.l.b16 %v1825
        %v2036 = vunpack.c.h.b16 %v1825
        %v2037 = vunpack.c.l.b16 %v1826
        %v2038 = vunpack.c.h.b16 %v1826
        %v2039 = vunpack.c.l.b16 %v1827
        %v2040 = vunpack.c.h.b16 %v1827
        %v2041 = vunpack.c.l.b16 %v1828
        %v2042 = vunpack.c.h.b16 %v1828
        %v2043 = vunpack.c.l.b16 %v1829
        %v2044 = vunpack.c.h.b16 %v1829
        %v2045 = vunpack.c.l.b16 %v1830
        %v2046 = vunpack.c.h.b16 %v1830
        %v2047 = vunpack.c.l.b16 %v1831
        %v2048 = vunpack.c.h.b16 %v1831
        %v2049 = vunpack.c.l.b16 %v1832
        %v2050 = vunpack.c.h.b16 %v1832
        %v2051 = vunpack.c.l.b16 %v1833
        %v2052 = vunpack.c.h.b16 %v1833
        %v2053 = vunpack.c.l.b16 %v1834
        %v2054 = vunpack.c.h.b16 %v1834
        %v2055 = vunpack.c.l.b16 %v1835
        %v2056 = vunpack.c.h.b16 %v1835
        %v2057 = vunpack.c.l.b16 %v1836
        %v2058 = vunpack.c.h.b16 %v1836
        %v2059 = vunpack.c.l.b16 %v1837
        %v2060 = vunpack.c.h.b16 %v1837
        %v2061 = vunpack.c.l.b16 %v1838
        %v2062 = vunpack.c.h.b16 %v1838
        %v2063 = vunpack.c.l.b16 %v1839
        %v2064 = vunpack.c.h.b16 %v1839
        %v2065 = vunpack.c.l.b16 %v1840
        %v2066 = vunpack.c.h.b16 %v1840
        %v2067 = vunpack.c.l.b16 %v1841
        %v2068 = vunpack.c.h.b16 %v1841
        %v2069 = vunpack.c.l.b16 %v1842
        %v2070 = vunpack.c.h.b16 %v1842
        %v2071 = vunpack.c.l.b16 %v1843
        %v2072 = vunpack.c.h.b16 %v1843
        %v2073 = vunpack.c.l.b16 %v1844
        %v2074 = vunpack.c.h.b16 %v1844
        %v2075 = vunpack.c.l.b16 %v1845
        %v2076 = vunpack.c.h.b16 %v1845
        %v2077 = vunpack.c.l.b16 %v1846
        %v2078 = vunpack.c.h.b16 %v1846
        %v2079 = vunpack.c.l.b16 %v1847
        %v2080 = vunpack.c.h.b16 %v1847
        %v2081 = vunpack.c.l.b16 %v1848
        %v2082 = vunpack.c.h.b16 %v1848
        %v2083 = vunpack.c.l.b16 %v1849
        %v2084 = vunpack.c.h.b16 %v1849
        %v2085 = vunpack.c.l.b16 %v1850
        %v2086 = vunpack.c.h.b16 %v1850
        %v2087 = vunpack.c.l.b16 %v1851
        %v2088 = vunpack.c.h.b16 %v1851
        %v2089 = vunpack.c.l.b16 %v1852
        %v2090 = vunpack.c.h.b16 %v1852
        %v2091 = vunpack.c.l.b16 %v1853
        %v2092 = vunpack.c.h.b16 %v1853
        %v2093 = vunpack.c.l.b16 %v1854
        %v2094 = vunpack.c.h.b16 %v1854
        %v2095 = vunpack.c.l.b16 %v1855
        %v2096 = vunpack.c.h.b16 %v1855
        %v2097 = vunpack.c.l.b16 %v1856
        %v2098 = vunpack.c.h.b16 %v1856
        %v2099 = vunpack.c.l.b16 %v1857
        %v2100 = vunpack.c.h.b16 %v1857
        %v2101 = vunpack.c.l.b16 %v1858
        %v2102 = vunpack.c.h.b16 %v1858
        %v2103 = vunpack.c.l.b16 %v1859
        %v2104 = vunpack.c.h.b16 %v1859
        %v2105 = vunpack.c.l.b16 %v1860
        %v2106 = vunpack.c.h.b16 %v1860
        %v2107 = vunpack.c.l.b16 %v1861
        %v2108 = vunpack.c.h.b16 %v1861
        %v2109 = vunpack.c.l.b16 %v1862
        %v2110 = vunpack.c.h.b16 %v1862
        %v2111 = vunpack.c.l.b16 %v1863
        %v2112 = vunpack.c.h.b16 %v1863
        %v2113 = vunpack.c.l.b16 %v1864
        %v2114 = vunpack.c.h.b16 %v1864
        %v2115 = vunpack.c.l.b16 %v1865
        %v2116 = vunpack.c.h.b16 %v1865
        %v2117 = vunpack.c.l.b16 %v1866
        %v2118 = vunpack.c.h.b16 %v1866
        %v2119 = vunpack.c.l.b16 %v1867
        %v2120 = vunpack.c.h.b16 %v1867
        %v2121 = vunpack.c.l.b16 %v1868
        %v2122 = vunpack.c.h.b16 %v1868
        %v2123 = vunpack.c.l.b16 %v1869
        %v2124 = vunpack.c.h.b16 %v1869
        %v2125 = vunpack.c.l.b16 %v1870
        %v2126 = vunpack.c.h.b16 %v1870
        %v2127 = vunpack.c.l.b16 %v1871
        %v2128 = vunpack.c.h.b16 %v1871
        %v2129 = vunpack.c.l.b16 %v1872
        %v2130 = vunpack.c.h.b16 %v1872
        %v2131 = vunpack.c.l.b16 %v1873
        %v2132 = vunpack.c.h.b16 %v1873
        %v2133 = vunpack.c.l.b16 %v1874
        %v2134 = vunpack.c.h.b16 %v1874
        %v2135 = vunpack.c.l.b16 %v1875
        %v2136 = vunpack.c.h.b16 %v1875
        %v2137 = vunpack.c.l.b16 %v1876
        %v2138 = vunpack.c.h.b16 %v1876
        %v2139 = vunpack.c.l.b16 %v1877
        %v2140 = vunpack.c.h.b16 %v1877
        %v2141 = vunpack.c.l.b16 %v1878
        %v2142 = vunpack.c.h.b16 %v1878
        %v2143 = vunpack.c.l.b16 %v1879
        %v2144 = vunpack.c.h.b16 %v1879
        %v2145 = vunpack.c.l.b16 %v1880
        %v2146 = vunpack.c.h.b16 %v1880
        %v2147 = vunpack.c.l.b16 %v1881
        %v2148 = vunpack.c.h.b16 %v1881
        %v2149 = vunpack.c.l.b16 %v1882
        %v2150 = vunpack.c.h.b16 %v1882
        %v2151 = vunpack.c.l.b16 %v1883
        %v2152 = vunpack.c.h.b16 %v1883
        %v2153 = vunpack.c.l.b16 %v1884
        %v2154 = vunpack.c.h.b16 %v1884
        %v2155 = vunpack.c.l.b16 %v1885
        %v2156 = vunpack.c.h.b16 %v1885
        %v2157 = vunpack.c.l.b16 %v1886
        %v2158 = vunpack.c.h.b16 %v1886
        %v2159 = vunpack.c.l.b16 %v1887
        %v2160 = vunpack.c.h.b16 %v1887
        %v2161 = vunpack.c.l.b16 %v1888
        %v2162 = vunpack.c.h.b16 %v1888
        %v2163 = vunpack.c.l.b16 %v1889
        %v2164 = vunpack.c.h.b16 %v1889
        %v2165 = vunpack.c.l.b16 %v1890
        %v2166 = vunpack.c.h.b16 %v1890
        %v2167 = vunpack.c.l.b16 %v1891
        %v2168 = vunpack.c.h.b16 %v1891
        %v2169 = vunpack.c.l.b16 %v1892
        %v2170 = vunpack.c.h.b16 %v1892
        %v2171 = vunpack.c.l.b16 %v1893
        %v2172 = vunpack.c.h.b16 %v1893
        %v2173 = vunpack.c.l.b16 %v1894
        %v2174 = vunpack.c.h.b16 %v1894
        %v2175 = vunpack.c.l.b16 %v1895
        %v2176 = vunpack.c.h.b16 %v1895
        %v2177 = vunpack.c.l.b16 %v1896
        %v2178 = vunpack.c.h.b16 %v1896
        %v2179 = vunpack.c.l.b16 %v1897
        %v2180 = vunpack.c.h.b16 %v1897
        %v2181 = vunpack.c.l.b16 %v1898
        %v2182 = vunpack.c.h.b16 %v1898
        %v2183 = vunpack.c.l.b16 %v1899
        %v2184 = vunpack.c.h.b16 %v1899
        %v2185 = vunpack.c.l.b16 %v1900
        %v2186 = vunpack.c.h.b16 %v1900
        %v2187 = vunpack.c.l.b16 %v1901
        %v2188 = vunpack.c.h.b16 %v1901
        %v2189 = vunpack.c.l.b16 %v1902
        %v2190 = vunpack.c.h.b16 %v1902
        %v2191 = vunpack.c.l.b16 %v1903
        %v2192 = vunpack.c.h.b16 %v1903
        %v2193 = vunpack.c.l.b16 %v1904
        %v2194 = vunpack.c.h.b16 %v1904
        %v2195 = vunpack.c.l.b16 %v1905
        %v2196 = vunpack.c.h.b16 %v1905
        %v2197 = vunpack.c.l.b16 %v1906
        %v2198 = vunpack.c.h.b16 %v1906
        %v2199 = vunpack.c.l.b16 %v1907
        %v2200 = vunpack.c.h.b16 %v1907
        %v2201 = vunpack.c.l.b16 %v1908
        %v2202 = vunpack.c.h.b16 %v1908
        %v2203 = vunpack.c.l.b16 %v1909
        %v2204 = vunpack.c.h.b16 %v1909
        %v2205 = vunpack.c.l.b16 %v1910
        %v2206 = vunpack.c.h.b16 %v1910
        %v2207 = vunpack.c.l.b16 %v1911
        %v2208 = vunpack.c.h.b16 %v1911
        %v2209 = vunpack.c.l.b16 %v1912
        %v2210 = vunpack.c.h.b16 %v1912
        %v2211 = vunpack.c.l.b16 %v1913
        %v2212 = vunpack.c.h.b16 %v1913
        %v2213 = vunpack.c.l.b16 %v1914
        %v2214 = vunpack.c.h.b16 %v1914
        %v2215 = vunpack.c.l.b16 %v1915
        %v2216 = vunpack.c.h.b16 %v1915
        %v2217 = vpack.c.b16 %v2027, %v2025
        %v2218 = vpack.c.b16 %v2028, %v2026
        %v2219 = vpack.c.b16 %v2031, %v2029
        %v2220 = vpack.c.b16 %v2032, %v2030
        %v2221 = vpack.c.b16 %v2035, %v2033
        %v2222 = vpack.c.b16 %v2036, %v2034
        %v2223 = vpack.c.b16 %v2039, %v2037
        %v2224 = vpack.c.b16 %v2040, %v2038
        %v2225 = vpack.c.b16 %v2043, %v2041
        %v2226 = vpack.c.b16 %v2044, %v2042
        %v2227 = vpack.c.b16 %v2047, %v2045
        %v2228 = vpack.c.b16 %v2048, %v2046
        %v2229 = vpack.c.b16 %v2051, %v2049
        %v2230 = vpack.c.b16 %v2052, %v2050
        %v2231 = vpack.c.b16 %v2055, %v2053
        %v2232 = vpack.c.b16 %v2056, %v2054
        %v2233 = vpack.c.b16 %v2059, %v2057
        %v2234 = vpack.c.b16 %v2060, %v2058
        %v2235 = vpack.c.b16 %v2063, %v2061
        %v2236 = vpack.c.b16 %v2064, %v2062
        %v2237 = vpack.c.b16 %v2067, %v2065
        %v2238 = vpack.c.b16 %v2068, %v2066
        %v2239 = vpack.c.b16 %v2071, %v2069
        %v2240 = vpack.c.b16 %v2072, %v2070
        %v2241 = vpack.c.b16 %v2075, %v2073
        %v2242 = vpack.c.b16 %v2076, %v2074
        %v2243 = vpack.c.b16 %v2079, %v2077
        %v2244 = vpack.c.b16 %v2080, %v2078
        %v2245 = vpack.c.b16 %v2083, %v2081
        %v2246 = vpack.c.b16 %v2084, %v2082
        %v2247 = vpack.c.b16 %v2087, %v2085
        %v2248 = vpack.c.b16 %v2088, %v2086
        %v2249 = vpack.c.b16 %v2091, %v2089
        %v2250 = vpack.c.b16 %v2092, %v2090
        %v2251 = vpack.c.b16 %v2095, %v2093
        %v2252 = vpack.c.b16 %v2096, %v2094
        %v2253 = vpack.c.b16 %v2099, %v2097
        %v2254 = vpack.c.b16 %v2100, %v2098
        %v2255 = vpack.c.b16 %v2103, %v2101
        %v2256 = vpack.c.b16 %v2104, %v2102
        %v2257 = vpack.c.b16 %v2107, %v2105
        %v2258 = vpack.c.b16 %v2108, %v2106
        %v2259 = vpack.c.b16 %v2111, %v2109
        %v2260 = vpack.c.b16 %v2112, %v2110
        %v2261 = vpack.c.b16 %v2115, %v2113
        %v2262 = vpack.c.b16 %v2116, %v2114
        %v2263 = vpack.c.b16 %v2119, %v2117
        %v2264 = vpack.c.b16 %v2120, %v2118
        %v2265 = vpack.c.b16 %v2123, %v2121
        %v2266 = vpack.c.b16 %v2124, %v2122
        %v2267 = vpack.c.b16 %v2127, %v2125
        %v2268 = vpack.c.b16 %v2128, %v2126
        %v2269 = vpack.c.b16 %v2131, %v2129
        %v2270 = vpack.c.b16 %v2132, %v2130
        %v2271 = vpack.c.b16 %v2135, %v2133
        %v2272 = vpack.c.b16 %v2136, %v2134
        %v2273 = vpack.c.b16 %v2139, %v2137
        %v2274 = vpack.c.b16 %v2140, %v2138
        %v2275 = vpack.c.b16 %v2143, %v2141
        %v2276 = vpack.c.b16 %v2144, %v2142
        %v2277 = vpack.c.b16 %v2147, %v2145
        %v2278 = vpack.c.b16 %v2148, %v2146
        %v2279 = vpack.c.b16 %v2151, %v2149
        %v2280 = vpack.c.b16 %v2152, %v2150
        %v2281 = vpack.c.b16 %v2155, %v2153
        %v2282 = vpack.c.b16 %v2156, %v2154
        %v2283 = vpack.c.b16 %v2159, %v2157
        %v2284 = vpack.c.b16 %v2160, %v2158
        %v2285 = vpack.c.b16 %v2163, %v2161
        %v2286 = vpack.c.b16 %v2164, %v2162
        %v2287 = vpack.c.b16 %v2167, %v2165
        %v2288 = vpack.c.b16 %v2168, %v2166
        %v2289 = vpack.c.b16 %v2171, %v2169
        %v2290 = vpack.c.b16 %v2172, %v2170
        %v2291 = vpack.c.b16 %v2175, %v2173
        %v2292 = vpack.c.b16 %v2176, %v2174
        %v2293 = vpack.c.b16 %v2179, %v2177
        %v2294 = vpack.c.b16 %v2180, %v2178
        %v2295 = vpack.c.b16 %v2183, %v2181
        %v2296 = vpack.c.b16 %v2184, %v2182
        %v2297 = vpack.c.b16 %v2187, %v2185
        %v2298 = vpack.c.b16 %v2188, %v2186
        %v2299 = vpack.c.b16 %v2191, %v2189
        %v2300 = vpack.c.b16 %v2192, %v2190
        %v2301 = vpack.c.b16 %v2195, %v2193
        %v2302 = vpack.c.b16 %v2196, %v2194
        %v2303 = vpack.c.b16 %v2199, %v2197
        %v2304 = vpack.c.b16 %v2200, %v2198
        %v2305 = vpack.c.b16 %v2203, %v2201
        %v2306 = vpack.c.b16 %v2204, %v2202
        %v2307 = vpack.c.b16 %v2207, %v2205
        %v2308 = vpack.c.b16 %v2208, %v2206
        %v2309 = vpack.c.b16 %v2211, %v2209
        %v2310 = vpack.c.b16 %v2212, %v2210
        %v2311 = vpack.c.b16 %v2215, %v2213
        %v2312 = vpack.c.b16 %v2216, %v2214
        %2409 = vmatprep.subr.bf16.mxu0 %v2218
        %2410 = vmatpush1.bf16.msra.mxu0 %v2217
        %2411 = vmatprep.subr.bf16.mxu0 %v2220
        %2412 = vmatpush1.bf16.msra.mxu0 %v2219
        %2413 = vmatprep.subr.bf16.mxu0 %v2222
        %2414 = vmatpush1.bf16.msra.mxu0 %v2221
        %2415 = vmatprep.subr.bf16.mxu0 %v2224
        %2416 = vmatpush1.bf16.msra.mxu0 %v2223
        %2417 = vmatprep.subr.bf16.mxu0 %v2226
        %2418 = vmatpush1.bf16.msra.mxu0 %v2225
        %2419 = vmatprep.subr.bf16.mxu0 %v2228
        %2420 = vmatpush1.bf16.msra.mxu0 %v2227
        %2421 = vmatprep.subr.bf16.mxu0 %v2230
        %2422 = vmatpush1.bf16.msra.mxu0 %v2229
        %2423 = vmatprep.subr.bf16.mxu0 %v2232
        %2424 = vmatpush1.bf16.msra.mxu0 %v2231
        %2425 = vmatprep.subr.bf16.mxu0 %v2234
        %2426 = vmatpush1.bf16.msra.mxu0 %v2233
        %2427 = vmatprep.subr.bf16.mxu0 %v2236
        %2428 = vmatpush1.bf16.msra.mxu0 %v2235
        %2429 = vmatprep.subr.bf16.mxu0 %v2238
        %2430 = vmatpush1.bf16.msra.mxu0 %v2237
        %2431 = vmatprep.subr.bf16.mxu0 %v2240
        %2432 = vmatpush1.bf16.msra.mxu0 %v2239
        %2433 = vmatprep.subr.bf16.mxu0 %v2242
        %2434 = vmatpush1.bf16.msra.mxu0 %v2241
        %2435 = vmatprep.subr.bf16.mxu0 %v2244
        %2436 = vmatpush1.bf16.msra.mxu0 %v2243
        %2437 = vmatprep.subr.bf16.mxu0 %v2246
        %2438 = vmatpush1.bf16.msra.mxu0 %v2245
        %2439 = vmatprep.subr.bf16.mxu0 %v2248
        %2440 = vmatpush1.bf16.msra.mxu0 %v2247
        %2441 = vmatprep.mubr.bf16.mxu0 %v1772
        %2442 = vmatmul.mubr.bf16.gmra.mrb[0].mxu0 %v1771
        %v2443 = vpop.f32.mrb[0].mxu0
        %v2444 = vadd.f32 %v1922, %v2443
        %v2445 = vpop.f32.mrb[0].mxu0
        %v2446 = vadd.f32 %v1926, %v2445
        %v2447 = vpop.f32.mrb[0].mxu0
        %v2448 = vadd.f32 %v1922, %v2447
        %v2449 = vpop.f32.mrb[0].mxu0
        %v2450 = vadd.f32 %v1926, %v2449
        %2451 = vmatprep.mubr.bf16.mxu0 %v1778
        %2452 = vmatmul.mubr.bf16.gmra.mrb[0].mxu0 %v1777
        %v2453 = vpop.f32.mrb[0].mxu0
        %v2454 = vadd.f32 %v1922, %v2453
        %v2455 = vpop.f32.mrb[0].mxu0
        %v2456 = vadd.f32 %v1926, %v2455
        %v2457 = vpop.f32.mrb[0].mxu0
        %v2458 = vadd.f32 %v1922, %v2457
        %v2459 = vpop.f32.mrb[0].mxu0
        %v2460 = vadd.f32 %v1926, %v2459
        %2461 = vmatprep.mubr.bf16.mxu0 %v1784
        %2462 = vmatmul.mubr.bf16.gmra.mrb[0].mxu0 %v1783
        %v2463 = vpop.f32.mrb[0].mxu0
        %v2464 = vadd.f32 %v1922, %v2463
        %v2465 = vpop.f32.mrb[0].mxu0
        %v2466 = vadd.f32 %v1926, %v2465
        %v2467 = vpop.f32.mrb[0].mxu0
        %v2468 = vadd.f32 %v1922, %v2467
        %v2469 = vpop.f32.mrb[0].mxu0
        %v2470 = vadd.f32 %v1926, %v2469
        %2471 = vmatprep.mubr.bf16.mxu0 %v1790
        %2472 = vmatmul.mubr.bf16.gmra.mrb[0].mxu0 %v1789
        %v2473 = vpop.f32.mrb[0].mxu0
        %v2474 = vadd.f32 %v1922, %v2473
        %v2475 = vpop.f32.mrb[0].mxu0
        %v2476 = vadd.f32 %v1926, %v2475
        %v2477 = vpop.f32.mrb[0].mxu0
        %v2478 = vadd.f32 %v1922, %v2477
        %v2479 = vpop.f32.mrb[0].mxu0
        %v2480 = vadd.f32 %v1926, %v2479
        %2481 = vmatprep.mubr.bf16.mxu0 %v1796
        %2482 = vmatmul.mubr.bf16.gmra.mrb[0].mxu0 %v1795
        %v2483 = vpop.f32.mrb[0].mxu0
        %v2484 = vadd.f32 %v1922, %v2483
        %v2485 = vpop.f32.mrb[0].mxu0
        %v2486 = vadd.f32 %v1926, %v2485
        %v2487 = vpop.f32.mrb[0].mxu0
        %v2488 = vadd.f32 %v1922, %v2487
        %v2489 = vpop.f32.mrb[0].mxu0
        %v2490 = vadd.f32 %v1926, %v2489
        %2491 = vmatprep.mubr.bf16.mxu0 %v1802
        %2492 = vmatmul.mubr.bf16.gmra.mrb[0].mxu0 %v1801
        %v2493 = vpop.f32.mrb[0].mxu0
        %v2494 = vadd.f32 %v1922, %v2493
        %v2495 = vpop.f32.mrb[0].mxu0
        %v2496 = vadd.f32 %v1926, %v2495
        %v2497 = vpop.f32.mrb[0].mxu0
        %v2498 = vadd.f32 %v1922, %v2497
        %v2499 = vpop.f32.mrb[0].mxu0
        %v2500 = vadd.f32 %v1926, %v2499
        %2501 = vmatprep.mubr.bf16.mxu0 %v1808
        %2502 = vmatmul.mubr.bf16.gmra.mrb[0].mxu0 %v1807
        %v2503 = vpop.f32.mrb[0].mxu0
        %v2504 = vadd.f32 %v1922, %v2503
        %v2505 = vpop.f32.mrb[0].mxu0
        %v2506 = vadd.f32 %v1926, %v2505
        %v2507 = vpop.f32.mrb[0].mxu0
        %v2508 = vadd.f32 %v1922, %v2507
        %v2509 = vpop.f32.mrb[0].mxu0
        %v2510 = vadd.f32 %v1926, %v2509
        %2511 = vmatprep.mubr.bf16.mxu0 %v1814
        %2512 = vmatmul.mubr.bf16.gmra.mrb[0].mxu0 %v1813
        %v2513 = vpop.f32.mrb[0].mxu0
        %v2514 = vadd.f32 %v1922, %v2513
        %v2515 = vpop.f32.mrb[0].mxu0
        %v2516 = vadd.f32 %v1926, %v2515
        %v2517 = vpop.f32.mrb[0].mxu0
        %v2518 = vadd.f32 %v1922, %v2517
        %v2519 = vpop.f32.mrb[0].mxu0
        %v2520 = vadd.f32 %v1926, %v2519
        %2521 = vdwg.mxu0
        %2522 = vmatprep.subr.bf16.mxu0 %v2250
        %2523 = vmatpush1.bf16.msra.mxu0 %v2249
        %2524 = vmatprep.subr.bf16.mxu0 %v2252
        %2525 = vmatpush1.bf16.msra.mxu0 %v2251
        %2526 = vmatprep.subr.bf16.mxu0 %v2254
        %2527 = vmatpush1.bf16.msra.mxu0 %v2253
        %2528 = vmatprep.subr.bf16.mxu0 %v2256
        %2529 = vmatpush1.bf16.msra.mxu0 %v2255
        %2530 = vmatprep.subr.bf16.mxu0 %v2258
        %2531 = vmatpush1.bf16.msra.mxu0 %v2257
        %2532 = vmatprep.subr.bf16.mxu0 %v2260
        %2533 = vmatpush1.bf16.msra.mxu0 %v2259
        %2534 = vmatprep.subr.bf16.mxu0 %v2262
        %2535 = vmatpush1.bf16.msra.mxu0 %v2261
        %2536 = vmatprep.subr.bf16.mxu0 %v2264
        %2537 = vmatpush1.bf16.msra.mxu0 %v2263
        %2538 = vmatprep.subr.bf16.mxu0 %v2266
        %2539 = vmatpush1.bf16.msra.mxu0 %v2265
        %2540 = vmatprep.subr.bf16.mxu0 %v2268
        %2541 = vmatpush1.bf16.msra.mxu0 %v2267
        %2542 = vmatprep.subr.bf16.mxu0 %v2270
        %2543 = vmatpush1.bf16.msra.mxu0 %v2269
        %2544 = vmatprep.subr.bf16.mxu0 %v2272
        %2545 = vmatpush1.bf16.msra.mxu0 %v2271
        %2546 = vmatprep.subr.bf16.mxu0 %v2274
        %2547 = vmatpush1.bf16.msra.mxu0 %v2273
        %2548 = vmatprep.subr.bf16.mxu0 %v2276
        %2549 = vmatpush1.bf16.msra.mxu0 %v2275
        %2550 = vmatprep.subr.bf16.mxu0 %v2278
        %2551 = vmatpush1.bf16.msra.mxu0 %v2277
        %2552 = vmatprep.subr.bf16.mxu0 %v2280
        %2553 = vmatpush1.bf16.msra.mxu0 %v2279
        %2554 = vmatprep.mubr.bf16.mxu0 %v1774
        %2555 = vmatmul.mubr.bf16.gmra.mrb[0].mxu0 %v1773
        %v2556 = vpop.f32.mrb[0].mxu0
        %v2557 = vadd.f32 %v2444, %v2556
        %v2558 = vpop.f32.mrb[0].mxu0
        %v2559 = vadd.f32 %v2446, %v2558
        %v2560 = vpop.f32.mrb[0].mxu0
        %v2561 = vadd.f32 %v2448, %v2560
        %v2562 = vpop.f32.mrb[0].mxu0
        %v2563 = vadd.f32 %v2450, %v2562
        %2564 = vmatprep.mubr.bf16.mxu0 %v1780
        %2565 = vmatmul.mubr.bf16.gmra.mrb[0].mxu0 %v1779
        %v2566 = vpop.f32.mrb[0].mxu0
        %v2567 = vadd.f32 %v2454, %v2566
        %v2568 = vpop.f32.mrb[0].mxu0
        %v2569 = vadd.f32 %v2456, %v2568
        %v2570 = vpop.f32.mrb[0].mxu0
        %v2571 = vadd.f32 %v2458, %v2570
        %v2572 = vpop.f32.mrb[0].mxu0
        %v2573 = vadd.f32 %v2460, %v2572
        %2574 = vmatprep.mubr.bf16.mxu0 %v1786
        %2575 = vmatmul.mubr.bf16.gmra.mrb[0].mxu0 %v1785
        %v2576 = vpop.f32.mrb[0].mxu0
        %v2577 = vadd.f32 %v2464, %v2576
        %v2578 = vpop.f32.mrb[0].mxu0
        %v2579 = vadd.f32 %v2466, %v2578
        %v2580 = vpop.f32.mrb[0].mxu0
        %v2581 = vadd.f32 %v2468, %v2580
        %v2582 = vpop.f32.mrb[0].mxu0
        %v2583 = vadd.f32 %v2470, %v2582
        %2584 = vmatprep.mubr.bf16.mxu0 %v1792
        %2585 = vmatmul.mubr.bf16.gmra.mrb[0].mxu0 %v1791
        %v2586 = vpop.f32.mrb[0].mxu0
        %v2587 = vadd.f32 %v2474, %v2586
        %v2588 = vpop.f32.mrb[0].mxu0
        %v2589 = vadd.f32 %v2476, %v2588
        %v2590 = vpop.f32.mrb[0].mxu0
        %v2591 = vadd.f32 %v2478, %v2590
        %v2592 = vpop.f32.mrb[0].mxu0
        %v2593 = vadd.f32 %v2480, %v2592
        %2594 = vmatprep.mubr.bf16.mxu0 %v1798
        %2595 = vmatmul.mubr.bf16.gmra.mrb[0].mxu0 %v1797
        %v2596 = vpop.f32.mrb[0].mxu0
        %v2597 = vadd.f32 %v2484, %v2596
        %v2598 = vpop.f32.mrb[0].mxu0
        %v2599 = vadd.f32 %v2486, %v2598
        %v2600 = vpop.f32.mrb[0].mxu0
        %v2601 = vadd.f32 %v2488, %v2600
        %v2602 = vpop.f32.mrb[0].mxu0
        %v2603 = vadd.f32 %v2490, %v2602
        %2604 = vmatprep.mubr.bf16.mxu0 %v1804
        %2605 = vmatmul.mubr.bf16.gmra.mrb[0].mxu0 %v1803
        %v2606 = vpop.f32.mrb[0].mxu0
        %v2607 = vadd.f32 %v2494, %v2606
        %v2608 = vpop.f32.mrb[0].mxu0
        %v2609 = vadd.f32 %v2496, %v2608
        %v2610 = vpop.f32.mrb[0].mxu0
        %v2611 = vadd.f32 %v2498, %v2610
        %v2612 = vpop.f32.mrb[0].mxu0
        %v2613 = vadd.f32 %v2500, %v2612
        %2614 = vmatprep.mubr.bf16.mxu0 %v1810
        %2615 = vmatmul.mubr.bf16.gmra.mrb[0].mxu0 %v1809
        %v2616 = vpop.f32.mrb[0].mxu0
        %v2617 = vadd.f32 %v2504, %v2616
        %v2618 = vpop.f32.mrb[0].mxu0
        %v2619 = vadd.f32 %v2506, %v2618
        %v2620 = vpop.f32.mrb[0].mxu0
        %v2621 = vadd.f32 %v2508, %v2620
        %v2622 = vpop.f32.mrb[0].mxu0
        %v2623 = vadd.f32 %v2510, %v2622
        %2624 = vmatprep.mubr.bf16.mxu0 %v1816
        %2625 = vmatmul.mubr.bf16.gmra.mrb[0].mxu0 %v1815
        %v2626 = vpop.f32.mrb[0].mxu0
        %v2627 = vadd.f32 %v2514, %v2626
        %v2628 = vpop.f32.mrb[0].mxu0
        %v2629 = vadd.f32 %v2516, %v2628
        %v2630 = vpop.f32.mrb[0].mxu0
        %v2631 = vadd.f32 %v2518, %v2630
        %v2632 = vpop.f32.mrb[0].mxu0
        %v2633 = vadd.f32 %v2520, %v2632
        %2634 = vdwg.mxu0
        %2635 = vmatprep.subr.bf16.mxu0 %v2282
        %2636 = vmatpush1.bf16.msra.mxu0 %v2281
        %2637 = vmatprep.subr.bf16.mxu0 %v2284
        %2638 = vmatpush1.bf16.msra.mxu0 %v2283
        %2639 = vmatprep.subr.bf16.mxu0 %v2286
        %2640 = vmatpush1.bf16.msra.mxu0 %v2285
        %2641 = vmatprep.subr.bf16.mxu0 %v2288
        %2642 = vmatpush1.bf16.msra.mxu0 %v2287
        %2643 = vmatprep.subr.bf16.mxu0 %v2290
        %2644 = vmatpush1.bf16.msra.mxu0 %v2289
        %2645 = vmatprep.subr.bf16.mxu0 %v2292
        %2646 = vmatpush1.bf16.msra.mxu0 %v2291
        %2647 = vmatprep.subr.bf16.mxu0 %v2294
        %2648 = vmatpush1.bf16.msra.mxu0 %v2293
        %2649 = vmatprep.subr.bf16.mxu0 %v2296
        %2650 = vmatpush1.bf16.msra.mxu0 %v2295
        %2651 = vmatprep.subr.bf16.mxu0 %v2298
        %2652 = vmatpush1.bf16.msra.mxu0 %v2297
        %2653 = vmatprep.subr.bf16.mxu0 %v2300
        %2654 = vmatpush1.bf16.msra.mxu0 %v2299
        %2655 = vmatprep.subr.bf16.mxu0 %v2302
        %2656 = vmatpush1.bf16.msra.mxu0 %v2301
        %2657 = vmatprep.subr.bf16.mxu0 %v2304
        %2658 = vmatpush1.bf16.msra.mxu0 %v2303
        %2659 = vmatprep.subr.bf16.mxu0 %v2306
        %2660 = vmatpush1.bf16.msra.mxu0 %v2305
        %2661 = vmatprep.subr.bf16.mxu0 %v2308
        %2662 = vmatpush1.bf16.msra.mxu0 %v2307
        %2663 = vmatprep.subr.bf16.mxu0 %v2310
        %2664 = vmatpush1.bf16.msra.mxu0 %v2309
        %2665 = vmatprep.subr.bf16.mxu0 %v2312
        %2666 = vmatpush1.bf16.msra.mxu0 %v2311
        %2667 = vmatprep.mubr.bf16.mxu0 %v1776
        %2668 = vmatmul.mubr.bf16.gmra.mrb[0].mxu0 %v1775
        %v2669 = vpop.f32.mrb[0].mxu0
        %v2670 = vadd.f32 %v2557, %v2669
        %v2671 = vpop.f32.mrb[0].mxu0
        %v2672 = vadd.f32 %v2559, %v2671
        %v2673 = vpop.f32.mrb[0].mxu0
        %v2674 = vadd.f32 %v2561, %v2673
        %v2675 = vpop.f32.mrb[0].mxu0
        %v2676 = vadd.f32 %v2563, %v2675
        %2677 = vmatprep.mubr.bf16.mxu0 %v1782
        %2678 = vmatmul.mubr.bf16.gmra.mrb[0].mxu0 %v1781
        %v2679 = vpop.f32.mrb[0].mxu0
        %v2680 = vadd.f32 %v2567, %v2679
        %v2681 = vpop.f32.mrb[0].mxu0
        %v2682 = vadd.f32 %v2569, %v2681
        %v2683 = vpop.f32.mrb[0].mxu0
        %v2684 = vadd.f32 %v2571, %v2683
        %v2685 = vpop.f32.mrb[0].mxu0
        %v2686 = vadd.f32 %v2573, %v2685
        %2687 = vmatprep.mubr.bf16.mxu0 %v1788
        %2688 = vmatmul.mubr.bf16.gmra.mrb[0].mxu0 %v1787
        %v2689 = vpop.f32.mrb[0].mxu0
        %v2690 = vadd.f32 %v2577, %v2689
        %v2691 = vpop.f32.mrb[0].mxu0
        %v2692 = vadd.f32 %v2579, %v2691
        %v2693 = vpop.f32.mrb[0].mxu0
        %v2694 = vadd.f32 %v2581, %v2693
        %v2695 = vpop.f32.mrb[0].mxu0
        %v2696 = vadd.f32 %v2583, %v2695
        %2697 = vmatprep.mubr.bf16.mxu0 %v1794
        %2698 = vmatmul.mubr.bf16.gmra.mrb[0].mxu0 %v1793
        %v2699 = vpop.f32.mrb[0].mxu0
        %v2700 = vadd.f32 %v2587, %v2699
        %v2701 = vpop.f32.mrb[0].mxu0
        %v2702 = vadd.f32 %v2589, %v2701
        %v2703 = vpop.f32.mrb[0].mxu0
        %v2704 = vadd.f32 %v2591, %v2703
        %v2705 = vpop.f32.mrb[0].mxu0
        %v2706 = vadd.f32 %v2593, %v2705
        %2707 = vmatprep.mubr.bf16.mxu0 %v1800
        %2708 = vmatmul.mubr.bf16.gmra.mrb[0].mxu0 %v1799
        %v2709 = vpop.f32.mrb[0].mxu0
        %v2710 = vadd.f32 %v2597, %v2709
        %v2711 = vpop.f32.mrb[0].mxu0
        %v2712 = vadd.f32 %v2599, %v2711
        %v2713 = vpop.f32.mrb[0].mxu0
        %v2714 = vadd.f32 %v2601, %v2713
        %v2715 = vpop.f32.mrb[0].mxu0
        %v2716 = vadd.f32 %v2603, %v2715
        %2717 = vmatprep.mubr.bf16.mxu0 %v1806
        %2718 = vmatmul.mubr.bf16.gmra.mrb[0].mxu0 %v1805
        %v2719 = vpop.f32.mrb[0].mxu0
        %v2720 = vadd.f32 %v2607, %v2719
        %v2721 = vpop.f32.mrb[0].mxu0
        %v2722 = vadd.f32 %v2609, %v2721
        %v2723 = vpop.f32.mrb[0].mxu0
        %v2724 = vadd.f32 %v2611, %v2723
        %v2725 = vpop.f32.mrb[0].mxu0
        %v2726 = vadd.f32 %v2613, %v2725
        %2727 = vmatprep.mubr.bf16.mxu0 %v1812
        %2728 = vmatmul.mubr.bf16.gmra.mrb[0].mxu0 %v1811
        %v2729 = vpop.f32.mrb[0].mxu0
        %v2730 = vadd.f32 %v2617, %v2729
        %v2731 = vpop.f32.mrb[0].mxu0
        %v2732 = vadd.f32 %v2619, %v2731
        %v2733 = vpop.f32.mrb[0].mxu0
        %v2734 = vadd.f32 %v2621, %v2733
        %v2735 = vpop.f32.mrb[0].mxu0
        %v2736 = vadd.f32 %v2623, %v2735
        %2737 = vmatprep.mubr.bf16.mxu0 %v1818
        %2738 = vmatmul.mubr.bf16.gmra.mrb[0].mxu0 %v1817
        %v2739 = vpop.f32.mrb[0].mxu0
        %v2740 = vadd.f32 %v2627, %v2739
        %v2741 = vpop.f32.mrb[0].mxu0
        %v2742 = vadd.f32 %v2629, %v2741
        %v2743 = vpop.f32.mrb[0].mxu0
        %v2744 = vadd.f32 %v2631, %v2743
        %v2745 = vpop.f32.mrb[0].mxu0
        %v2746 = vadd.f32 %v2633, %v2745
        %2747 = vdwg.mxu0
        %v2748 = vadd.f32 %v2670, %v266
        %v2749 = vadd.f32 %v2672, %v298
        %v2750 = vadd.f32 %v2674, %v267
        %v2751 = vadd.f32 %v2676, %v299
        %v2752 = vadd.f32 %v2680, %v268
        %v2753 = vadd.f32 %v2682, %v300
        %v2754 = vadd.f32 %v2684, %v269
        %v2755 = vadd.f32 %v2686, %v301
        %v2756 = vadd.f32 %v2690, %v270
        %v2757 = vadd.f32 %v2692, %v302
        %v2758 = vadd.f32 %v2694, %v271
        %v2759 = vadd.f32 %v2696, %v303
        %v2760 = vadd.f32 %v2700, %v272
        %v2761 = vadd.f32 %v2702, %v304
        %v2762 = vadd.f32 %v2704, %v273
        %v2763 = vadd.f32 %v2706, %v305
        %v2764 = vadd.f32 %v2710, %v274
        %v2765 = vadd.f32 %v2712, %v306
        %v2766 = vadd.f32 %v2714, %v275
        %v2767 = vadd.f32 %v2716, %v307
        %v2768 = vadd.f32 %v2720, %v276
        %v2769 = vadd.f32 %v2722, %v308
        %v2770 = vadd.f32 %v2724, %v277
        %v2771 = vadd.f32 %v2726, %v309
        %v2772 = vadd.f32 %v2730, %v278
        %v2773 = vadd.f32 %v2732, %v310
        %v2774 = vadd.f32 %v2734, %v279
        %v2775 = vadd.f32 %v2736, %v311
        %v2776 = vadd.f32 %v2740, %v280
        %v2777 = vadd.f32 %v2742, %v312
        %v2778 = vadd.f32 %v2744, %v281
        %v2779 = vadd.f32 %v2746, %v313
        %v2780 = vmax.f32 %v2748, 0.0
        %v2781 = vmax.f32 %v2749, 0.0
        %v2782 = vmax.f32 %v2750, 0.0
        %v2783 = vmax.f32 %v2751, 0.0
        %v2784 = vmax.f32 %v2752, 0.0
        %v2785 = vmax.f32 %v2753, 0.0
        %v2786 = vmax.f32 %v2754, 0.0
        %v2787 = vmax.f32 %v2755, 0.0
        %v2788 = vmax.f32 %v2756, 0.0
        %v2789 = vmax.f32 %v2757, 0.0
        %v2790 = vmax.f32 %v2758, 0.0
        %v2791 = vmax.f32 %v2759, 0.0
        %v2792 = vmax.f32 %v2760, 0.0
        %v2793 = vmax.f32 %v2761, 0.0
        %v2794 = vmax.f32 %v2762, 0.0
        %v2795 = vmax.f32 %v2763, 0.0
        %v2796 = vmax.f32 %v2764, 0.0
        %v2797 = vmax.f32 %v2765, 0.0
        %v2798 = vmax.f32 %v2766, 0.0
        %v2799 = vmax.f32 %v2767, 0.0
        %v2800 = vmax.f32 %v2768, 0.0
        %v2801 = vmax.f32 %v2769, 0.0
        %v2802 = vmax.f32 %v2770, 0.0
        %v2803 = vmax.f32 %v2771, 0.0
        %v2804 = vmax.f32 %v2772, 0.0
        %v2805 = vmax.f32 %v2773, 0.0
        %v2806 = vmax.f32 %v2774, 0.0
        %v2807 = vmax.f32 %v2775, 0.0
        %v2808 = vmax.f32 %v2776, 0.0
        %v2809 = vmax.f32 %v2777, 0.0
        %v2810 = vmax.f32 %v2778, 0.0
        %v2811 = vmax.f32 %v2779, 0.0
        %v2844 = vrot.slane %v2780, 7
        %v2845 = vrot.slane %v2781, 7
        %v2846 = vrot.slane %v2782, 7
        %v2847 = vsel %vm346, %v2844, %v2846
        %v2848 = vrot.slane %v2783, 7
        %v2849 = vsel %vm346, %v2845, %v2848
        %v2850 = vrot.slane %v2784, 7
        %v2851 = vsel %vm346, %v2846, %v2850
        %v2852 = vrot.slane %v2785, 7
        %v2853 = vsel %vm346, %v2848, %v2852
        %v2854 = vrot.slane %v2786, 7
        %v2855 = vsel %vm346, %v2850, %v2854
        %v2856 = vrot.slane %v2787, 7
        %v2857 = vsel %vm346, %v2852, %v2856
        %v2858 = vrot.slane %v2788, 7
        %v2859 = vsel %vm346, %v2854, %v2858
        %v2860 = vrot.slane %v2789, 7
        %v2861 = vsel %vm346, %v2856, %v2860
        %v2862 = vrot.slane %v2790, 7
        %v2863 = vsel %vm346, %v2858, %v2862
        %v2864 = vrot.slane %v2791, 7
        %v2865 = vsel %vm346, %v2860, %v2864
        %v2866 = vrot.slane %v2792, 7
        %v2867 = vsel %vm346, %v2862, %v2866
        %v2868 = vrot.slane %v2793, 7
        %v2869 = vsel %vm346, %v2864, %v2868
        %v2870 = vrot.slane %v2794, 7
        %v2871 = vsel %vm346, %v2866, %v2870
        %v2872 = vrot.slane %v2795, 7
        %v2873 = vsel %vm346, %v2868, %v2872
        %v2874 = vrot.slane %v2796, 7
        %v2875 = vsel %vm346, %v2870, %v2874
        %v2876 = vrot.slane %v2797, 7
        %v2877 = vsel %vm346, %v2872, %v2876
        %v2878 = vrot.slane %v2798, 7
        %v2879 = vsel %vm346, %v2874, %v2878
        %v2880 = vrot.slane %v2799, 7
        %v2881 = vsel %vm346, %v2876, %v2880
        %v2882 = vrot.slane %v2800, 7
        %v2883 = vsel %vm346, %v2878, %v2882
        %v2884 = vrot.slane %v2801, 7
        %v2885 = vsel %vm346, %v2880, %v2884
        %v2886 = vrot.slane %v2802, 7
        %v2887 = vsel %vm346, %v2882, %v2886
        %v2888 = vrot.slane %v2803, 7
        %v2889 = vsel %vm346, %v2884, %v2888
        %v2890 = vrot.slane %v2804, 7
        %v2891 = vsel %vm346, %v2886, %v2890
        %v2892 = vrot.slane %v2805, 7
        %v2893 = vsel %vm346, %v2888, %v2892
        %v2894 = vrot.slane %v2806, 7
        %v2895 = vsel %vm346, %v2890, %v2894
        %v2896 = vrot.slane %v2807, 7
        %v2897 = vsel %vm346, %v2892, %v2896
        %v2898 = vrot.slane %v2808, 7
        %v2899 = vsel %vm346, %v2894, %v2898
        %v2900 = vrot.slane %v2809, 7
        %v2901 = vsel %vm346, %v2896, %v2900
        %v2902 = vrot.slane %v2810, 7
        %v2903 = vsel %vm346, %v2898, %v2902
        %v2904 = vrot.slane %v2811, 7
        %v2905 = vsel %vm346, %v2900, %v2904
        %v2938 = vsel %vm346, 0.0, %v2844
        %v2939 = vsel %vm346, 0.0, %v2845
        %v2940 = vrot.slane %v2780, 1
        %v2941 = vrot.slane %v2782, 1
        %v2942 = vsel %vm443, %v2940, %v2941
        %v2943 = vrot.slane %v2781, 1
        %v2944 = vrot.slane %v2783, 1
        %v2945 = vsel %vm443, %v2943, %v2944
        %v2946 = vrot.slane %v2784, 1
        %v2947 = vsel %vm443, %v2941, %v2946
        %v2948 = vrot.slane %v2785, 1
        %v2949 = vsel %vm443, %v2944, %v2948
        %v2950 = vrot.slane %v2786, 1
        %v2951 = vsel %vm443, %v2946, %v2950
        %v2952 = vrot.slane %v2787, 1
        %v2953 = vsel %vm443, %v2948, %v2952
        %v2954 = vrot.slane %v2788, 1
        %v2955 = vsel %vm443, %v2950, %v2954
        %v2956 = vrot.slane %v2789, 1
        %v2957 = vsel %vm443, %v2952, %v2956
        %v2958 = vrot.slane %v2790, 1
        %v2959 = vsel %vm443, %v2954, %v2958
        %v2960 = vrot.slane %v2791, 1
        %v2961 = vsel %vm443, %v2956, %v2960
        %v2962 = vrot.slane %v2792, 1
        %v2963 = vsel %vm443, %v2958, %v2962
        %v2964 = vrot.slane %v2793, 1
        %v2965 = vsel %vm443, %v2960, %v2964
        %v2966 = vrot.slane %v2794, 1
        %v2967 = vsel %vm443, %v2962, %v2966
        %v2968 = vrot.slane %v2795, 1
        %v2969 = vsel %vm443, %v2964, %v2968
        %v2970 = vrot.slane %v2796, 1
        %v2971 = vsel %vm443, %v2966, %v2970
        %v2972 = vrot.slane %v2797, 1
        %v2973 = vsel %vm443, %v2968, %v2972
        %v2974 = vrot.slane %v2798, 1
        %v2975 = vsel %vm443, %v2970, %v2974
        %v2976 = vrot.slane %v2799, 1
        %v2977 = vsel %vm443, %v2972, %v2976
        %v2978 = vrot.slane %v2800, 1
        %v2979 = vsel %vm443, %v2974, %v2978
        %v2980 = vrot.slane %v2801, 1
        %v2981 = vsel %vm443, %v2976, %v2980
        %v2982 = vrot.slane %v2802, 1
        %v2983 = vsel %vm443, %v2978, %v2982
        %v2984 = vrot.slane %v2803, 1
        %v2985 = vsel %vm443, %v2980, %v2984
        %v2986 = vrot.slane %v2804, 1
        %v2987 = vsel %vm443, %v2982, %v2986
        %v2988 = vrot.slane %v2805, 1
        %v2989 = vsel %vm443, %v2984, %v2988
        %v2990 = vrot.slane %v2806, 1
        %v2991 = vsel %vm443, %v2986, %v2990
        %v2992 = vrot.slane %v2807, 1
        %v2993 = vsel %vm443, %v2988, %v2992
        %v2994 = vrot.slane %v2808, 1
        %v2995 = vsel %vm443, %v2990, %v2994
        %v2996 = vrot.slane %v2809, 1
        %v2997 = vsel %vm443, %v2992, %v2996
        %v2998 = vrot.slane %v2810, 1
        %v2999 = vsel %vm443, %v2994, %v2998
        %v3000 = vrot.slane %v2811, 1
        %v3001 = vsel %vm443, %v2996, %v3000
        %v3034 = vsel %vm443, %v2998, 0.0
        %v3035 = vsel %vm443, %v3000, 0.0
        %v3036 = vpack.c.bf16 %v2847, %v2938
        %v3037 = vpack.c.bf16 %v2849, %v2939
        %v3038 = vpack.c.bf16 %v2782, %v2780
        %v3039 = vpack.c.bf16 %v2783, %v2781
        %v3040 = vpack.c.bf16 %v2947, %v2942
        %v3041 = vpack.c.bf16 %v2949, %v2945
        %v3042 = vpack.c.bf16 %v2855, %v2851
        %v3043 = vpack.c.bf16 %v2857, %v2853
        %v3044 = vpack.c.bf16 %v2786, %v2784
        %v3045 = vpack.c.bf16 %v2787, %v2785
        %v3046 = vpack.c.bf16 %v2955, %v2951
        %v3047 = vpack.c.bf16 %v2957, %v2953
        %v3048 = vpack.c.bf16 %v2863, %v2859
        %v3049 = vpack.c.bf16 %v2865, %v2861
        %v3050 = vpack.c.bf16 %v2790, %v2788
        %v3051 = vpack.c.bf16 %v2791, %v2789
        %v3052 = vpack.c.bf16 %v2963, %v2959
        %v3053 = vpack.c.bf16 %v2965, %v2961
        %v3054 = vpack.c.bf16 %v2871, %v2867
        %v3055 = vpack.c.bf16 %v2873, %v2869
        %v3056 = vpack.c.bf16 %v2794, %v2792
        %v3057 = vpack.c.bf16 %v2795, %v2793
        %v3058 = vpack.c.bf16 %v2971, %v2967
        %v3059 = vpack.c.bf16 %v2973, %v2969
        %v3060 = vpack.c.bf16 %v2879, %v2875
        %v3061 = vpack.c.bf16 %v2881, %v2877
        %v3062 = vpack.c.bf16 %v2798, %v2796
        %v3063 = vpack.c.bf16 %v2799, %v2797
        %v3064 = vpack.c.bf16 %v2979, %v2975
        %v3065 = vpack.c.bf16 %v2981, %v2977
        %v3066 = vpack.c.bf16 %v2887, %v2883
        %v3067 = vpack.c.bf16 %v2889, %v2885
        %v3068 = vpack.c.bf16 %v2802, %v2800
        %v3069 = vpack.c.bf16 %v2803, %v2801
        %v3070 = vpack.c.bf16 %v2987, %v2983
        %v3071 = vpack.c.bf16 %v2989, %v2985
        %v3072 = vpack.c.bf16 %v2895, %v2891
        %v3073 = vpack.c.bf16 %v2897, %v2893
        %v3074 = vpack.c.bf16 %v2806, %v2804
        %v3075 = vpack.c.bf16 %v2807, %v2805
        %v3076 = vpack.c.bf16 %v2995, %v2991
        %v3077 = vpack.c.bf16 %v2997, %v2993
        %v3078 = vpack.c.bf16 %v2903, %v2899
        %v3079 = vpack.c.bf16 %v2905, %v2901
        %v3080 = vpack.c.bf16 %v2810, %v2808
        %v3081 = vpack.c.bf16 %v2811, %v2809
        %v3082 = vpack.c.bf16 %v3034, %v2999
        %v3083 = vpack.c.bf16 %v3035, %v3001
        %s3084 = scalar_lea.vmem [#allocation5], 1536
        %v3085 = vld [vmem:[%s3084] sm:$0xff]
        %v3086 = vld [vmem:[%s3084 + $0x8] sm:$0xff]
        %v3087 = vld [vmem:[%s3084 + $0x10] sm:$0xff]
        %v3088 = vld [vmem:[%s3084 + $0x18] sm:$0xff]
        %v3089 = vld [vmem:[%s3084 + $0x20] sm:$0xff]
        %v3090 = vld [vmem:[%s3084 + $0x28] sm:$0xff]
        %v3091 = vld [vmem:[%s3084 + $0x30] sm:$0xff]
        %v3092 = vld [vmem:[%s3084 + $0x38] sm:$0xff]
        %v3093 = vld [vmem:[%s3084 + $0x40] sm:$0xff]
        %v3094 = vld [vmem:[%s3084 + $0x48] sm:$0xff]
        %v3095 = vld [vmem:[%s3084 + $0x50] sm:$0xff]
        %v3096 = vld [vmem:[%s3084 + $0x58] sm:$0xff]
        %v3097 = vld [vmem:[%s3084 + $0x60] sm:$0xff]
        %v3098 = vld [vmem:[%s3084 + $0x68] sm:$0xff]
        %v3099 = vld [vmem:[%s3084 + $0x70] sm:$0xff]
        %v3100 = vld [vmem:[%s3084 + $0x78] sm:$0xff]
        %v3101 = vld [vmem:[%s3084 + $0x80] sm:$0xff]
        %v3102 = vld [vmem:[%s3084 + $0x88] sm:$0xff]
        %v3103 = vld [vmem:[%s3084 + $0x90] sm:$0xff]
        %v3104 = vld [vmem:[%s3084 + $0x98] sm:$0xff]
        %v3105 = vld [vmem:[%s3084 + $0xa0] sm:$0xff]
        %v3106 = vld [vmem:[%s3084 + $0xa8] sm:$0xff]
        %v3107 = vld [vmem:[%s3084 + $0xb0] sm:$0xff]
        %v3108 = vld [vmem:[%s3084 + $0xb8] sm:$0xff]
        %v3109 = vld [vmem:[%s3084 + $0xc0] sm:$0xff]
        %v3110 = vld [vmem:[%s3084 + $0xc8] sm:$0xff]
        %v3111 = vld [vmem:[%s3084 + $0xd0] sm:$0xff]
        %v3112 = vld [vmem:[%s3084 + $0xd8] sm:$0xff]
        %v3113 = vld [vmem:[%s3084 + $0xe0] sm:$0xff]
        %v3114 = vld [vmem:[%s3084 + $0xe8] sm:$0xff]
        %v3115 = vld [vmem:[%s3084 + $0xf0] sm:$0xff]
        %v3116 = vld [vmem:[%s3084 + $0xf8] sm:$0xff]
        %v3117 = vld [vmem:[%s3084 + $0x100] sm:$0xff]
        %v3118 = vld [vmem:[%s3084 + $0x108] sm:$0xff]
        %v3119 = vld [vmem:[%s3084 + $0x110] sm:$0xff]
        %v3120 = vld [vmem:[%s3084 + $0x118] sm:$0xff]
        %v3121 = vld [vmem:[%s3084 + $0x120] sm:$0xff]
        %v3122 = vld [vmem:[%s3084 + $0x128] sm:$0xff]
        %v3123 = vld [vmem:[%s3084 + $0x130] sm:$0xff]
        %v3124 = vld [vmem:[%s3084 + $0x138] sm:$0xff]
        %v3125 = vld [vmem:[%s3084 + $0x140] sm:$0xff]
        %v3126 = vld [vmem:[%s3084 + $0x148] sm:$0xff]
        %v3127 = vld [vmem:[%s3084 + $0x150] sm:$0xff]
        %v3128 = vld [vmem:[%s3084 + $0x158] sm:$0xff]
        %v3129 = vld [vmem:[%s3084 + $0x160] sm:$0xff]
        %v3130 = vld [vmem:[%s3084 + $0x168] sm:$0xff]
        %v3131 = vld [vmem:[%s3084 + $0x170] sm:$0xff]
        %v3132 = vld [vmem:[%s3084 + $0x178] sm:$0xff]
        %v3133 = vld [vmem:[%s3084 + $0x180] sm:$0xff]
        %v3134 = vld [vmem:[%s3084 + $0x188] sm:$0xff]
        %v3135 = vld [vmem:[%s3084 + $0x190] sm:$0xff]
        %v3136 = vld [vmem:[%s3084 + $0x198] sm:$0xff]
        %v3137 = vld [vmem:[%s3084 + $0x1a0] sm:$0xff]
        %v3138 = vld [vmem:[%s3084 + $0x1a8] sm:$0xff]
        %v3139 = vld [vmem:[%s3084 + $0x1b0] sm:$0xff]
        %v3140 = vld [vmem:[%s3084 + $0x1b8] sm:$0xff]
        %v3141 = vld [vmem:[%s3084 + $0x1c0] sm:$0xff]
        %v3142 = vld [vmem:[%s3084 + $0x1c8] sm:$0xff]
        %v3143 = vld [vmem:[%s3084 + $0x1d0] sm:$0xff]
        %v3144 = vld [vmem:[%s3084 + $0x1d8] sm:$0xff]
        %v3145 = vld [vmem:[%s3084 + $0x1e0] sm:$0xff]
        %v3146 = vld [vmem:[%s3084 + $0x1e8] sm:$0xff]
        %v3147 = vld [vmem:[%s3084 + $0x1f0] sm:$0xff]
        %v3148 = vld [vmem:[%s3084 + $0x1f8] sm:$0xff]
        %v3149 = vld [vmem:[%s3084 + $0x200] sm:$0xff]
        %v3150 = vld [vmem:[%s3084 + $0x208] sm:$0xff]
        %v3151 = vld [vmem:[%s3084 + $0x210] sm:$0xff]
        %v3152 = vld [vmem:[%s3084 + $0x218] sm:$0xff]
        %v3153 = vld [vmem:[%s3084 + $0x220] sm:$0xff]
        %v3154 = vld [vmem:[%s3084 + $0x228] sm:$0xff]
        %v3155 = vld [vmem:[%s3084 + $0x230] sm:$0xff]
        %v3156 = vld [vmem:[%s3084 + $0x238] sm:$0xff]
        %v3157 = vld [vmem:[%s3084 + $0x240] sm:$0xff]
        %v3158 = vld [vmem:[%s3084 + $0x248] sm:$0xff]
        %v3159 = vld [vmem:[%s3084 + $0x250] sm:$0xff]
        %v3160 = vld [vmem:[%s3084 + $0x258] sm:$0xff]
        %v3161 = vld [vmem:[%s3084 + $0x260] sm:$0xff]
        %v3162 = vld [vmem:[%s3084 + $0x268] sm:$0xff]
        %v3163 = vld [vmem:[%s3084 + $0x270] sm:$0xff]
        %v3164 = vld [vmem:[%s3084 + $0x278] sm:$0xff]
        %v3165 = vld [vmem:[%s3084 + $0x280] sm:$0xff]
        %v3166 = vld [vmem:[%s3084 + $0x288] sm:$0xff]
        %v3167 = vld [vmem:[%s3084 + $0x290] sm:$0xff]
        %v3168 = vld [vmem:[%s3084 + $0x298] sm:$0xff]
        %v3169 = vld [vmem:[%s3084 + $0x2a0] sm:$0xff]
        %v3170 = vld [vmem:[%s3084 + $0x2a8] sm:$0xff]
        %v3171 = vld [vmem:[%s3084 + $0x2b0] sm:$0xff]
        %v3172 = vld [vmem:[%s3084 + $0x2b8] sm:$0xff]
        %v3173 = vld [vmem:[%s3084 + $0x2c0] sm:$0xff]
        %v3174 = vld [vmem:[%s3084 + $0x2c8] sm:$0xff]
        %v3175 = vld [vmem:[%s3084 + $0x2d0] sm:$0xff]
        %v3176 = vld [vmem:[%s3084 + $0x2d8] sm:$0xff]
        %v3177 = vld [vmem:[%s3084 + $0x2e0] sm:$0xff]
        %v3178 = vld [vmem:[%s3084 + $0x2e8] sm:$0xff]
        %v3179 = vld [vmem:[%s3084 + $0x2f0] sm:$0xff]
        %v3180 = vld [vmem:[%s3084 + $0x2f8] sm:$0xff]
        %s3181 = scalar_lea.vmem [#allocation7], 4
        %v3182 = vld [vmem:[%s3181] sm:$0x3]
        %v3184 = vlaneseq
        %v3185 = vshrl.u32 %v3184, 7
        %v3186 = vsub.s32 0, %v3185
        %v3187 = vrot.slane %v3182, %v3186
        %v3188 = vlaneseq
        %v3189 = vshrl.u32 %v3188, 7
        %v3190 = vsub.s32 1, %v3189
        %v3191 = vrot.slane %v3182, %v3190
        %v3290 = vunpack.c.l.b16 %v3085
        %v3291 = vunpack.c.h.b16 %v3085
        %v3292 = vunpack.c.l.b16 %v3086
        %v3293 = vunpack.c.h.b16 %v3086
        %v3294 = vunpack.c.l.b16 %v3087
        %v3295 = vunpack.c.h.b16 %v3087
        %v3296 = vunpack.c.l.b16 %v3088
        %v3297 = vunpack.c.h.b16 %v3088
        %v3298 = vunpack.c.l.b16 %v3089
        %v3299 = vunpack.c.h.b16 %v3089
        %v3300 = vunpack.c.l.b16 %v3090
        %v3301 = vunpack.c.h.b16 %v3090
        %v3302 = vunpack.c.l.b16 %v3091
        %v3303 = vunpack.c.h.b16 %v3091
        %v3304 = vunpack.c.l.b16 %v3092
        %v3305 = vunpack.c.h.b16 %v3092
        %v3306 = vunpack.c.l.b16 %v3093
        %v3307 = vunpack.c.h.b16 %v3093
        %v3308 = vunpack.c.l.b16 %v3094
        %v3309 = vunpack.c.h.b16 %v3094
        %v3310 = vunpack.c.l.b16 %v3095
        %v3311 = vunpack.c.h.b16 %v3095
        %v3312 = vunpack.c.l.b16 %v3096
        %v3313 = vunpack.c.h.b16 %v3096
        %v3314 = vunpack.c.l.b16 %v3097
        %v3315 = vunpack.c.h.b16 %v3097
        %v3316 = vunpack.c.l.b16 %v3098
        %v3317 = vunpack.c.h.b16 %v3098
        %v3318 = vunpack.c.l.b16 %v3099
        %v3319 = vunpack.c.h.b16 %v3099
        %v3320 = vunpack.c.l.b16 %v3100
        %v3321 = vunpack.c.h.b16 %v3100
        %v3322 = vunpack.c.l.b16 %v3101
        %v3323 = vunpack.c.h.b16 %v3101
        %v3324 = vunpack.c.l.b16 %v3102
        %v3325 = vunpack.c.h.b16 %v3102
        %v3326 = vunpack.c.l.b16 %v3103
        %v3327 = vunpack.c.h.b16 %v3103
        %v3328 = vunpack.c.l.b16 %v3104
        %v3329 = vunpack.c.h.b16 %v3104
        %v3330 = vunpack.c.l.b16 %v3105
        %v3331 = vunpack.c.h.b16 %v3105
        %v3332 = vunpack.c.l.b16 %v3106
        %v3333 = vunpack.c.h.b16 %v3106
        %v3334 = vunpack.c.l.b16 %v3107
        %v3335 = vunpack.c.h.b16 %v3107
        %v3336 = vunpack.c.l.b16 %v3108
        %v3337 = vunpack.c.h.b16 %v3108
        %v3338 = vunpack.c.l.b16 %v3109
        %v3339 = vunpack.c.h.b16 %v3109
        %v3340 = vunpack.c.l.b16 %v3110
        %v3341 = vunpack.c.h.b16 %v3110
        %v3342 = vunpack.c.l.b16 %v3111
        %v3343 = vunpack.c.h.b16 %v3111
        %v3344 = vunpack.c.l.b16 %v3112
        %v3345 = vunpack.c.h.b16 %v3112
        %v3346 = vunpack.c.l.b16 %v3113
        %v3347 = vunpack.c.h.b16 %v3113
        %v3348 = vunpack.c.l.b16 %v3114
        %v3349 = vunpack.c.h.b16 %v3114
        %v3350 = vunpack.c.l.b16 %v3115
        %v3351 = vunpack.c.h.b16 %v3115
        %v3352 = vunpack.c.l.b16 %v3116
        %v3353 = vunpack.c.h.b16 %v3116
        %v3354 = vunpack.c.l.b16 %v3117
        %v3355 = vunpack.c.h.b16 %v3117
        %v3356 = vunpack.c.l.b16 %v3118
        %v3357 = vunpack.c.h.b16 %v3118
        %v3358 = vunpack.c.l.b16 %v3119
        %v3359 = vunpack.c.h.b16 %v3119
        %v3360 = vunpack.c.l.b16 %v3120
        %v3361 = vunpack.c.h.b16 %v3120
        %v3362 = vunpack.c.l.b16 %v3121
        %v3363 = vunpack.c.h.b16 %v3121
        %v3364 = vunpack.c.l.b16 %v3122
        %v3365 = vunpack.c.h.b16 %v3122
        %v3366 = vunpack.c.l.b16 %v3123
        %v3367 = vunpack.c.h.b16 %v3123
        %v3368 = vunpack.c.l.b16 %v3124
        %v3369 = vunpack.c.h.b16 %v3124
        %v3370 = vunpack.c.l.b16 %v3125
        %v3371 = vunpack.c.h.b16 %v3125
        %v3372 = vunpack.c.l.b16 %v3126
        %v3373 = vunpack.c.h.b16 %v3126
        %v3374 = vunpack.c.l.b16 %v3127
        %v3375 = vunpack.c.h.b16 %v3127
        %v3376 = vunpack.c.l.b16 %v3128
        %v3377 = vunpack.c.h.b16 %v3128
        %v3378 = vunpack.c.l.b16 %v3129
        %v3379 = vunpack.c.h.b16 %v3129
        %v3380 = vunpack.c.l.b16 %v3130
        %v3381 = vunpack.c.h.b16 %v3130
        %v3382 = vunpack.c.l.b16 %v3131
        %v3383 = vunpack.c.h.b16 %v3131
        %v3384 = vunpack.c.l.b16 %v3132
        %v3385 = vunpack.c.h.b16 %v3132
        %v3386 = vunpack.c.l.b16 %v3133
        %v3387 = vunpack.c.h.b16 %v3133
        %v3388 = vunpack.c.l.b16 %v3134
        %v3389 = vunpack.c.h.b16 %v3134
        %v3390 = vunpack.c.l.b16 %v3135
        %v3391 = vunpack.c.h.b16 %v3135
        %v3392 = vunpack.c.l.b16 %v3136
        %v3393 = vunpack.c.h.b16 %v3136
        %v3394 = vunpack.c.l.b16 %v3137
        %v3395 = vunpack.c.h.b16 %v3137
        %v3396 = vunpack.c.l.b16 %v3138
        %v3397 = vunpack.c.h.b16 %v3138
        %v3398 = vunpack.c.l.b16 %v3139
        %v3399 = vunpack.c.h.b16 %v3139
        %v3400 = vunpack.c.l.b16 %v3140
        %v3401 = vunpack.c.h.b16 %v3140
        %v3402 = vunpack.c.l.b16 %v3141
        %v3403 = vunpack.c.h.b16 %v3141
        %v3404 = vunpack.c.l.b16 %v3142
        %v3405 = vunpack.c.h.b16 %v3142
        %v3406 = vunpack.c.l.b16 %v3143
        %v3407 = vunpack.c.h.b16 %v3143
        %v3408 = vunpack.c.l.b16 %v3144
        %v3409 = vunpack.c.h.b16 %v3144
        %v3410 = vunpack.c.l.b16 %v3145
        %v3411 = vunpack.c.h.b16 %v3145
        %v3412 = vunpack.c.l.b16 %v3146
        %v3413 = vunpack.c.h.b16 %v3146
        %v3414 = vunpack.c.l.b16 %v3147
        %v3415 = vunpack.c.h.b16 %v3147
        %v3416 = vunpack.c.l.b16 %v3148
        %v3417 = vunpack.c.h.b16 %v3148
        %v3418 = vunpack.c.l.b16 %v3149
        %v3419 = vunpack.c.h.b16 %v3149
        %v3420 = vunpack.c.l.b16 %v3150
        %v3421 = vunpack.c.h.b16 %v3150
        %v3422 = vunpack.c.l.b16 %v3151
        %v3423 = vunpack.c.h.b16 %v3151
        %v3424 = vunpack.c.l.b16 %v3152
        %v3425 = vunpack.c.h.b16 %v3152
        %v3426 = vunpack.c.l.b16 %v3153
        %v3427 = vunpack.c.h.b16 %v3153
        %v3428 = vunpack.c.l.b16 %v3154
        %v3429 = vunpack.c.h.b16 %v3154
        %v3430 = vunpack.c.l.b16 %v3155
        %v3431 = vunpack.c.h.b16 %v3155
        %v3432 = vunpack.c.l.b16 %v3156
        %v3433 = vunpack.c.h.b16 %v3156
        %v3434 = vunpack.c.l.b16 %v3157
        %v3435 = vunpack.c.h.b16 %v3157
        %v3436 = vunpack.c.l.b16 %v3158
        %v3437 = vunpack.c.h.b16 %v3158
        %v3438 = vunpack.c.l.b16 %v3159
        %v3439 = vunpack.c.h.b16 %v3159
        %v3440 = vunpack.c.l.b16 %v3160
        %v3441 = vunpack.c.h.b16 %v3160
        %v3442 = vunpack.c.l.b16 %v3161
        %v3443 = vunpack.c.h.b16 %v3161
        %v3444 = vunpack.c.l.b16 %v3162
        %v3445 = vunpack.c.h.b16 %v3162
        %v3446 = vunpack.c.l.b16 %v3163
        %v3447 = vunpack.c.h.b16 %v3163
        %v3448 = vunpack.c.l.b16 %v3164
        %v3449 = vunpack.c.h.b16 %v3164
        %v3450 = vunpack.c.l.b16 %v3165
        %v3451 = vunpack.c.h.b16 %v3165
        %v3452 = vunpack.c.l.b16 %v3166
        %v3453 = vunpack.c.h.b16 %v3166
        %v3454 = vunpack.c.l.b16 %v3167
        %v3455 = vunpack.c.h.b16 %v3167
        %v3456 = vunpack.c.l.b16 %v3168
        %v3457 = vunpack.c.h.b16 %v3168
        %v3458 = vunpack.c.l.b16 %v3169
        %v3459 = vunpack.c.h.b16 %v3169
        %v3460 = vunpack.c.l.b16 %v3170
        %v3461 = vunpack.c.h.b16 %v3170
        %v3462 = vunpack.c.l.b16 %v3171
        %v3463 = vunpack.c.h.b16 %v3171
        %v3464 = vunpack.c.l.b16 %v3172
        %v3465 = vunpack.c.h.b16 %v3172
        %v3466 = vunpack.c.l.b16 %v3173
        %v3467 = vunpack.c.h.b16 %v3173
        %v3468 = vunpack.c.l.b16 %v3174
        %v3469 = vunpack.c.h.b16 %v3174
        %v3470 = vunpack.c.l.b16 %v3175
        %v3471 = vunpack.c.h.b16 %v3175
        %v3472 = vunpack.c.l.b16 %v3176
        %v3473 = vunpack.c.h.b16 %v3176
        %v3474 = vunpack.c.l.b16 %v3177
        %v3475 = vunpack.c.h.b16 %v3177
        %v3476 = vunpack.c.l.b16 %v3178
        %v3477 = vunpack.c.h.b16 %v3178
        %v3478 = vunpack.c.l.b16 %v3179
        %v3479 = vunpack.c.h.b16 %v3179
        %v3480 = vunpack.c.l.b16 %v3180
        %v3481 = vunpack.c.h.b16 %v3180
        %v3482 = vpack.c.b16 %v3292, %v3290
        %v3483 = vpack.c.b16 %v3293, %v3291
        %v3484 = vpack.c.b16 %v3296, %v3294
        %v3485 = vpack.c.b16 %v3297, %v3295
        %v3486 = vpack.c.b16 %v3300, %v3298
        %v3487 = vpack.c.b16 %v3301, %v3299
        %v3488 = vpack.c.b16 %v3304, %v3302
        %v3489 = vpack.c.b16 %v3305, %v3303
        %v3490 = vpack.c.b16 %v3308, %v3306
        %v3491 = vpack.c.b16 %v3309, %v3307
        %v3492 = vpack.c.b16 %v3312, %v3310
        %v3493 = vpack.c.b16 %v3313, %v3311
        %v3494 = vpack.c.b16 %v3316, %v3314
        %v3495 = vpack.c.b16 %v3317, %v3315
        %v3496 = vpack.c.b16 %v3320, %v3318
        %v3497 = vpack.c.b16 %v3321, %v3319
        %v3498 = vpack.c.b16 %v3324, %v3322
        %v3499 = vpack.c.b16 %v3325, %v3323
        %v3500 = vpack.c.b16 %v3328, %v3326
        %v3501 = vpack.c.b16 %v3329, %v3327
        %v3502 = vpack.c.b16 %v3332, %v3330
        %v3503 = vpack.c.b16 %v3333, %v3331
        %v3504 = vpack.c.b16 %v3336, %v3334
        %v3505 = vpack.c.b16 %v3337, %v3335
        %v3506 = vpack.c.b16 %v3340, %v3338
        %v3507 = vpack.c.b16 %v3341, %v3339
        %v3508 = vpack.c.b16 %v3344, %v3342
        %v3509 = vpack.c.b16 %v3345, %v3343
        %v3510 = vpack.c.b16 %v3348, %v3346
        %v3511 = vpack.c.b16 %v3349, %v3347
        %v3512 = vpack.c.b16 %v3352, %v3350
        %v3513 = vpack.c.b16 %v3353, %v3351
        %v3514 = vpack.c.b16 %v3356, %v3354
        %v3515 = vpack.c.b16 %v3357, %v3355
        %v3516 = vpack.c.b16 %v3360, %v3358
        %v3517 = vpack.c.b16 %v3361, %v3359
        %v3518 = vpack.c.b16 %v3364, %v3362
        %v3519 = vpack.c.b16 %v3365, %v3363
        %v3520 = vpack.c.b16 %v3368, %v3366
        %v3521 = vpack.c.b16 %v3369, %v3367
        %v3522 = vpack.c.b16 %v3372, %v3370
        %v3523 = vpack.c.b16 %v3373, %v3371
        %v3524 = vpack.c.b16 %v3376, %v3374
        %v3525 = vpack.c.b16 %v3377, %v3375
        %v3526 = vpack.c.b16 %v3380, %v3378
        %v3527 = vpack.c.b16 %v3381, %v3379
        %v3528 = vpack.c.b16 %v3384, %v3382
        %v3529 = vpack.c.b16 %v3385, %v3383
        %v3530 = vpack.c.b16 %v3388, %v3386
        %v3531 = vpack.c.b16 %v3389, %v3387
        %v3532 = vpack.c.b16 %v3392, %v3390
        %v3533 = vpack.c.b16 %v3393, %v3391
        %v3534 = vpack.c.b16 %v3396, %v3394
        %v3535 = vpack.c.b16 %v3397, %v3395
        %v3536 = vpack.c.b16 %v3400, %v3398
        %v3537 = vpack.c.b16 %v3401, %v3399
        %v3538 = vpack.c.b16 %v3404, %v3402
        %v3539 = vpack.c.b16 %v3405, %v3403
        %v3540 = vpack.c.b16 %v3408, %v3406
        %v3541 = vpack.c.b16 %v3409, %v3407
        %v3542 = vpack.c.b16 %v3412, %v3410
        %v3543 = vpack.c.b16 %v3413, %v3411
        %v3544 = vpack.c.b16 %v3416, %v3414
        %v3545 = vpack.c.b16 %v3417, %v3415
        %v3546 = vpack.c.b16 %v3420, %v3418
        %v3547 = vpack.c.b16 %v3421, %v3419
        %v3548 = vpack.c.b16 %v3424, %v3422
        %v3549 = vpack.c.b16 %v3425, %v3423
        %v3550 = vpack.c.b16 %v3428, %v3426
        %v3551 = vpack.c.b16 %v3429, %v3427
        %v3552 = vpack.c.b16 %v3432, %v3430
        %v3553 = vpack.c.b16 %v3433, %v3431
        %v3554 = vpack.c.b16 %v3436, %v3434
        %v3555 = vpack.c.b16 %v3437, %v3435
        %v3556 = vpack.c.b16 %v3440, %v3438
        %v3557 = vpack.c.b16 %v3441, %v3439
        %v3558 = vpack.c.b16 %v3444, %v3442
        %v3559 = vpack.c.b16 %v3445, %v3443
        %v3560 = vpack.c.b16 %v3448, %v3446
        %v3561 = vpack.c.b16 %v3449, %v3447
        %v3562 = vpack.c.b16 %v3452, %v3450
        %v3563 = vpack.c.b16 %v3453, %v3451
        %v3564 = vpack.c.b16 %v3456, %v3454
        %v3565 = vpack.c.b16 %v3457, %v3455
        %v3566 = vpack.c.b16 %v3460, %v3458
        %v3567 = vpack.c.b16 %v3461, %v3459
        %v3568 = vpack.c.b16 %v3464, %v3462
        %v3569 = vpack.c.b16 %v3465, %v3463
        %v3570 = vpack.c.b16 %v3468, %v3466
        %v3571 = vpack.c.b16 %v3469, %v3467
        %v3572 = vpack.c.b16 %v3472, %v3470
        %v3573 = vpack.c.b16 %v3473, %v3471
        %v3574 = vpack.c.b16 %v3476, %v3474
        %v3575 = vpack.c.b16 %v3477, %v3475
        %v3576 = vpack.c.b16 %v3480, %v3478
        %v3577 = vpack.c.b16 %v3481, %v3479
        %3674 = vmatprep.subr.bf16.mxu0 %v3483
        %3675 = vmatpush1.bf16.msra.mxu0 %v3482
        %3676 = vmatprep.subr.bf16.mxu0 %v3485
        %3677 = vmatpush1.bf16.msra.mxu0 %v3484
        %3678 = vmatprep.subr.bf16.mxu0 %v3487
        %3679 = vmatpush1.bf16.msra.mxu0 %v3486
        %3680 = vmatprep.subr.bf16.mxu0 %v3489
        %3681 = vmatpush1.bf16.msra.mxu0 %v3488
        %3682 = vmatprep.subr.bf16.mxu0 %v3491
        %3683 = vmatpush1.bf16.msra.mxu0 %v3490
        %3684 = vmatprep.subr.bf16.mxu0 %v3493
        %3685 = vmatpush1.bf16.msra.mxu0 %v3492
        %3686 = vmatprep.subr.bf16.mxu0 %v3495
        %3687 = vmatpush1.bf16.msra.mxu0 %v3494
        %3688 = vmatprep.subr.bf16.mxu0 %v3497
        %3689 = vmatpush1.bf16.msra.mxu0 %v3496
        %3690 = vmatprep.subr.bf16.mxu0 %v3499
        %3691 = vmatpush1.bf16.msra.mxu0 %v3498
        %3692 = vmatprep.subr.bf16.mxu0 %v3501
        %3693 = vmatpush1.bf16.msra.mxu0 %v3500
        %3694 = vmatprep.subr.bf16.mxu0 %v3503
        %3695 = vmatpush1.bf16.msra.mxu0 %v3502
        %3696 = vmatprep.subr.bf16.mxu0 %v3505
        %3697 = vmatpush1.bf16.msra.mxu0 %v3504
        %3698 = vmatprep.subr.bf16.mxu0 %v3507
        %3699 = vmatpush1.bf16.msra.mxu0 %v3506
        %3700 = vmatprep.subr.bf16.mxu0 %v3509
        %3701 = vmatpush1.bf16.msra.mxu0 %v3508
        %3702 = vmatprep.subr.bf16.mxu0 %v3511
        %3703 = vmatpush1.bf16.msra.mxu0 %v3510
        %3704 = vmatprep.subr.bf16.mxu0 %v3513
        %3705 = vmatpush1.bf16.msra.mxu0 %v3512
        %3706 = vmatprep.mubr.bf16.mxu0 %v3037
        %3707 = vmatmul.mubr.bf16.gmra.mrb[0].mxu0 %v3036
        %v3708 = vpop.f32.mrb[0].mxu0
        %v3709 = vadd.f32 %v3187, %v3708
        %v3710 = vpop.f32.mrb[0].mxu0
        %v3711 = vadd.f32 %v3191, %v3710
        %v3712 = vpop.f32.mrb[0].mxu0
        %v3713 = vadd.f32 %v3187, %v3712
        %v3714 = vpop.f32.mrb[0].mxu0
        %v3715 = vadd.f32 %v3191, %v3714
        %3716 = vmatprep.mubr.bf16.mxu0 %v3043
        %3717 = vmatmul.mubr.bf16.gmra.mrb[0].mxu0 %v3042
        %v3718 = vpop.f32.mrb[0].mxu0
        %v3719 = vadd.f32 %v3187, %v3718
        %v3720 = vpop.f32.mrb[0].mxu0
        %v3721 = vadd.f32 %v3191, %v3720
        %v3722 = vpop.f32.mrb[0].mxu0
        %v3723 = vadd.f32 %v3187, %v3722
        %v3724 = vpop.f32.mrb[0].mxu0
        %v3725 = vadd.f32 %v3191, %v3724
        %3726 = vmatprep.mubr.bf16.mxu0 %v3049
        %3727 = vmatmul.mubr.bf16.gmra.mrb[0].mxu0 %v3048
        %v3728 = vpop.f32.mrb[0].mxu0
        %v3729 = vadd.f32 %v3187, %v3728
        %v3730 = vpop.f32.mrb[0].mxu0
        %v3731 = vadd.f32 %v3191, %v3730
        %v3732 = vpop.f32.mrb[0].mxu0
        %v3733 = vadd.f32 %v3187, %v3732
        %v3734 = vpop.f32.mrb[0].mxu0
        %v3735 = vadd.f32 %v3191, %v3734
        %3736 = vmatprep.mubr.bf16.mxu0 %v3055
        %3737 = vmatmul.mubr.bf16.gmra.mrb[0].mxu0 %v3054
        %v3738 = vpop.f32.mrb[0].mxu0
        %v3739 = vadd.f32 %v3187, %v3738
        %v3740 = vpop.f32.mrb[0].mxu0
        %v3741 = vadd.f32 %v3191, %v3740
        %v3742 = vpop.f32.mrb[0].mxu0
        %v3743 = vadd.f32 %v3187, %v3742
        %v3744 = vpop.f32.mrb[0].mxu0
        %v3745 = vadd.f32 %v3191, %v3744
        %3746 = vmatprep.mubr.bf16.mxu0 %v3061
        %3747 = vmatmul.mubr.bf16.gmra.mrb[0].mxu0 %v3060
        %v3748 = vpop.f32.mrb[0].mxu0
        %v3749 = vadd.f32 %v3187, %v3748
        %v3750 = vpop.f32.mrb[0].mxu0
        %v3751 = vadd.f32 %v3191, %v3750
        %v3752 = vpop.f32.mrb[0].mxu0
        %v3753 = vadd.f32 %v3187, %v3752
        %v3754 = vpop.f32.mrb[0].mxu0
        %v3755 = vadd.f32 %v3191, %v3754
        %3756 = vmatprep.mubr.bf16.mxu0 %v3067
        %3757 = vmatmul.mubr.bf16.gmra.mrb[0].mxu0 %v3066
        %v3758 = vpop.f32.mrb[0].mxu0
        %v3759 = vadd.f32 %v3187, %v3758
        %v3760 = vpop.f32.mrb[0].mxu0
        %v3761 = vadd.f32 %v3191, %v3760
        %v3762 = vpop.f32.mrb[0].mxu0
        %v3763 = vadd.f32 %v3187, %v3762
        %v3764 = vpop.f32.mrb[0].mxu0
        %v3765 = vadd.f32 %v3191, %v3764
        %3766 = vmatprep.mubr.bf16.mxu0 %v3073
        %3767 = vmatmul.mubr.bf16.gmra.mrb[0].mxu0 %v3072
        %v3768 = vpop.f32.mrb[0].mxu0
        %v3769 = vadd.f32 %v3187, %v3768
        %v3770 = vpop.f32.mrb[0].mxu0
        %v3771 = vadd.f32 %v3191, %v3770
        %v3772 = vpop.f32.mrb[0].mxu0
        %v3773 = vadd.f32 %v3187, %v3772
        %v3774 = vpop.f32.mrb[0].mxu0
        %v3775 = vadd.f32 %v3191, %v3774
        %3776 = vmatprep.mubr.bf16.mxu0 %v3079
        %3777 = vmatmul.mubr.bf16.gmra.mrb[0].mxu0 %v3078
        %v3778 = vpop.f32.mrb[0].mxu0
        %v3779 = vadd.f32 %v3187, %v3778
        %v3780 = vpop.f32.mrb[0].mxu0
        %v3781 = vadd.f32 %v3191, %v3780
        %v3782 = vpop.f32.mrb[0].mxu0
        %v3783 = vadd.f32 %v3187, %v3782
        %v3784 = vpop.f32.mrb[0].mxu0
        %v3785 = vadd.f32 %v3191, %v3784
        %3786 = vdwg.mxu0
        %3787 = vmatprep.subr.bf16.mxu0 %v3515
        %3788 = vmatpush1.bf16.msra.mxu0 %v3514
        %3789 = vmatprep.subr.bf16.mxu0 %v3517
        %3790 = vmatpush1.bf16.msra.mxu0 %v3516
        %3791 = vmatprep.subr.bf16.mxu0 %v3519
        %3792 = vmatpush1.bf16.msra.mxu0 %v3518
        %3793 = vmatprep.subr.bf16.mxu0 %v3521
        %3794 = vmatpush1.bf16.msra.mxu0 %v3520
        %3795 = vmatprep.subr.bf16.mxu0 %v3523
        %3796 = vmatpush1.bf16.msra.mxu0 %v3522
        %3797 = vmatprep.subr.bf16.mxu0 %v3525
        %3798 = vmatpush1.bf16.msra.mxu0 %v3524
        %3799 = vmatprep.subr.bf16.mxu0 %v3527
        %3800 = vmatpush1.bf16.msra.mxu0 %v3526
        %3801 = vmatprep.subr.bf16.mxu0 %v3529
        %3802 = vmatpush1.bf16.msra.mxu0 %v3528
        %3803 = vmatprep.subr.bf16.mxu0 %v3531
        %3804 = vmatpush1.bf16.msra.mxu0 %v3530
        %3805 = vmatprep.subr.bf16.mxu0 %v3533
        %3806 = vmatpush1.bf16.msra.mxu0 %v3532
        %3807 = vmatprep.subr.bf16.mxu0 %v3535
        %3808 = vmatpush1.bf16.msra.mxu0 %v3534
        %3809 = vmatprep.subr.bf16.mxu0 %v3537
        %3810 = vmatpush1.bf16.msra.mxu0 %v3536
        %3811 = vmatprep.subr.bf16.mxu0 %v3539
        %3812 = vmatpush1.bf16.msra.mxu0 %v3538
        %3813 = vmatprep.subr.bf16.mxu0 %v3541
        %3814 = vmatpush1.bf16.msra.mxu0 %v3540
        %3815 = vmatprep.subr.bf16.mxu0 %v3543
        %3816 = vmatpush1.bf16.msra.mxu0 %v3542
        %3817 = vmatprep.subr.bf16.mxu0 %v3545
        %3818 = vmatpush1.bf16.msra.mxu0 %v3544
        %3819 = vmatprep.mubr.bf16.mxu0 %v3039
        %3820 = vmatmul.mubr.bf16.gmra.mrb[0].mxu0 %v3038
        %v3821 = vpop.f32.mrb[0].mxu0
        %v3822 = vadd.f32 %v3709, %v3821
        %v3823 = vpop.f32.mrb[0].mxu0
        %v3824 = vadd.f32 %v3711, %v3823
        %v3825 = vpop.f32.mrb[0].mxu0
        %v3826 = vadd.f32 %v3713, %v3825
        %v3827 = vpop.f32.mrb[0].mxu0
        %v3828 = vadd.f32 %v3715, %v3827
        %3829 = vmatprep.mubr.bf16.mxu0 %v3045
        %3830 = vmatmul.mubr.bf16.gmra.mrb[0].mxu0 %v3044
        %v3831 = vpop.f32.mrb[0].mxu0
        %v3832 = vadd.f32 %v3719, %v3831
        %v3833 = vpop.f32.mrb[0].mxu0
        %v3834 = vadd.f32 %v3721, %v3833
        %v3835 = vpop.f32.mrb[0].mxu0
        %v3836 = vadd.f32 %v3723, %v3835
        %v3837 = vpop.f32.mrb[0].mxu0
        %v3838 = vadd.f32 %v3725, %v3837
        %3839 = vmatprep.mubr.bf16.mxu0 %v3051
        %3840 = vmatmul.mubr.bf16.gmra.mrb[0].mxu0 %v3050
        %v3841 = vpop.f32.mrb[0].mxu0
        %v3842 = vadd.f32 %v3729, %v3841
        %v3843 = vpop.f32.mrb[0].mxu0
        %v3844 = vadd.f32 %v3731, %v3843
        %v3845 = vpop.f32.mrb[0].mxu0
        %v3846 = vadd.f32 %v3733, %v3845
        %v3847 = vpop.f32.mrb[0].mxu0
        %v3848 = vadd.f32 %v3735, %v3847
        %3849 = vmatprep.mubr.bf16.mxu0 %v3057
        %3850 = vmatmul.mubr.bf16.gmra.mrb[0].mxu0 %v3056
        %v3851 = vpop.f32.mrb[0].mxu0
        %v3852 = vadd.f32 %v3739, %v3851
        %v3853 = vpop.f32.mrb[0].mxu0
        %v3854 = vadd.f32 %v3741, %v3853
        %v3855 = vpop.f32.mrb[0].mxu0
        %v3856 = vadd.f32 %v3743, %v3855
        %v3857 = vpop.f32.mrb[0].mxu0
        %v3858 = vadd.f32 %v3745, %v3857
        %3859 = vmatprep.mubr.bf16.mxu0 %v3063
        %3860 = vmatmul.mubr.bf16.gmra.mrb[0].mxu0 %v3062
        %v3861 = vpop.f32.mrb[0].mxu0
        %v3862 = vadd.f32 %v3749, %v3861
        %v3863 = vpop.f32.mrb[0].mxu0
        %v3864 = vadd.f32 %v3751, %v3863
        %v3865 = vpop.f32.mrb[0].mxu0
        %v3866 = vadd.f32 %v3753, %v3865
        %v3867 = vpop.f32.mrb[0].mxu0
        %v3868 = vadd.f32 %v3755, %v3867
        %3869 = vmatprep.mubr.bf16.mxu0 %v3069
        %3870 = vmatmul.mubr.bf16.gmra.mrb[0].mxu0 %v3068
        %v3871 = vpop.f32.mrb[0].mxu0
        %v3872 = vadd.f32 %v3759, %v3871
        %v3873 = vpop.f32.mrb[0].mxu0
        %v3874 = vadd.f32 %v3761, %v3873
        %v3875 = vpop.f32.mrb[0].mxu0
        %v3876 = vadd.f32 %v3763, %v3875
        %v3877 = vpop.f32.mrb[0].mxu0
        %v3878 = vadd.f32 %v3765, %v3877
        %3879 = vmatprep.mubr.bf16.mxu0 %v3075
        %3880 = vmatmul.mubr.bf16.gmra.mrb[0].mxu0 %v3074
        %v3881 = vpop.f32.mrb[0].mxu0
        %v3882 = vadd.f32 %v3769, %v3881
        %v3883 = vpop.f32.mrb[0].mxu0
        %v3884 = vadd.f32 %v3771, %v3883
        %v3885 = vpop.f32.mrb[0].mxu0
        %v3886 = vadd.f32 %v3773, %v3885
        %v3887 = vpop.f32.mrb[0].mxu0
        %v3888 = vadd.f32 %v3775, %v3887
        %3889 = vmatprep.mubr.bf16.mxu0 %v3081
        %3890 = vmatmul.mubr.bf16.gmra.mrb[0].mxu0 %v3080
        %v3891 = vpop.f32.mrb[0].mxu0
        %v3892 = vadd.f32 %v3779, %v3891
        %v3893 = vpop.f32.mrb[0].mxu0
        %v3894 = vadd.f32 %v3781, %v3893
        %v3895 = vpop.f32.mrb[0].mxu0
        %v3896 = vadd.f32 %v3783, %v3895
        %v3897 = vpop.f32.mrb[0].mxu0
        %v3898 = vadd.f32 %v3785, %v3897
        %3899 = vdwg.mxu0
        %3900 = vmatprep.subr.bf16.mxu0 %v3547
        %3901 = vmatpush1.bf16.msra.mxu0 %v3546
        %3902 = vmatprep.subr.bf16.mxu0 %v3549
        %3903 = vmatpush1.bf16.msra.mxu0 %v3548
        %3904 = vmatprep.subr.bf16.mxu0 %v3551
        %3905 = vmatpush1.bf16.msra.mxu0 %v3550
        %3906 = vmatprep.subr.bf16.mxu0 %v3553
        %3907 = vmatpush1.bf16.msra.mxu0 %v3552
        %3908 = vmatprep.subr.bf16.mxu0 %v3555
        %3909 = vmatpush1.bf16.msra.mxu0 %v3554
        %3910 = vmatprep.subr.bf16.mxu0 %v3557
        %3911 = vmatpush1.bf16.msra.mxu0 %v3556
        %3912 = vmatprep.subr.bf16.mxu0 %v3559
        %3913 = vmatpush1.bf16.msra.mxu0 %v3558
        %3914 = vmatprep.subr.bf16.mxu0 %v3561
        %3915 = vmatpush1.bf16.msra.mxu0 %v3560
        %3916 = vmatprep.subr.bf16.mxu0 %v3563
        %3917 = vmatpush1.bf16.msra.mxu0 %v3562
        %3918 = vmatprep.subr.bf16.mxu0 %v3565
        %3919 = vmatpush1.bf16.msra.mxu0 %v3564
        %3920 = vmatprep.subr.bf16.mxu0 %v3567
        %3921 = vmatpush1.bf16.msra.mxu0 %v3566
        %3922 = vmatprep.subr.bf16.mxu0 %v3569
        %3923 = vmatpush1.bf16.msra.mxu0 %v3568
        %3924 = vmatprep.subr.bf16.mxu0 %v3571
        %3925 = vmatpush1.bf16.msra.mxu0 %v3570
        %3926 = vmatprep.subr.bf16.mxu0 %v3573
        %3927 = vmatpush1.bf16.msra.mxu0 %v3572
        %3928 = vmatprep.subr.bf16.mxu0 %v3575
        %3929 = vmatpush1.bf16.msra.mxu0 %v3574
        %3930 = vmatprep.subr.bf16.mxu0 %v3577
        %3931 = vmatpush1.bf16.msra.mxu0 %v3576
        %3932 = vmatprep.mubr.bf16.mxu0 %v3041
        %3933 = vmatmul.mubr.bf16.gmra.mrb[0].mxu0 %v3040
        %v3934 = vpop.f32.mrb[0].mxu0
        %v3935 = vadd.f32 %v3822, %v3934
        %v3936 = vpop.f32.mrb[0].mxu0
        %v3937 = vadd.f32 %v3824, %v3936
        %v3938 = vpop.f32.mrb[0].mxu0
        %v3939 = vadd.f32 %v3826, %v3938
        %v3940 = vpop.f32.mrb[0].mxu0
        %v3941 = vadd.f32 %v3828, %v3940
        %3942 = vmatprep.mubr.bf16.mxu0 %v3047
        %3943 = vmatmul.mubr.bf16.gmra.mrb[0].mxu0 %v3046
        %v3944 = vpop.f32.mrb[0].mxu0
        %v3945 = vadd.f32 %v3832, %v3944
        %v3946 = vpop.f32.mrb[0].mxu0
        %v3947 = vadd.f32 %v3834, %v3946
        %v3948 = vpop.f32.mrb[0].mxu0
        %v3949 = vadd.f32 %v3836, %v3948
        %v3950 = vpop.f32.mrb[0].mxu0
        %v3951 = vadd.f32 %v3838, %v3950
        %3952 = vmatprep.mubr.bf16.mxu0 %v3053
        %3953 = vmatmul.mubr.bf16.gmra.mrb[0].mxu0 %v3052
        %v3954 = vpop.f32.mrb[0].mxu0
        %v3955 = vadd.f32 %v3842, %v3954
        %v3956 = vpop.f32.mrb[0].mxu0
        %v3957 = vadd.f32 %v3844, %v3956
        %v3958 = vpop.f32.mrb[0].mxu0
        %v3959 = vadd.f32 %v3846, %v3958
        %v3960 = vpop.f32.mrb[0].mxu0
        %v3961 = vadd.f32 %v3848, %v3960
        %3962 = vmatprep.mubr.bf16.mxu0 %v3059
        %3963 = vmatmul.mubr.bf16.gmra.mrb[0].mxu0 %v3058
        %v3964 = vpop.f32.mrb[0].mxu0
        %v3965 = vadd.f32 %v3852, %v3964
        %v3966 = vpop.f32.mrb[0].mxu0
        %v3967 = vadd.f32 %v3854, %v3966
        %v3968 = vpop.f32.mrb[0].mxu0
        %v3969 = vadd.f32 %v3856, %v3968
        %v3970 = vpop.f32.mrb[0].mxu0
        %v3971 = vadd.f32 %v3858, %v3970
        %3972 = vmatprep.mubr.bf16.mxu0 %v3065
        %3973 = vmatmul.mubr.bf16.gmra.mrb[0].mxu0 %v3064
        %v3974 = vpop.f32.mrb[0].mxu0
        %v3975 = vadd.f32 %v3862, %v3974
        %v3976 = vpop.f32.mrb[0].mxu0
        %v3977 = vadd.f32 %v3864, %v3976
        %v3978 = vpop.f32.mrb[0].mxu0
        %v3979 = vadd.f32 %v3866, %v3978
        %v3980 = vpop.f32.mrb[0].mxu0
        %v3981 = vadd.f32 %v3868, %v3980
        %3982 = vmatprep.mubr.bf16.mxu0 %v3071
        %3983 = vmatmul.mubr.bf16.gmra.mrb[0].mxu0 %v3070
        %v3984 = vpop.f32.mrb[0].mxu0
        %v3985 = vadd.f32 %v3872, %v3984
        %v3986 = vpop.f32.mrb[0].mxu0
        %v3987 = vadd.f32 %v3874, %v3986
        %v3988 = vpop.f32.mrb[0].mxu0
        %v3989 = vadd.f32 %v3876, %v3988
        %v3990 = vpop.f32.mrb[0].mxu0
        %v3991 = vadd.f32 %v3878, %v3990
        %3992 = vmatprep.mubr.bf16.mxu0 %v3077
        %3993 = vmatmul.mubr.bf16.gmra.mrb[0].mxu0 %v3076
        %v3994 = vpop.f32.mrb[0].mxu0
        %v3995 = vadd.f32 %v3882, %v3994
        %v3996 = vpop.f32.mrb[0].mxu0
        %v3997 = vadd.f32 %v3884, %v3996
        %v3998 = vpop.f32.mrb[0].mxu0
        %v3999 = vadd.f32 %v3886, %v3998
        %v4000 = vpop.f32.mrb[0].mxu0
        %v4001 = vadd.f32 %v3888, %v4000
        %4002 = vmatprep.mubr.bf16.mxu0 %v3083
        %4003 = vmatmul.mubr.bf16.gmra.mrb[0].mxu0 %v3082
        %v4004 = vpop.f32.mrb[0].mxu0
        %v4005 = vadd.f32 %v3892, %v4004
        %v4006 = vpop.f32.mrb[0].mxu0
        %v4007 = vadd.f32 %v3894, %v4006
        %v4008 = vpop.f32.mrb[0].mxu0
        %v4009 = vadd.f32 %v3896, %v4008
        %v4010 = vpop.f32.mrb[0].mxu0
        %v4011 = vadd.f32 %v3898, %v4010
        %4012 = vdwg.mxu0
        %v4013 = vmax.f32 %v3935, 0.0
        %v4014 = vmax.f32 %v3937, 0.0
        %v4015 = vmax.f32 %v3939, 0.0
        %v4016 = vmax.f32 %v3941, 0.0
        %v4017 = vmax.f32 %v3945, 0.0
        %v4018 = vmax.f32 %v3947, 0.0
        %v4019 = vmax.f32 %v3949, 0.0
        %v4020 = vmax.f32 %v3951, 0.0
        %v4021 = vmax.f32 %v3955, 0.0
        %v4022 = vmax.f32 %v3957, 0.0
        %v4023 = vmax.f32 %v3959, 0.0
        %v4024 = vmax.f32 %v3961, 0.0
        %v4025 = vmax.f32 %v3965, 0.0
        %v4026 = vmax.f32 %v3967, 0.0
        %v4027 = vmax.f32 %v3969, 0.0
        %v4028 = vmax.f32 %v3971, 0.0
        %v4029 = vmax.f32 %v3975, 0.0
        %v4030 = vmax.f32 %v3977, 0.0
        %v4031 = vmax.f32 %v3979, 0.0
        %v4032 = vmax.f32 %v3981, 0.0
        %v4033 = vmax.f32 %v3985, 0.0
        %v4034 = vmax.f32 %v3987, 0.0
        %v4035 = vmax.f32 %v3989, 0.0
        %v4036 = vmax.f32 %v3991, 0.0
        %v4037 = vmax.f32 %v3995, 0.0
        %v4038 = vmax.f32 %v3997, 0.0
        %v4039 = vmax.f32 %v3999, 0.0
        %v4040 = vmax.f32 %v4001, 0.0
        %v4041 = vmax.f32 %v4005, 0.0
        %v4042 = vmax.f32 %v4007, 0.0
        %v4043 = vmax.f32 %v4009, 0.0
        %v4044 = vmax.f32 %v4011, 0.0
        %v4077 = vrot.slane %v4013, 7
        %v4078 = vrot.slane %v4014, 7
        %v4079 = vrot.slane %v4015, 7
        %v4080 = vsel %vm346, %v4077, %v4079
        %v4081 = vrot.slane %v4016, 7
        %v4082 = vsel %vm346, %v4078, %v4081
        %v4083 = vrot.slane %v4017, 7
        %v4084 = vsel %vm346, %v4079, %v4083
        %v4085 = vrot.slane %v4018, 7
        %v4086 = vsel %vm346, %v4081, %v4085
        %v4087 = vrot.slane %v4019, 7
        %v4088 = vsel %vm346, %v4083, %v4087
        %v4089 = vrot.slane %v4020, 7
        %v4090 = vsel %vm346, %v4085, %v4089
        %v4091 = vrot.slane %v4021, 7
        %v4092 = vsel %vm346, %v4087, %v4091
        %v4093 = vrot.slane %v4022, 7
        %v4094 = vsel %vm346, %v4089, %v4093
        %v4095 = vrot.slane %v4023, 7
        %v4096 = vsel %vm346, %v4091, %v4095
        %v4097 = vrot.slane %v4024, 7
        %v4098 = vsel %vm346, %v4093, %v4097
        %v4099 = vrot.slane %v4025, 7
        %v4100 = vsel %vm346, %v4095, %v4099
        %v4101 = vrot.slane %v4026, 7
        %v4102 = vsel %vm346, %v4097, %v4101
        %v4103 = vrot.slane %v4027, 7
        %v4104 = vsel %vm346, %v4099, %v4103
        %v4105 = vrot.slane %v4028, 7
        %v4106 = vsel %vm346, %v4101, %v4105
        %v4107 = vrot.slane %v4029, 7
        %v4108 = vsel %vm346, %v4103, %v4107
        %v4109 = vrot.slane %v4030, 7
        %v4110 = vsel %vm346, %v4105, %v4109
        %v4111 = vrot.slane %v4031, 7
        %v4112 = vsel %vm346, %v4107, %v4111
        %v4113 = vrot.slane %v4032, 7
        %v4114 = vsel %vm346, %v4109, %v4113
        %v4115 = vrot.slane %v4033, 7
        %v4116 = vsel %vm346, %v4111, %v4115
        %v4117 = vrot.slane %v4034, 7
        %v4118 = vsel %vm346, %v4113, %v4117
        %v4119 = vrot.slane %v4035, 7
        %v4120 = vsel %vm346, %v4115, %v4119
        %v4121 = vrot.slane %v4036, 7
        %v4122 = vsel %vm346, %v4117, %v4121
        %v4123 = vrot.slane %v4037, 7
        %v4124 = vsel %vm346, %v4119, %v4123
        %v4125 = vrot.slane %v4038, 7
        %v4126 = vsel %vm346, %v4121, %v4125
        %v4127 = vrot.slane %v4039, 7
        %v4128 = vsel %vm346, %v4123, %v4127
        %v4129 = vrot.slane %v4040, 7
        %v4130 = vsel %vm346, %v4125, %v4129
        %v4131 = vrot.slane %v4041, 7
        %v4132 = vsel %vm346, %v4127, %v4131
        %v4133 = vrot.slane %v4042, 7
        %v4134 = vsel %vm346, %v4129, %v4133
        %v4135 = vrot.slane %v4043, 7
        %v4136 = vsel %vm346, %v4131, %v4135
        %v4137 = vrot.slane %v4044, 7
        %v4138 = vsel %vm346, %v4133, %v4137
        %v4171 = vsel %vm346, 0.0, %v4077
        %v4172 = vsel %vm346, 0.0, %v4078
        %v4173 = vrot.slane %v4013, 1
        %v4174 = vrot.slane %v4015, 1
        %v4175 = vsel %vm443, %v4173, %v4174
        %v4176 = vrot.slane %v4014, 1
        %v4177 = vrot.slane %v4016, 1
        %v4178 = vsel %vm443, %v4176, %v4177
        %v4179 = vrot.slane %v4017, 1
        %v4180 = vsel %vm443, %v4174, %v4179
        %v4181 = vrot.slane %v4018, 1
        %v4182 = vsel %vm443, %v4177, %v4181
        %v4183 = vrot.slane %v4019, 1
        %v4184 = vsel %vm443, %v4179, %v4183
        %v4185 = vrot.slane %v4020, 1
        %v4186 = vsel %vm443, %v4181, %v4185
        %v4187 = vrot.slane %v4021, 1
        %v4188 = vsel %vm443, %v4183, %v4187
        %v4189 = vrot.slane %v4022, 1
        %v4190 = vsel %vm443, %v4185, %v4189
        %v4191 = vrot.slane %v4023, 1
        %v4192 = vsel %vm443, %v4187, %v4191
        %v4193 = vrot.slane %v4024, 1
        %v4194 = vsel %vm443, %v4189, %v4193
        %v4195 = vrot.slane %v4025, 1
        %v4196 = vsel %vm443, %v4191, %v4195
        %v4197 = vrot.slane %v4026, 1
        %v4198 = vsel %vm443, %v4193, %v4197
        %v4199 = vrot.slane %v4027, 1
        %v4200 = vsel %vm443, %v4195, %v4199
        %v4201 = vrot.slane %v4028, 1
        %v4202 = vsel %vm443, %v4197, %v4201
        %v4203 = vrot.slane %v4029, 1
        %v4204 = vsel %vm443, %v4199, %v4203
        %v4205 = vrot.slane %v4030, 1
        %v4206 = vsel %vm443, %v4201, %v4205
        %v4207 = vrot.slane %v4031, 1
        %v4208 = vsel %vm443, %v4203, %v4207
        %v4209 = vrot.slane %v4032, 1
        %v4210 = vsel %vm443, %v4205, %v4209
        %v4211 = vrot.slane %v4033, 1
        %v4212 = vsel %vm443, %v4207, %v4211
        %v4213 = vrot.slane %v4034, 1
        %v4214 = vsel %vm443, %v4209, %v4213
        %v4215 = vrot.slane %v4035, 1
        %v4216 = vsel %vm443, %v4211, %v4215
        %v4217 = vrot.slane %v4036, 1
        %v4218 = vsel %vm443, %v4213, %v4217
        %v4219 = vrot.slane %v4037, 1
        %v4220 = vsel %vm443, %v4215, %v4219
        %v4221 = vrot.slane %v4038, 1
        %v4222 = vsel %vm443, %v4217, %v4221
        %v4223 = vrot.slane %v4039, 1
        %v4224 = vsel %vm443, %v4219, %v4223
        %v4225 = vrot.slane %v4040, 1
        %v4226 = vsel %vm443, %v4221, %v4225
        %v4227 = vrot.slane %v4041, 1
        %v4228 = vsel %vm443, %v4223, %v4227
        %v4229 = vrot.slane %v4042, 1
        %v4230 = vsel %vm443, %v4225, %v4229
        %v4231 = vrot.slane %v4043, 1
        %v4232 = vsel %vm443, %v4227, %v4231
        %v4233 = vrot.slane %v4044, 1
        %v4234 = vsel %vm443, %v4229, %v4233
        %v4267 = vsel %vm443, %v4231, 0.0
        %v4268 = vsel %vm443, %v4233, 0.0
        %v4269 = vpack.c.bf16 %v4080, %v4171
        %v4270 = vpack.c.bf16 %v4082, %v4172
        %v4271 = vpack.c.bf16 %v4015, %v4013
        %v4272 = vpack.c.bf16 %v4016, %v4014
        %v4273 = vpack.c.bf16 %v4180, %v4175
        %v4274 = vpack.c.bf16 %v4182, %v4178
        %v4275 = vpack.c.bf16 %v4088, %v4084
        %v4276 = vpack.c.bf16 %v4090, %v4086
        %v4277 = vpack.c.bf16 %v4019, %v4017
        %v4278 = vpack.c.bf16 %v4020, %v4018
        %v4279 = vpack.c.bf16 %v4188, %v4184
        %v4280 = vpack.c.bf16 %v4190, %v4186
        %v4281 = vpack.c.bf16 %v4096, %v4092
        %v4282 = vpack.c.bf16 %v4098, %v4094
        %v4283 = vpack.c.bf16 %v4023, %v4021
        %v4284 = vpack.c.bf16 %v4024, %v4022
        %v4285 = vpack.c.bf16 %v4196, %v4192
        %v4286 = vpack.c.bf16 %v4198, %v4194
        %v4287 = vpack.c.bf16 %v4104, %v4100
        %v4288 = vpack.c.bf16 %v4106, %v4102
        %v4289 = vpack.c.bf16 %v4027, %v4025
        %v4290 = vpack.c.bf16 %v4028, %v4026
        %v4291 = vpack.c.bf16 %v4204, %v4200
        %v4292 = vpack.c.bf16 %v4206, %v4202
        %v4293 = vpack.c.bf16 %v4112, %v4108
        %v4294 = vpack.c.bf16 %v4114, %v4110
        %v4295 = vpack.c.bf16 %v4031, %v4029
        %v4296 = vpack.c.bf16 %v4032, %v4030
        %v4297 = vpack.c.bf16 %v4212, %v4208
        %v4298 = vpack.c.bf16 %v4214, %v4210
        %v4299 = vpack.c.bf16 %v4120, %v4116
        %v4300 = vpack.c.bf16 %v4122, %v4118
        %v4301 = vpack.c.bf16 %v4035, %v4033
        %v4302 = vpack.c.bf16 %v4036, %v4034
        %v4303 = vpack.c.bf16 %v4220, %v4216
        %v4304 = vpack.c.bf16 %v4222, %v4218
        %v4305 = vpack.c.bf16 %v4128, %v4124
        %v4306 = vpack.c.bf16 %v4130, %v4126
        %v4307 = vpack.c.bf16 %v4039, %v4037
        %v4308 = vpack.c.bf16 %v4040, %v4038
        %v4309 = vpack.c.bf16 %v4228, %v4224
        %v4310 = vpack.c.bf16 %v4230, %v4226
        %v4311 = vpack.c.bf16 %v4136, %v4132
        %v4312 = vpack.c.bf16 %v4138, %v4134
        %v4313 = vpack.c.bf16 %v4043, %v4041
        %v4314 = vpack.c.bf16 %v4044, %v4042
        %v4315 = vpack.c.bf16 %v4267, %v4232
        %v4316 = vpack.c.bf16 %v4268, %v4234
        %s4317 = scalar_lea.vmem [#allocation5], 2304
        %v4318 = vld [vmem:[%s4317] sm:$0xff]
        %v4319 = vld [vmem:[%s4317 + $0x8] sm:$0xff]
        %v4320 = vld [vmem:[%s4317 + $0x10] sm:$0xff]
        %v4321 = vld [vmem:[%s4317 + $0x18] sm:$0xff]
        %v4322 = vld [vmem:[%s4317 + $0x20] sm:$0xff]
        %v4323 = vld [vmem:[%s4317 + $0x28] sm:$0xff]
        %v4324 = vld [vmem:[%s4317 + $0x30] sm:$0xff]
        %v4325 = vld [vmem:[%s4317 + $0x38] sm:$0xff]
        %v4326 = vld [vmem:[%s4317 + $0x40] sm:$0xff]
        %v4327 = vld [vmem:[%s4317 + $0x48] sm:$0xff]
        %v4328 = vld [vmem:[%s4317 + $0x50] sm:$0xff]
        %v4329 = vld [vmem:[%s4317 + $0x58] sm:$0xff]
        %v4330 = vld [vmem:[%s4317 + $0x60] sm:$0xff]
        %v4331 = vld [vmem:[%s4317 + $0x68] sm:$0xff]
        %v4332 = vld [vmem:[%s4317 + $0x70] sm:$0xff]
        %v4333 = vld [vmem:[%s4317 + $0x78] sm:$0xff]
        %v4334 = vld [vmem:[%s4317 + $0x80] sm:$0xff]
        %v4335 = vld [vmem:[%s4317 + $0x88] sm:$0xff]
        %v4336 = vld [vmem:[%s4317 + $0x90] sm:$0xff]
        %v4337 = vld [vmem:[%s4317 + $0x98] sm:$0xff]
        %v4338 = vld [vmem:[%s4317 + $0xa0] sm:$0xff]
        %v4339 = vld [vmem:[%s4317 + $0xa8] sm:$0xff]
        %v4340 = vld [vmem:[%s4317 + $0xb0] sm:$0xff]
        %v4341 = vld [vmem:[%s4317 + $0xb8] sm:$0xff]
        %v4342 = vld [vmem:[%s4317 + $0xc0] sm:$0xff]
        %v4343 = vld [vmem:[%s4317 + $0xc8] sm:$0xff]
        %v4344 = vld [vmem:[%s4317 + $0xd0] sm:$0xff]
        %v4345 = vld [vmem:[%s4317 + $0xd8] sm:$0xff]
        %v4346 = vld [vmem:[%s4317 + $0xe0] sm:$0xff]
        %v4347 = vld [vmem:[%s4317 + $0xe8] sm:$0xff]
        %v4348 = vld [vmem:[%s4317 + $0xf0] sm:$0xff]
        %v4349 = vld [vmem:[%s4317 + $0xf8] sm:$0xff]
        %v4350 = vld [vmem:[%s4317 + $0x100] sm:$0xff]
        %v4351 = vld [vmem:[%s4317 + $0x108] sm:$0xff]
        %v4352 = vld [vmem:[%s4317 + $0x110] sm:$0xff]
        %v4353 = vld [vmem:[%s4317 + $0x118] sm:$0xff]
        %v4354 = vld [vmem:[%s4317 + $0x120] sm:$0xff]
        %v4355 = vld [vmem:[%s4317 + $0x128] sm:$0xff]
        %v4356 = vld [vmem:[%s4317 + $0x130] sm:$0xff]
        %v4357 = vld [vmem:[%s4317 + $0x138] sm:$0xff]
        %v4358 = vld [vmem:[%s4317 + $0x140] sm:$0xff]
        %v4359 = vld [vmem:[%s4317 + $0x148] sm:$0xff]
        %v4360 = vld [vmem:[%s4317 + $0x150] sm:$0xff]
        %v4361 = vld [vmem:[%s4317 + $0x158] sm:$0xff]
        %v4362 = vld [vmem:[%s4317 + $0x160] sm:$0xff]
        %v4363 = vld [vmem:[%s4317 + $0x168] sm:$0xff]
        %v4364 = vld [vmem:[%s4317 + $0x170] sm:$0xff]
        %v4365 = vld [vmem:[%s4317 + $0x178] sm:$0xff]
        %v4366 = vld [vmem:[%s4317 + $0x180] sm:$0xff]
        %v4367 = vld [vmem:[%s4317 + $0x188] sm:$0xff]
        %v4368 = vld [vmem:[%s4317 + $0x190] sm:$0xff]
        %v4369 = vld [vmem:[%s4317 + $0x198] sm:$0xff]
        %v4370 = vld [vmem:[%s4317 + $0x1a0] sm:$0xff]
        %v4371 = vld [vmem:[%s4317 + $0x1a8] sm:$0xff]
        %v4372 = vld [vmem:[%s4317 + $0x1b0] sm:$0xff]
        %v4373 = vld [vmem:[%s4317 + $0x1b8] sm:$0xff]
        %v4374 = vld [vmem:[%s4317 + $0x1c0] sm:$0xff]
        %v4375 = vld [vmem:[%s4317 + $0x1c8] sm:$0xff]
        %v4376 = vld [vmem:[%s4317 + $0x1d0] sm:$0xff]
        %v4377 = vld [vmem:[%s4317 + $0x1d8] sm:$0xff]
        %v4378 = vld [vmem:[%s4317 + $0x1e0] sm:$0xff]
        %v4379 = vld [vmem:[%s4317 + $0x1e8] sm:$0xff]
        %v4380 = vld [vmem:[%s4317 + $0x1f0] sm:$0xff]
        %v4381 = vld [vmem:[%s4317 + $0x1f8] sm:$0xff]
        %v4382 = vld [vmem:[%s4317 + $0x200] sm:$0xff]
        %v4383 = vld [vmem:[%s4317 + $0x208] sm:$0xff]
        %v4384 = vld [vmem:[%s4317 + $0x210] sm:$0xff]
        %v4385 = vld [vmem:[%s4317 + $0x218] sm:$0xff]
        %v4386 = vld [vmem:[%s4317 + $0x220] sm:$0xff]
        %v4387 = vld [vmem:[%s4317 + $0x228] sm:$0xff]
        %v4388 = vld [vmem:[%s4317 + $0x230] sm:$0xff]
        %v4389 = vld [vmem:[%s4317 + $0x238] sm:$0xff]
        %v4390 = vld [vmem:[%s4317 + $0x240] sm:$0xff]
        %v4391 = vld [vmem:[%s4317 + $0x248] sm:$0xff]
        %v4392 = vld [vmem:[%s4317 + $0x250] sm:$0xff]
        %v4393 = vld [vmem:[%s4317 + $0x258] sm:$0xff]
        %v4394 = vld [vmem:[%s4317 + $0x260] sm:$0xff]
        %v4395 = vld [vmem:[%s4317 + $0x268] sm:$0xff]
        %v4396 = vld [vmem:[%s4317 + $0x270] sm:$0xff]
        %v4397 = vld [vmem:[%s4317 + $0x278] sm:$0xff]
        %v4398 = vld [vmem:[%s4317 + $0x280] sm:$0xff]
        %v4399 = vld [vmem:[%s4317 + $0x288] sm:$0xff]
        %v4400 = vld [vmem:[%s4317 + $0x290] sm:$0xff]
        %v4401 = vld [vmem:[%s4317 + $0x298] sm:$0xff]
        %v4402 = vld [vmem:[%s4317 + $0x2a0] sm:$0xff]
        %v4403 = vld [vmem:[%s4317 + $0x2a8] sm:$0xff]
        %v4404 = vld [vmem:[%s4317 + $0x2b0] sm:$0xff]
        %v4405 = vld [vmem:[%s4317 + $0x2b8] sm:$0xff]
        %v4406 = vld [vmem:[%s4317 + $0x2c0] sm:$0xff]
        %v4407 = vld [vmem:[%s4317 + $0x2c8] sm:$0xff]
        %v4408 = vld [vmem:[%s4317 + $0x2d0] sm:$0xff]
        %v4409 = vld [vmem:[%s4317 + $0x2d8] sm:$0xff]
        %v4410 = vld [vmem:[%s4317 + $0x2e0] sm:$0xff]
        %v4411 = vld [vmem:[%s4317 + $0x2e8] sm:$0xff]
        %v4412 = vld [vmem:[%s4317 + $0x2f0] sm:$0xff]
        %v4413 = vld [vmem:[%s4317 + $0x2f8] sm:$0xff]
        %s4414 = scalar_lea.vmem [#allocation7], 6
        %v4415 = vld [vmem:[%s4414] sm:$0x3]
        %v4417 = vlaneseq
        %v4418 = vshrl.u32 %v4417, 7
        %v4419 = vsub.s32 0, %v4418
        %v4420 = vrot.slane %v4415, %v4419
        %v4421 = vlaneseq
        %v4422 = vshrl.u32 %v4421, 7
        %v4423 = vsub.s32 1, %v4422
        %v4424 = vrot.slane %v4415, %v4423
        %v4523 = vunpack.c.l.b16 %v4318
        %v4524 = vunpack.c.h.b16 %v4318
        %v4525 = vunpack.c.l.b16 %v4319
        %v4526 = vunpack.c.h.b16 %v4319
        %v4527 = vunpack.c.l.b16 %v4320
        %v4528 = vunpack.c.h.b16 %v4320
        %v4529 = vunpack.c.l.b16 %v4321
        %v4530 = vunpack.c.h.b16 %v4321
        %v4531 = vunpack.c.l.b16 %v4322
        %v4532 = vunpack.c.h.b16 %v4322
        %v4533 = vunpack.c.l.b16 %v4323
        %v4534 = vunpack.c.h.b16 %v4323
        %v4535 = vunpack.c.l.b16 %v4324
        %v4536 = vunpack.c.h.b16 %v4324
        %v4537 = vunpack.c.l.b16 %v4325
        %v4538 = vunpack.c.h.b16 %v4325
        %v4539 = vunpack.c.l.b16 %v4326
        %v4540 = vunpack.c.h.b16 %v4326
        %v4541 = vunpack.c.l.b16 %v4327
        %v4542 = vunpack.c.h.b16 %v4327
        %v4543 = vunpack.c.l.b16 %v4328
        %v4544 = vunpack.c.h.b16 %v4328
        %v4545 = vunpack.c.l.b16 %v4329
        %v4546 = vunpack.c.h.b16 %v4329
        %v4547 = vunpack.c.l.b16 %v4330
        %v4548 = vunpack.c.h.b16 %v4330
        %v4549 = vunpack.c.l.b16 %v4331
        %v4550 = vunpack.c.h.b16 %v4331
        %v4551 = vunpack.c.l.b16 %v4332
        %v4552 = vunpack.c.h.b16 %v4332
        %v4553 = vunpack.c.l.b16 %v4333
        %v4554 = vunpack.c.h.b16 %v4333
        %v4555 = vunpack.c.l.b16 %v4334
        %v4556 = vunpack.c.h.b16 %v4334
        %v4557 = vunpack.c.l.b16 %v4335
        %v4558 = vunpack.c.h.b16 %v4335
        %v4559 = vunpack.c.l.b16 %v4336
        %v4560 = vunpack.c.h.b16 %v4336
        %v4561 = vunpack.c.l.b16 %v4337
        %v4562 = vunpack.c.h.b16 %v4337
        %v4563 = vunpack.c.l.b16 %v4338
        %v4564 = vunpack.c.h.b16 %v4338
        %v4565 = vunpack.c.l.b16 %v4339
        %v4566 = vunpack.c.h.b16 %v4339
        %v4567 = vunpack.c.l.b16 %v4340
        %v4568 = vunpack.c.h.b16 %v4340
        %v4569 = vunpack.c.l.b16 %v4341
        %v4570 = vunpack.c.h.b16 %v4341
        %v4571 = vunpack.c.l.b16 %v4342
        %v4572 = vunpack.c.h.b16 %v4342
        %v4573 = vunpack.c.l.b16 %v4343
        %v4574 = vunpack.c.h.b16 %v4343
        %v4575 = vunpack.c.l.b16 %v4344
        %v4576 = vunpack.c.h.b16 %v4344
        %v4577 = vunpack.c.l.b16 %v4345
        %v4578 = vunpack.c.h.b16 %v4345
        %v4579 = vunpack.c.l.b16 %v4346
        %v4580 = vunpack.c.h.b16 %v4346
        %v4581 = vunpack.c.l.b16 %v4347
        %v4582 = vunpack.c.h.b16 %v4347
        %v4583 = vunpack.c.l.b16 %v4348
        %v4584 = vunpack.c.h.b16 %v4348
        %v4585 = vunpack.c.l.b16 %v4349
        %v4586 = vunpack.c.h.b16 %v4349
        %v4587 = vunpack.c.l.b16 %v4350
        %v4588 = vunpack.c.h.b16 %v4350
        %v4589 = vunpack.c.l.b16 %v4351
        %v4590 = vunpack.c.h.b16 %v4351
        %v4591 = vunpack.c.l.b16 %v4352
        %v4592 = vunpack.c.h.b16 %v4352
        %v4593 = vunpack.c.l.b16 %v4353
        %v4594 = vunpack.c.h.b16 %v4353
        %v4595 = vunpack.c.l.b16 %v4354
        %v4596 = vunpack.c.h.b16 %v4354
        %v4597 = vunpack.c.l.b16 %v4355
        %v4598 = vunpack.c.h.b16 %v4355
        %v4599 = vunpack.c.l.b16 %v4356
        %v4600 = vunpack.c.h.b16 %v4356
        %v4601 = vunpack.c.l.b16 %v4357
        %v4602 = vunpack.c.h.b16 %v4357
        %v4603 = vunpack.c.l.b16 %v4358
        %v4604 = vunpack.c.h.b16 %v4358
        %v4605 = vunpack.c.l.b16 %v4359
        %v4606 = vunpack.c.h.b16 %v4359
        %v4607 = vunpack.c.l.b16 %v4360
        %v4608 = vunpack.c.h.b16 %v4360
        %v4609 = vunpack.c.l.b16 %v4361
        %v4610 = vunpack.c.h.b16 %v4361
        %v4611 = vunpack.c.l.b16 %v4362
        %v4612 = vunpack.c.h.b16 %v4362
        %v4613 = vunpack.c.l.b16 %v4363
        %v4614 = vunpack.c.h.b16 %v4363
        %v4615 = vunpack.c.l.b16 %v4364
        %v4616 = vunpack.c.h.b16 %v4364
        %v4617 = vunpack.c.l.b16 %v4365
        %v4618 = vunpack.c.h.b16 %v4365
        %v4619 = vunpack.c.l.b16 %v4366
        %v4620 = vunpack.c.h.b16 %v4366
        %v4621 = vunpack.c.l.b16 %v4367
        %v4622 = vunpack.c.h.b16 %v4367
        %v4623 = vunpack.c.l.b16 %v4368
        %v4624 = vunpack.c.h.b16 %v4368
        %v4625 = vunpack.c.l.b16 %v4369
        %v4626 = vunpack.c.h.b16 %v4369
        %v4627 = vunpack.c.l.b16 %v4370
        %v4628 = vunpack.c.h.b16 %v4370
        %v4629 = vunpack.c.l.b16 %v4371
        %v4630 = vunpack.c.h.b16 %v4371
        %v4631 = vunpack.c.l.b16 %v4372
        %v4632 = vunpack.c.h.b16 %v4372
        %v4633 = vunpack.c.l.b16 %v4373
        %v4634 = vunpack.c.h.b16 %v4373
        %v4635 = vunpack.c.l.b16 %v4374
        %v4636 = vunpack.c.h.b16 %v4374
        %v4637 = vunpack.c.l.b16 %v4375
        %v4638 = vunpack.c.h.b16 %v4375
        %v4639 = vunpack.c.l.b16 %v4376
        %v4640 = vunpack.c.h.b16 %v4376
        %v4641 = vunpack.c.l.b16 %v4377
        %v4642 = vunpack.c.h.b16 %v4377
        %v4643 = vunpack.c.l.b16 %v4378
        %v4644 = vunpack.c.h.b16 %v4378
        %v4645 = vunpack.c.l.b16 %v4379
        %v4646 = vunpack.c.h.b16 %v4379
        %v4647 = vunpack.c.l.b16 %v4380
        %v4648 = vunpack.c.h.b16 %v4380
        %v4649 = vunpack.c.l.b16 %v4381
        %v4650 = vunpack.c.h.b16 %v4381
        %v4651 = vunpack.c.l.b16 %v4382
        %v4652 = vunpack.c.h.b16 %v4382
        %v4653 = vunpack.c.l.b16 %v4383
        %v4654 = vunpack.c.h.b16 %v4383
        %v4655 = vunpack.c.l.b16 %v4384
        %v4656 = vunpack.c.h.b16 %v4384
        %v4657 = vunpack.c.l.b16 %v4385
        %v4658 = vunpack.c.h.b16 %v4385
        %v4659 = vunpack.c.l.b16 %v4386
        %v4660 = vunpack.c.h.b16 %v4386
        %v4661 = vunpack.c.l.b16 %v4387
        %v4662 = vunpack.c.h.b16 %v4387
        %v4663 = vunpack.c.l.b16 %v4388
        %v4664 = vunpack.c.h.b16 %v4388
        %v4665 = vunpack.c.l.b16 %v4389
        %v4666 = vunpack.c.h.b16 %v4389
        %v4667 = vunpack.c.l.b16 %v4390
        %v4668 = vunpack.c.h.b16 %v4390
        %v4669 = vunpack.c.l.b16 %v4391
        %v4670 = vunpack.c.h.b16 %v4391
        %v4671 = vunpack.c.l.b16 %v4392
        %v4672 = vunpack.c.h.b16 %v4392
        %v4673 = vunpack.c.l.b16 %v4393
        %v4674 = vunpack.c.h.b16 %v4393
        %v4675 = vunpack.c.l.b16 %v4394
        %v4676 = vunpack.c.h.b16 %v4394
        %v4677 = vunpack.c.l.b16 %v4395
        %v4678 = vunpack.c.h.b16 %v4395
        %v4679 = vunpack.c.l.b16 %v4396
        %v4680 = vunpack.c.h.b16 %v4396
        %v4681 = vunpack.c.l.b16 %v4397
        %v4682 = vunpack.c.h.b16 %v4397
        %v4683 = vunpack.c.l.b16 %v4398
        %v4684 = vunpack.c.h.b16 %v4398
        %v4685 = vunpack.c.l.b16 %v4399
        %v4686 = vunpack.c.h.b16 %v4399
        %v4687 = vunpack.c.l.b16 %v4400
        %v4688 = vunpack.c.h.b16 %v4400
        %v4689 = vunpack.c.l.b16 %v4401
        %v4690 = vunpack.c.h.b16 %v4401
        %v4691 = vunpack.c.l.b16 %v4402
        %v4692 = vunpack.c.h.b16 %v4402
        %v4693 = vunpack.c.l.b16 %v4403
        %v4694 = vunpack.c.h.b16 %v4403
        %v4695 = vunpack.c.l.b16 %v4404
        %v4696 = vunpack.c.h.b16 %v4404
        %v4697 = vunpack.c.l.b16 %v4405
        %v4698 = vunpack.c.h.b16 %v4405
        %v4699 = vunpack.c.l.b16 %v4406
        %v4700 = vunpack.c.h.b16 %v4406
        %v4701 = vunpack.c.l.b16 %v4407
        %v4702 = vunpack.c.h.b16 %v4407
        %v4703 = vunpack.c.l.b16 %v4408
        %v4704 = vunpack.c.h.b16 %v4408
        %v4705 = vunpack.c.l.b16 %v4409
        %v4706 = vunpack.c.h.b16 %v4409
        %v4707 = vunpack.c.l.b16 %v4410
        %v4708 = vunpack.c.h.b16 %v4410
        %v4709 = vunpack.c.l.b16 %v4411
        %v4710 = vunpack.c.h.b16 %v4411
        %v4711 = vunpack.c.l.b16 %v4412
        %v4712 = vunpack.c.h.b16 %v4412
        %v4713 = vunpack.c.l.b16 %v4413
        %v4714 = vunpack.c.h.b16 %v4413
        %v4715 = vpack.c.b16 %v4525, %v4523
        %v4716 = vpack.c.b16 %v4526, %v4524
        %v4717 = vpack.c.b16 %v4529, %v4527
        %v4718 = vpack.c.b16 %v4530, %v4528
        %v4719 = vpack.c.b16 %v4533, %v4531
        %v4720 = vpack.c.b16 %v4534, %v4532
        %v4721 = vpack.c.b16 %v4537, %v4535
        %v4722 = vpack.c.b16 %v4538, %v4536
        %v4723 = vpack.c.b16 %v4541, %v4539
        %v4724 = vpack.c.b16 %v4542, %v4540
        %v4725 = vpack.c.b16 %v4545, %v4543
        %v4726 = vpack.c.b16 %v4546, %v4544
        %v4727 = vpack.c.b16 %v4549, %v4547
        %v4728 = vpack.c.b16 %v4550, %v4548
        %v4729 = vpack.c.b16 %v4553, %v4551
        %v4730 = vpack.c.b16 %v4554, %v4552
        %v4731 = vpack.c.b16 %v4557, %v4555
        %v4732 = vpack.c.b16 %v4558, %v4556
        %v4733 = vpack.c.b16 %v4561, %v4559
        %v4734 = vpack.c.b16 %v4562, %v4560
        %v4735 = vpack.c.b16 %v4565, %v4563
        %v4736 = vpack.c.b16 %v4566, %v4564
        %v4737 = vpack.c.b16 %v4569, %v4567
        %v4738 = vpack.c.b16 %v4570, %v4568
        %v4739 = vpack.c.b16 %v4573, %v4571
        %v4740 = vpack.c.b16 %v4574, %v4572
        %v4741 = vpack.c.b16 %v4577, %v4575
        %v4742 = vpack.c.b16 %v4578, %v4576
        %v4743 = vpack.c.b16 %v4581, %v4579
        %v4744 = vpack.c.b16 %v4582, %v4580
        %v4745 = vpack.c.b16 %v4585, %v4583
        %v4746 = vpack.c.b16 %v4586, %v4584
        %v4747 = vpack.c.b16 %v4589, %v4587
        %v4748 = vpack.c.b16 %v4590, %v4588
        %v4749 = vpack.c.b16 %v4593, %v4591
        %v4750 = vpack.c.b16 %v4594, %v4592
        %v4751 = vpack.c.b16 %v4597, %v4595
        %v4752 = vpack.c.b16 %v4598, %v4596
        %v4753 = vpack.c.b16 %v4601, %v4599
        %v4754 = vpack.c.b16 %v4602, %v4600
        %v4755 = vpack.c.b16 %v4605, %v4603
        %v4756 = vpack.c.b16 %v4606, %v4604
        %v4757 = vpack.c.b16 %v4609, %v4607
        %v4758 = vpack.c.b16 %v4610, %v4608
        %v4759 = vpack.c.b16 %v4613, %v4611
        %v4760 = vpack.c.b16 %v4614, %v4612
        %v4761 = vpack.c.b16 %v4617, %v4615
        %v4762 = vpack.c.b16 %v4618, %v4616
        %v4763 = vpack.c.b16 %v4621, %v4619
        %v4764 = vpack.c.b16 %v4622, %v4620
        %v4765 = vpack.c.b16 %v4625, %v4623
        %v4766 = vpack.c.b16 %v4626, %v4624
        %v4767 = vpack.c.b16 %v4629, %v4627
        %v4768 = vpack.c.b16 %v4630, %v4628
        %v4769 = vpack.c.b16 %v4633, %v4631
        %v4770 = vpack.c.b16 %v4634, %v4632
        %v4771 = vpack.c.b16 %v4637, %v4635
        %v4772 = vpack.c.b16 %v4638, %v4636
        %v4773 = vpack.c.b16 %v4641, %v4639
        %v4774 = vpack.c.b16 %v4642, %v4640
        %v4775 = vpack.c.b16 %v4645, %v4643
        %v4776 = vpack.c.b16 %v4646, %v4644
        %v4777 = vpack.c.b16 %v4649, %v4647
        %v4778 = vpack.c.b16 %v4650, %v4648
        %v4779 = vpack.c.b16 %v4653, %v4651
        %v4780 = vpack.c.b16 %v4654, %v4652
        %v4781 = vpack.c.b16 %v4657, %v4655
        %v4782 = vpack.c.b16 %v4658, %v4656
        %v4783 = vpack.c.b16 %v4661, %v4659
        %v4784 = vpack.c.b16 %v4662, %v4660
        %v4785 = vpack.c.b16 %v4665, %v4663
        %v4786 = vpack.c.b16 %v4666, %v4664
        %v4787 = vpack.c.b16 %v4669, %v4667
        %v4788 = vpack.c.b16 %v4670, %v4668
        %v4789 = vpack.c.b16 %v4673, %v4671
        %v4790 = vpack.c.b16 %v4674, %v4672
        %v4791 = vpack.c.b16 %v4677, %v4675
        %v4792 = vpack.c.b16 %v4678, %v4676
        %v4793 = vpack.c.b16 %v4681, %v4679
        %v4794 = vpack.c.b16 %v4682, %v4680
        %v4795 = vpack.c.b16 %v4685, %v4683
        %v4796 = vpack.c.b16 %v4686, %v4684
        %v4797 = vpack.c.b16 %v4689, %v4687
        %v4798 = vpack.c.b16 %v4690, %v4688
        %v4799 = vpack.c.b16 %v4693, %v4691
        %v4800 = vpack.c.b16 %v4694, %v4692
        %v4801 = vpack.c.b16 %v4697, %v4695
        %v4802 = vpack.c.b16 %v4698, %v4696
        %v4803 = vpack.c.b16 %v4701, %v4699
        %v4804 = vpack.c.b16 %v4702, %v4700
        %v4805 = vpack.c.b16 %v4705, %v4703
        %v4806 = vpack.c.b16 %v4706, %v4704
        %v4807 = vpack.c.b16 %v4709, %v4707
        %v4808 = vpack.c.b16 %v4710, %v4708
        %v4809 = vpack.c.b16 %v4713, %v4711
        %v4810 = vpack.c.b16 %v4714, %v4712
        %4907 = vmatprep.subr.bf16.mxu0 %v4716
        %4908 = vmatpush1.bf16.msra.mxu0 %v4715
        %4909 = vmatprep.subr.bf16.mxu0 %v4718
        %4910 = vmatpush1.bf16.msra.mxu0 %v4717
        %4911 = vmatprep.subr.bf16.mxu0 %v4720
        %4912 = vmatpush1.bf16.msra.mxu0 %v4719
        %4913 = vmatprep.subr.bf16.mxu0 %v4722
        %4914 = vmatpush1.bf16.msra.mxu0 %v4721
        %4915 = vmatprep.subr.bf16.mxu0 %v4724
        %4916 = vmatpush1.bf16.msra.mxu0 %v4723
        %4917 = vmatprep.subr.bf16.mxu0 %v4726
        %4918 = vmatpush1.bf16.msra.mxu0 %v4725
        %4919 = vmatprep.subr.bf16.mxu0 %v4728
        %4920 = vmatpush1.bf16.msra.mxu0 %v4727
        %4921 = vmatprep.subr.bf16.mxu0 %v4730
        %4922 = vmatpush1.bf16.msra.mxu0 %v4729
        %4923 = vmatprep.subr.bf16.mxu0 %v4732
        %4924 = vmatpush1.bf16.msra.mxu0 %v4731
        %4925 = vmatprep.subr.bf16.mxu0 %v4734
        %4926 = vmatpush1.bf16.msra.mxu0 %v4733
        %4927 = vmatprep.subr.bf16.mxu0 %v4736
        %4928 = vmatpush1.bf16.msra.mxu0 %v4735
        %4929 = vmatprep.subr.bf16.mxu0 %v4738
        %4930 = vmatpush1.bf16.msra.mxu0 %v4737
        %4931 = vmatprep.subr.bf16.mxu0 %v4740
        %4932 = vmatpush1.bf16.msra.mxu0 %v4739
        %4933 = vmatprep.subr.bf16.mxu0 %v4742
        %4934 = vmatpush1.bf16.msra.mxu0 %v4741
        %4935 = vmatprep.subr.bf16.mxu0 %v4744
        %4936 = vmatpush1.bf16.msra.mxu0 %v4743
        %4937 = vmatprep.subr.bf16.mxu0 %v4746
        %4938 = vmatpush1.bf16.msra.mxu0 %v4745
        %4939 = vmatprep.mubr.bf16.mxu0 %v4270
        %4940 = vmatmul.mubr.bf16.gmra.mrb[0].mxu0 %v4269
        %v4941 = vpop.f32.mrb[0].mxu0
        %v4942 = vadd.f32 %v4420, %v4941
        %v4943 = vpop.f32.mrb[0].mxu0
        %v4944 = vadd.f32 %v4424, %v4943
        %v4945 = vpop.f32.mrb[0].mxu0
        %v4946 = vadd.f32 %v4420, %v4945
        %v4947 = vpop.f32.mrb[0].mxu0
        %v4948 = vadd.f32 %v4424, %v4947
        %4949 = vmatprep.mubr.bf16.mxu0 %v4276
        %4950 = vmatmul.mubr.bf16.gmra.mrb[0].mxu0 %v4275
        %v4951 = vpop.f32.mrb[0].mxu0
        %v4952 = vadd.f32 %v4420, %v4951
        %v4953 = vpop.f32.mrb[0].mxu0
        %v4954 = vadd.f32 %v4424, %v4953
        %v4955 = vpop.f32.mrb[0].mxu0
        %v4956 = vadd.f32 %v4420, %v4955
        %v4957 = vpop.f32.mrb[0].mxu0
        %v4958 = vadd.f32 %v4424, %v4957
        %4959 = vmatprep.mubr.bf16.mxu0 %v4282
        %4960 = vmatmul.mubr.bf16.gmra.mrb[0].mxu0 %v4281
        %v4961 = vpop.f32.mrb[0].mxu0
        %v4962 = vadd.f32 %v4420, %v4961
        %v4963 = vpop.f32.mrb[0].mxu0
        %v4964 = vadd.f32 %v4424, %v4963
        %v4965 = vpop.f32.mrb[0].mxu0
        %v4966 = vadd.f32 %v4420, %v4965
        %v4967 = vpop.f32.mrb[0].mxu0
        %v4968 = vadd.f32 %v4424, %v4967
        %4969 = vmatprep.mubr.bf16.mxu0 %v4288
        %4970 = vmatmul.mubr.bf16.gmra.mrb[0].mxu0 %v4287
        %v4971 = vpop.f32.mrb[0].mxu0
        %v4972 = vadd.f32 %v4420, %v4971
        %v4973 = vpop.f32.mrb[0].mxu0
        %v4974 = vadd.f32 %v4424, %v4973
        %v4975 = vpop.f32.mrb[0].mxu0
        %v4976 = vadd.f32 %v4420, %v4975
        %v4977 = vpop.f32.mrb[0].mxu0
        %v4978 = vadd.f32 %v4424, %v4977
        %4979 = vmatprep.mubr.bf16.mxu0 %v4294
        %4980 = vmatmul.mubr.bf16.gmra.mrb[0].mxu0 %v4293
        %v4981 = vpop.f32.mrb[0].mxu0
        %v4982 = vadd.f32 %v4420, %v4981
        %v4983 = vpop.f32.mrb[0].mxu0
        %v4984 = vadd.f32 %v4424, %v4983
        %v4985 = vpop.f32.mrb[0].mxu0
        %v4986 = vadd.f32 %v4420, %v4985
        %v4987 = vpop.f32.mrb[0].mxu0
        %v4988 = vadd.f32 %v4424, %v4987
        %4989 = vmatprep.mubr.bf16.mxu0 %v4300
        %4990 = vmatmul.mubr.bf16.gmra.mrb[0].mxu0 %v4299
        %v4991 = vpop.f32.mrb[0].mxu0
        %v4992 = vadd.f32 %v4420, %v4991
        %v4993 = vpop.f32.mrb[0].mxu0
        %v4994 = vadd.f32 %v4424, %v4993
        %v4995 = vpop.f32.mrb[0].mxu0
        %v4996 = vadd.f32 %v4420, %v4995
        %v4997 = vpop.f32.mrb[0].mxu0
        %v4998 = vadd.f32 %v4424, %v4997
        %4999 = vmatprep.mubr.bf16.mxu0 %v4306
        %5000 = vmatmul.mubr.bf16.gmra.mrb[0].mxu0 %v4305
        %v5001 = vpop.f32.mrb[0].mxu0
        %v5002 = vadd.f32 %v4420, %v5001
        %v5003 = vpop.f32.mrb[0].mxu0
        %v5004 = vadd.f32 %v4424, %v5003
        %v5005 = vpop.f32.mrb[0].mxu0
        %v5006 = vadd.f32 %v4420, %v5005
        %v5007 = vpop.f32.mrb[0].mxu0
        %v5008 = vadd.f32 %v4424, %v5007
        %5009 = vmatprep.mubr.bf16.mxu0 %v4312
        %5010 = vmatmul.mubr.bf16.gmra.mrb[0].mxu0 %v4311
        %v5011 = vpop.f32.mrb[0].mxu0
        %v5012 = vadd.f32 %v4420, %v5011
        %v5013 = vpop.f32.mrb[0].mxu0
        %v5014 = vadd.f32 %v4424, %v5013
        %v5015 = vpop.f32.mrb[0].mxu0
        %v5016 = vadd.f32 %v4420, %v5015
        %v5017 = vpop.f32.mrb[0].mxu0
        %v5018 = vadd.f32 %v4424, %v5017
        %5019 = vdwg.mxu0
        %5020 = vmatprep.subr.bf16.mxu0 %v4748
        %5021 = vmatpush1.bf16.msra.mxu0 %v4747
        %5022 = vmatprep.subr.bf16.mxu0 %v4750
        %5023 = vmatpush1.bf16.msra.mxu0 %v4749
        %5024 = vmatprep.subr.bf16.mxu0 %v4752
        %5025 = vmatpush1.bf16.msra.mxu0 %v4751
        %5026 = vmatprep.subr.bf16.mxu0 %v4754
        %5027 = vmatpush1.bf16.msra.mxu0 %v4753
        %5028 = vmatprep.subr.bf16.mxu0 %v4756
        %5029 = vmatpush1.bf16.msra.mxu0 %v4755
        %5030 = vmatprep.subr.bf16.mxu0 %v4758
        %5031 = vmatpush1.bf16.msra.mxu0 %v4757
        %5032 = vmatprep.subr.bf16.mxu0 %v4760
        %5033 = vmatpush1.bf16.msra.mxu0 %v4759
        %5034 = vmatprep.subr.bf16.mxu0 %v4762
        %5035 = vmatpush1.bf16.msra.mxu0 %v4761
        %5036 = vmatprep.subr.bf16.mxu0 %v4764
        %5037 = vmatpush1.bf16.msra.mxu0 %v4763
        %5038 = vmatprep.subr.bf16.mxu0 %v4766
        %5039 = vmatpush1.bf16.msra.mxu0 %v4765
        %5040 = vmatprep.subr.bf16.mxu0 %v4768
        %5041 = vmatpush1.bf16.msra.mxu0 %v4767
        %5042 = vmatprep.subr.bf16.mxu0 %v4770
        %5043 = vmatpush1.bf16.msra.mxu0 %v4769
        %5044 = vmatprep.subr.bf16.mxu0 %v4772
        %5045 = vmatpush1.bf16.msra.mxu0 %v4771
        %5046 = vmatprep.subr.bf16.mxu0 %v4774
        %5047 = vmatpush1.bf16.msra.mxu0 %v4773
        %5048 = vmatprep.subr.bf16.mxu0 %v4776
        %5049 = vmatpush1.bf16.msra.mxu0 %v4775
        %5050 = vmatprep.subr.bf16.mxu0 %v4778
        %5051 = vmatpush1.bf16.msra.mxu0 %v4777
        %5052 = vmatprep.mubr.bf16.mxu0 %v4272
        %5053 = vmatmul.mubr.bf16.gmra.mrb[0].mxu0 %v4271
        %v5054 = vpop.f32.mrb[0].mxu0
        %v5055 = vadd.f32 %v4942, %v5054
        %v5056 = vpop.f32.mrb[0].mxu0
        %v5057 = vadd.f32 %v4944, %v5056
        %v5058 = vpop.f32.mrb[0].mxu0
        %v5059 = vadd.f32 %v4946, %v5058
        %v5060 = vpop.f32.mrb[0].mxu0
        %v5061 = vadd.f32 %v4948, %v5060
        %5062 = vmatprep.mubr.bf16.mxu0 %v4278
        %5063 = vmatmul.mubr.bf16.gmra.mrb[0].mxu0 %v4277
        %v5064 = vpop.f32.mrb[0].mxu0
        %v5065 = vadd.f32 %v4952, %v5064
        %v5066 = vpop.f32.mrb[0].mxu0
        %v5067 = vadd.f32 %v4954, %v5066
        %v5068 = vpop.f32.mrb[0].mxu0
        %v5069 = vadd.f32 %v4956, %v5068
        %v5070 = vpop.f32.mrb[0].mxu0
        %v5071 = vadd.f32 %v4958, %v5070
        %5072 = vmatprep.mubr.bf16.mxu0 %v4284
        %5073 = vmatmul.mubr.bf16.gmra.mrb[0].mxu0 %v4283
        %v5074 = vpop.f32.mrb[0].mxu0
        %v5075 = vadd.f32 %v4962, %v5074
        %v5076 = vpop.f32.mrb[0].mxu0
        %v5077 = vadd.f32 %v4964, %v5076
        %v5078 = vpop.f32.mrb[0].mxu0
        %v5079 = vadd.f32 %v4966, %v5078
        %v5080 = vpop.f32.mrb[0].mxu0
        %v5081 = vadd.f32 %v4968, %v5080
        %5082 = vmatprep.mubr.bf16.mxu0 %v4290
        %5083 = vmatmul.mubr.bf16.gmra.mrb[0].mxu0 %v4289
        %v5084 = vpop.f32.mrb[0].mxu0
        %v5085 = vadd.f32 %v4972, %v5084
        %v5086 = vpop.f32.mrb[0].mxu0
        %v5087 = vadd.f32 %v4974, %v5086
        %v5088 = vpop.f32.mrb[0].mxu0
        %v5089 = vadd.f32 %v4976, %v5088
        %v5090 = vpop.f32.mrb[0].mxu0
        %v5091 = vadd.f32 %v4978, %v5090
        %5092 = vmatprep.mubr.bf16.mxu0 %v4296
        %5093 = vmatmul.mubr.bf16.gmra.mrb[0].mxu0 %v4295
        %v5094 = vpop.f32.mrb[0].mxu0
        %v5095 = vadd.f32 %v4982, %v5094
        %v5096 = vpop.f32.mrb[0].mxu0
        %v5097 = vadd.f32 %v4984, %v5096
        %v5098 = vpop.f32.mrb[0].mxu0
        %v5099 = vadd.f32 %v4986, %v5098
        %v5100 = vpop.f32.mrb[0].mxu0
        %v5101 = vadd.f32 %v4988, %v5100
        %5102 = vmatprep.mubr.bf16.mxu0 %v4302
        %5103 = vmatmul.mubr.bf16.gmra.mrb[0].mxu0 %v4301
        %v5104 = vpop.f32.mrb[0].mxu0
        %v5105 = vadd.f32 %v4992, %v5104
        %v5106 = vpop.f32.mrb[0].mxu0
        %v5107 = vadd.f32 %v4994, %v5106
        %v5108 = vpop.f32.mrb[0].mxu0
        %v5109 = vadd.f32 %v4996, %v5108
        %v5110 = vpop.f32.mrb[0].mxu0
        %v5111 = vadd.f32 %v4998, %v5110
        %5112 = vmatprep.mubr.bf16.mxu0 %v4308
        %5113 = vmatmul.mubr.bf16.gmra.mrb[0].mxu0 %v4307
        %v5114 = vpop.f32.mrb[0].mxu0
        %v5115 = vadd.f32 %v5002, %v5114
        %v5116 = vpop.f32.mrb[0].mxu0
        %v5117 = vadd.f32 %v5004, %v5116
        %v5118 = vpop.f32.mrb[0].mxu0
        %v5119 = vadd.f32 %v5006, %v5118
        %v5120 = vpop.f32.mrb[0].mxu0
        %v5121 = vadd.f32 %v5008, %v5120
        %5122 = vmatprep.mubr.bf16.mxu0 %v4314
        %5123 = vmatmul.mubr.bf16.gmra.mrb[0].mxu0 %v4313
        %v5124 = vpop.f32.mrb[0].mxu0
        %v5125 = vadd.f32 %v5012, %v5124
        %v5126 = vpop.f32.mrb[0].mxu0
        %v5127 = vadd.f32 %v5014, %v5126
        %v5128 = vpop.f32.mrb[0].mxu0
        %v5129 = vadd.f32 %v5016, %v5128
        %v5130 = vpop.f32.mrb[0].mxu0
        %v5131 = vadd.f32 %v5018, %v5130
        %5132 = vdwg.mxu0
        %5133 = vmatprep.subr.bf16.mxu0 %v4780
        %5134 = vmatpush1.bf16.msra.mxu0 %v4779
        %5135 = vmatprep.subr.bf16.mxu0 %v4782
        %5136 = vmatpush1.bf16.msra.mxu0 %v4781
        %5137 = vmatprep.subr.bf16.mxu0 %v4784
        %5138 = vmatpush1.bf16.msra.mxu0 %v4783
        %5139 = vmatprep.subr.bf16.mxu0 %v4786
        %5140 = vmatpush1.bf16.msra.mxu0 %v4785
        %5141 = vmatprep.subr.bf16.mxu0 %v4788
        %5142 = vmatpush1.bf16.msra.mxu0 %v4787
        %5143 = vmatprep.subr.bf16.mxu0 %v4790
        %5144 = vmatpush1.bf16.msra.mxu0 %v4789
        %5145 = vmatprep.subr.bf16.mxu0 %v4792
        %5146 = vmatpush1.bf16.msra.mxu0 %v4791
        %5147 = vmatprep.subr.bf16.mxu0 %v4794
        %5148 = vmatpush1.bf16.msra.mxu0 %v4793
        %5149 = vmatprep.subr.bf16.mxu0 %v4796
        %5150 = vmatpush1.bf16.msra.mxu0 %v4795
        %5151 = vmatprep.subr.bf16.mxu0 %v4798
        %5152 = vmatpush1.bf16.msra.mxu0 %v4797
        %5153 = vmatprep.subr.bf16.mxu0 %v4800
        %5154 = vmatpush1.bf16.msra.mxu0 %v4799
        %5155 = vmatprep.subr.bf16.mxu0 %v4802
        %5156 = vmatpush1.bf16.msra.mxu0 %v4801
        %5157 = vmatprep.subr.bf16.mxu0 %v4804
        %5158 = vmatpush1.bf16.msra.mxu0 %v4803
        %5159 = vmatprep.subr.bf16.mxu0 %v4806
        %5160 = vmatpush1.bf16.msra.mxu0 %v4805
        %5161 = vmatprep.subr.bf16.mxu0 %v4808
        %5162 = vmatpush1.bf16.msra.mxu0 %v4807
        %5163 = vmatprep.subr.bf16.mxu0 %v4810
        %5164 = vmatpush1.bf16.msra.mxu0 %v4809
        %5165 = vmatprep.mubr.bf16.mxu0 %v4274
        %5166 = vmatmul.mubr.bf16.gmra.mrb[0].mxu0 %v4273
        %v5167 = vpop.f32.mrb[0].mxu0
        %v5168 = vadd.f32 %v5055, %v5167
        %v5169 = vpop.f32.mrb[0].mxu0
        %v5170 = vadd.f32 %v5057, %v5169
        %v5171 = vpop.f32.mrb[0].mxu0
        %v5172 = vadd.f32 %v5059, %v5171
        %v5173 = vpop.f32.mrb[0].mxu0
        %v5174 = vadd.f32 %v5061, %v5173
        %5175 = vmatprep.mubr.bf16.mxu0 %v4280
        %5176 = vmatmul.mubr.bf16.gmra.mrb[0].mxu0 %v4279
        %v5177 = vpop.f32.mrb[0].mxu0
        %v5178 = vadd.f32 %v5065, %v5177
        %v5179 = vpop.f32.mrb[0].mxu0
        %v5180 = vadd.f32 %v5067, %v5179
        %v5181 = vpop.f32.mrb[0].mxu0
        %v5182 = vadd.f32 %v5069, %v5181
        %v5183 = vpop.f32.mrb[0].mxu0
        %v5184 = vadd.f32 %v5071, %v5183
        %5185 = vmatprep.mubr.bf16.mxu0 %v4286
        %5186 = vmatmul.mubr.bf16.gmra.mrb[0].mxu0 %v4285
        %v5187 = vpop.f32.mrb[0].mxu0
        %v5188 = vadd.f32 %v5075, %v5187
        %v5189 = vpop.f32.mrb[0].mxu0
        %v5190 = vadd.f32 %v5077, %v5189
        %v5191 = vpop.f32.mrb[0].mxu0
        %v5192 = vadd.f32 %v5079, %v5191
        %v5193 = vpop.f32.mrb[0].mxu0
        %v5194 = vadd.f32 %v5081, %v5193
        %5195 = vmatprep.mubr.bf16.mxu0 %v4292
        %5196 = vmatmul.mubr.bf16.gmra.mrb[0].mxu0 %v4291
        %v5197 = vpop.f32.mrb[0].mxu0
        %v5198 = vadd.f32 %v5085, %v5197
        %v5199 = vpop.f32.mrb[0].mxu0
        %v5200 = vadd.f32 %v5087, %v5199
        %v5201 = vpop.f32.mrb[0].mxu0
        %v5202 = vadd.f32 %v5089, %v5201
        %v5203 = vpop.f32.mrb[0].mxu0
        %v5204 = vadd.f32 %v5091, %v5203
        %5205 = vmatprep.mubr.bf16.mxu0 %v4298
        %5206 = vmatmul.mubr.bf16.gmra.mrb[0].mxu0 %v4297
        %v5207 = vpop.f32.mrb[0].mxu0
        %v5208 = vadd.f32 %v5095, %v5207
        %v5209 = vpop.f32.mrb[0].mxu0
        %v5210 = vadd.f32 %v5097, %v5209
        %v5211 = vpop.f32.mrb[0].mxu0
        %v5212 = vadd.f32 %v5099, %v5211
        %v5213 = vpop.f32.mrb[0].mxu0
        %v5214 = vadd.f32 %v5101, %v5213
        %5215 = vmatprep.mubr.bf16.mxu0 %v4304
        %5216 = vmatmul.mubr.bf16.gmra.mrb[0].mxu0 %v4303
        %v5217 = vpop.f32.mrb[0].mxu0
        %v5218 = vadd.f32 %v5105, %v5217
        %v5219 = vpop.f32.mrb[0].mxu0
        %v5220 = vadd.f32 %v5107, %v5219
        %v5221 = vpop.f32.mrb[0].mxu0
        %v5222 = vadd.f32 %v5109, %v5221
        %v5223 = vpop.f32.mrb[0].mxu0
        %v5224 = vadd.f32 %v5111, %v5223
        %5225 = vmatprep.mubr.bf16.mxu0 %v4310
        %5226 = vmatmul.mubr.bf16.gmra.mrb[0].mxu0 %v4309
        %v5227 = vpop.f32.mrb[0].mxu0
        %v5228 = vadd.f32 %v5115, %v5227
        %v5229 = vpop.f32.mrb[0].mxu0
        %v5230 = vadd.f32 %v5117, %v5229
        %v5231 = vpop.f32.mrb[0].mxu0
        %v5232 = vadd.f32 %v5119, %v5231
        %v5233 = vpop.f32.mrb[0].mxu0
        %v5234 = vadd.f32 %v5121, %v5233
        %5235 = vmatprep.mubr.bf16.mxu0 %v4316
        %5236 = vmatmul.mubr.bf16.gmra.mrb[0].mxu0 %v4315
        %v5237 = vpop.f32.mrb[0].mxu0
        %v5238 = vadd.f32 %v5125, %v5237
        %v5239 = vpop.f32.mrb[0].mxu0
        %v5240 = vadd.f32 %v5127, %v5239
        %v5241 = vpop.f32.mrb[0].mxu0
        %v5242 = vadd.f32 %v5129, %v5241
        %v5243 = vpop.f32.mrb[0].mxu0
        %v5244 = vadd.f32 %v5131, %v5243
        %5245 = vdwg.mxu0
        %v5246 = vadd.f32 %v5168, %v2780
        %v5247 = vadd.f32 %v5170, %v2781
        %v5248 = vadd.f32 %v5172, %v2782
        %v5249 = vadd.f32 %v5174, %v2783
        %v5250 = vadd.f32 %v5178, %v2784
        %v5251 = vadd.f32 %v5180, %v2785
        %v5252 = vadd.f32 %v5182, %v2786
        %v5253 = vadd.f32 %v5184, %v2787
        %v5254 = vadd.f32 %v5188, %v2788
        %v5255 = vadd.f32 %v5190, %v2789
        %v5256 = vadd.f32 %v5192, %v2790
        %v5257 = vadd.f32 %v5194, %v2791
        %v5258 = vadd.f32 %v5198, %v2792
        %v5259 = vadd.f32 %v5200, %v2793
        %v5260 = vadd.f32 %v5202, %v2794
        %v5261 = vadd.f32 %v5204, %v2795
        %v5262 = vadd.f32 %v5208, %v2796
        %v5263 = vadd.f32 %v5210, %v2797
        %v5264 = vadd.f32 %v5212, %v2798
        %v5265 = vadd.f32 %v5214, %v2799
        %v5266 = vadd.f32 %v5218, %v2800
        %v5267 = vadd.f32 %v5220, %v2801
        %v5268 = vadd.f32 %v5222, %v2802
        %v5269 = vadd.f32 %v5224, %v2803
        %v5270 = vadd.f32 %v5228, %v2804
        %v5271 = vadd.f32 %v5230, %v2805
        %v5272 = vadd.f32 %v5232, %v2806
        %v5273 = vadd.f32 %v5234, %v2807
        %v5274 = vadd.f32 %v5238, %v2808
        %v5275 = vadd.f32 %v5240, %v2809
        %v5276 = vadd.f32 %v5242, %v2810
        %v5277 = vadd.f32 %v5244, %v2811
        %v5278 = vmax.f32 %v5246, 0.0
        %v5279 = vmax.f32 %v5247, 0.0
        %v5280 = vmax.f32 %v5248, 0.0
        %v5281 = vmax.f32 %v5249, 0.0
        %v5282 = vmax.f32 %v5250, 0.0
        %v5283 = vmax.f32 %v5251, 0.0
        %v5284 = vmax.f32 %v5252, 0.0
        %v5285 = vmax.f32 %v5253, 0.0
        %v5286 = vmax.f32 %v5254, 0.0
        %v5287 = vmax.f32 %v5255, 0.0
        %v5288 = vmax.f32 %v5256, 0.0
        %v5289 = vmax.f32 %v5257, 0.0
        %v5290 = vmax.f32 %v5258, 0.0
        %v5291 = vmax.f32 %v5259, 0.0
        %v5292 = vmax.f32 %v5260, 0.0
        %v5293 = vmax.f32 %v5261, 0.0
        %v5294 = vmax.f32 %v5262, 0.0
        %v5295 = vmax.f32 %v5263, 0.0
        %v5296 = vmax.f32 %v5264, 0.0
        %v5297 = vmax.f32 %v5265, 0.0
        %v5298 = vmax.f32 %v5266, 0.0
        %v5299 = vmax.f32 %v5267, 0.0
        %v5300 = vmax.f32 %v5268, 0.0
        %v5301 = vmax.f32 %v5269, 0.0
        %v5302 = vmax.f32 %v5270, 0.0
        %v5303 = vmax.f32 %v5271, 0.0
        %v5304 = vmax.f32 %v5272, 0.0
        %v5305 = vmax.f32 %v5273, 0.0
        %v5306 = vmax.f32 %v5274, 0.0
        %v5307 = vmax.f32 %v5275, 0.0
        %v5308 = vmax.f32 %v5276, 0.0
        %v5309 = vmax.f32 %v5277, 0.0
        %5310 = vxpose.xlu0.b32.start [1/16] %v5278, 128
        %5311 = vxpose.xlu0.b32.cont [2/16] %v5280, 128
        %5312 = vxpose.xlu0.b32.cont [3/16] %v5282, 128
        %5313 = vxpose.xlu0.b32.cont [4/16] %v5284, 128
        %5314 = vxpose.xlu0.b32.cont [5/16] %v5286, 128
        %5315 = vxpose.xlu0.b32.cont [6/16] %v5288, 128
        %5316 = vxpose.xlu0.b32.cont [7/16] %v5290, 128
        %5317 = vxpose.xlu0.b32.cont [8/16] %v5292, 128
        %5318 = vxpose.xlu0.b32.cont [9/16] %v5294, 128
        %5319 = vxpose.xlu0.b32.cont [10/16] %v5296, 128
        %5320 = vxpose.xlu0.b32.cont [11/16] %v5298, 128
        %5321 = vxpose.xlu0.b32.cont [12/16] %v5300, 128
        %5322 = vxpose.xlu0.b32.cont [13/16] %v5302, 128
        %5323 = vxpose.xlu0.b32.cont [14/16] %v5304, 128
        %5324 = vxpose.xlu0.b32.cont [15/16] %v5306, 128
        %5325 = vxpose.xlu0.b32.end [16/16] %v5308, 128
        %v5326 = vpop.trf.xlu0
        %v5327 = vpop.trf.xlu0
        %v5328 = vpop.trf.xlu0
        %v5329 = vpop.trf.xlu0
        %v5330 = vpop.trf.xlu0
        %v5331 = vpop.trf.xlu0
        %v5332 = vpop.trf.xlu0
        %v5333 = vpop.trf.xlu0
        %v5334 = vpop.trf.xlu0
        %v5335 = vpop.trf.xlu0
        %v5336 = vpop.trf.xlu0
        %v5337 = vpop.trf.xlu0
        %v5338 = vpop.trf.xlu0
        %v5339 = vpop.trf.xlu0
        %v5340 = vpop.trf.xlu0
        %v5341 = vpop.trf.xlu0
        %5342 = vxpose.xlu0.b32.start [1/16] %v5279, 128
        %5343 = vxpose.xlu0.b32.cont [2/16] %v5281, 128
        %5344 = vxpose.xlu0.b32.cont [3/16] %v5283, 128
        %5345 = vxpose.xlu0.b32.cont [4/16] %v5285, 128
        %5346 = vxpose.xlu0.b32.cont [5/16] %v5287, 128
        %5347 = vxpose.xlu0.b32.cont [6/16] %v5289, 128
        %5348 = vxpose.xlu0.b32.cont [7/16] %v5291, 128
        %5349 = vxpose.xlu0.b32.cont [8/16] %v5293, 128
        %5350 = vxpose.xlu0.b32.cont [9/16] %v5295, 128
        %5351 = vxpose.xlu0.b32.cont [10/16] %v5297, 128
        %5352 = vxpose.xlu0.b32.cont [11/16] %v5299, 128
        %5353 = vxpose.xlu0.b32.cont [12/16] %v5301, 128
        %5354 = vxpose.xlu0.b32.cont [13/16] %v5303, 128
        %5355 = vxpose.xlu0.b32.cont [14/16] %v5305, 128
        %5356 = vxpose.xlu0.b32.cont [15/16] %v5307, 128
        %5357 = vxpose.xlu0.b32.end [16/16] %v5309, 128
        %v5358 = vpop.trf.xlu0
        %v5359 = vpop.trf.xlu0
        %v5360 = vpop.trf.xlu0
        %v5361 = vpop.trf.xlu0
        %v5362 = vpop.trf.xlu0
        %v5363 = vpop.trf.xlu0
        %v5364 = vpop.trf.xlu0
        %v5365 = vpop.trf.xlu0
        %v5366 = vpop.trf.xlu0
        %v5367 = vpop.trf.xlu0
        %v5368 = vpop.trf.xlu0
        %v5369 = vpop.trf.xlu0
        %v5370 = vpop.trf.xlu0
        %v5371 = vpop.trf.xlu0
        %v5372 = vpop.trf.xlu0
        %v5373 = vpop.trf.xlu0
        %5374 = vst [vmem:[%s217] sm:$0xff] %v5326
        %5375 = vst [vmem:[%s217 + $0x8] sm:$0xff] %v5327
        %5376 = vst [vmem:[%s217 + $0x10] sm:$0xff] %v5328
        %5377 = vst [vmem:[%s217 + $0x18] sm:$0xff] %v5329
        %5378 = vst [vmem:[%s217 + $0x20] sm:$0xff] %v5330
        %5379 = vst [vmem:[%s217 + $0x28] sm:$0xff] %v5331
        %5380 = vst [vmem:[%s217 + $0x30] sm:$0xff] %v5332
        %5381 = vst [vmem:[%s217 + $0x38] sm:$0xff] %v5333
        %5382 = vst [vmem:[%s217 + $0x40] sm:$0xff] %v5334
        %5383 = vst [vmem:[%s217 + $0x48] sm:$0xff] %v5335
        %5384 = vst [vmem:[%s217 + $0x50] sm:$0xff] %v5336
        %5385 = vst [vmem:[%s217 + $0x58] sm:$0xff] %v5337
        %5386 = vst [vmem:[%s217 + $0x60] sm:$0xff] %v5338
        %5387 = vst [vmem:[%s217 + $0x68] sm:$0xff] %v5339
        %5388 = vst [vmem:[%s217 + $0x70] sm:$0xff] %v5340
        %5389 = vst [vmem:[%s217 + $0x78] sm:$0xff] %v5341
        %5390 = vst [vmem:[%s217 + $0x80] sm:$0xff] %v5358
        %5391 = vst [vmem:[%s217 + $0x88] sm:$0xff] %v5359
        %5392 = vst [vmem:[%s217 + $0x90] sm:$0xff] %v5360
        %5393 = vst [vmem:[%s217 + $0x98] sm:$0xff] %v5361
        %5394 = vst [vmem:[%s217 + $0xa0] sm:$0xff] %v5362
        %5395 = vst [vmem:[%s217 + $0xa8] sm:$0xff] %v5363
        %5396 = vst [vmem:[%s217 + $0xb0] sm:$0xff] %v5364
        %5397 = vst [vmem:[%s217 + $0xb8] sm:$0xff] %v5365
        %5398 = vst [vmem:[%s217 + $0xc0] sm:$0xff] %v5366
        %5399 = vst [vmem:[%s217 + $0xc8] sm:$0xff] %v5367
        %5400 = vst [vmem:[%s217 + $0xd0] sm:$0xff] %v5368
        %5401 = vst [vmem:[%s217 + $0xd8] sm:$0xff] %v5369
        %5402 = vst [vmem:[%s217 + $0xe0] sm:$0xff] %v5370
        %5403 = vst [vmem:[%s217 + $0xe8] sm:$0xff] %v5371
        %5404 = vst [vmem:[%s217 + $0xf0] sm:$0xff] %v5372
        %5405 = vst [vmem:[%s217 + $0xf8] sm:$0xff] %v5373
        %s5406 = sand.u32 %s97, 1
        %s5407 = scalar_lea.sflag [#allocation4], %s5406
        %s5408 = sand.u32 %s97, 1
        %s5409 = smul.addr %s5408, 256
        %s5410 = scalar_lea.vmem [#allocation8], %s5409
        // Predicated region
        $region45: #{residual_encoder_pallas.1} parent=31 // pred_check
          %p5411 = pneg %p107
        $region46: #{residual_encoder_pallas.1} parent=31 // pred_check_branch
          %5413 = sbr.rel (%p5411) target = $region48
        $region47: #{residual_encoder_pallas.1} parent=31 // pred_region
          %s5415 = ssub.s32 4096, 4096
          %5416 = vsyncadd %s5407, %s5415
          %s5417 = smul.addr %s21, 32
          %s5418 = smul.addr %s5417, 128
          %s5419 = scalar_lea.hbm %s3, %s5418
          %s5420 = sshll.u32 %s5410, 4
          %s5421 = int_to_ptr.vmem [resolvable:$true] %s5420
          %5426 = dma.vmem_to_hbm [thread:$0]  %s5421, 4096, %s5419, %s5407, 128, 128, 8
        $region48: #{residual_encoder_pallas.1} parent=31 // pred_fallthru
          _
      $region32: #{residual_encoder_pallas.1} parent=5 // pred_fallthru
        _
      %p5427 = scmp.le.s32.totalorder 2, %s16
      // Predicated region
      $region49: #{residual_encoder_pallas.1} parent=5 // pred_check
        %p5428 = pneg %p5427
      $region50: #{residual_encoder_pallas.1} parent=5 // pred_check_branch
        %5430 = sbr.rel (%p5428) target = $region52
      $region51: #{residual_encoder_pallas.1} parent=5 // pred_region
        %s5431 = ssub.s32 %s16, 2
        // Predicated region
        $region53: #{residual_encoder_pallas.1} parent=51 // pred_check
          %p5432 = pneg %p113
        $region54: #{residual_encoder_pallas.1} parent=51 // pred_check_branch
          %5434 = sbr.rel (%p5432) target = $region56
        $region55: #{residual_encoder_pallas.1} parent=51 // pred_region
          %s5435 = sand.u32 %s98, 1
          %s5436 = scalar_lea.sflag [#allocation4], %s5435
          %s5437 = sand.u32 %s98, 1
          %s5438 = smul.addr %s5437, 256
          %s5439 = scalar_lea.vmem [#allocation8], %s5438
          %5440 = dma.done %s5436, 4096
        $region56: #{residual_encoder_pallas.1} parent=51 // pred_fallthru
          _
      $region52: #{residual_encoder_pallas.1} parent=5 // pred_fallthru
        _
    $region6: #{residual_encoder_pallas.1} parent=1 // loop_footer
      %s20 = sadd.s32 1, %s16
    $region7: #{residual_encoder_pallas.1} parent=1 // loop_footer_branch
      %15 = sbr.rel target = $region3
    $region8: #{residual_encoder_pallas.1} parent=1 // loop_exit
      _
    %5441 = vsyncpa [#allocation3], 1
    %s5442 = scalar_lea.sflag [#allocation3], 1
    %5443 = vsyncpa %s5442, 1
    %5444 = vsyncpa [#allocation6], 1
    %5445 = vsyncpa [#allocation4], 1
    %s5446 = scalar_lea.sflag [#allocation4], 1
    %5447 = vsyncpa %s5446, 1

</llo_original>
